<compile_context>
chip_gen: v7x
topology: tpu7x:2x2x1
jax: 0.10.0
libtpu: 0.0.40
codegen_flags: <defaults>
</compile_context>

<pallas_src>
import functools
import math

import jax
import jax.numpy as jnp
from jax.experimental import pallas as pl
from jax.experimental.pallas import tpu as pltpu


# ----------------------------- configuration -----------------------------
# (mirrors NODF.__init__ config / args, at small sizes)
N_LEVELS = 4                 # config['n_levels']
N_FEATS_PER_LEVEL = 2        # config['n_features_per_level']
LOG2_HASHMAP_SIZE = 10       # config['log2_hashmap_size']
BASE_RESOLUTION = 4          # config['base_resolution']
PER_LEVEL_SCALE = 1.5        # args.per_level_scale
HIDDEN = 32                  # config['r']
DEPTH = 2                    # config['depth']
K_OUT = 1                    # K = 1
OMEGA0 = 30.0                # args.omega0
OMEGA0_HIDDEN = 30.0         # args.omega0_hidden
INR_TYPE = "siren"           # args.inr  (siren -> real-valued, final bias=False)

EMB_DIM = N_LEVELS * N_FEATS_PER_LEVEL        # 8
D_IN = EMB_DIM + 3                            # INR in_features = 11

N_POINTS = 256

MAX_TILE_N = 1024            # tile VMEM footprint is tiny even at 1024
MATMUL_DTYPE = jnp.bfloat16  # MXU operand dtype; accumulation stays f32


# ----------------------------- Pallas kernel ------------------------------
def siren_mlp_kernel(emb_ref, cds_ref, w0e_ref, w0c_ref, b0_ref,
                     wh_ref, bh_ref, wf_ref, memb_ref, out_ref, *, depth):
    """SIREN MLP on one tile of points (omega already folded into W/b).

    emb_ref : (TILE_N, EMB_DIM)  hash-grid features         (f32)
    cds_ref : (TILE_N, 3)        coords                     (f32)
    w0e_ref : (EMB_DIM, H)       first-layer weight rows for embeddings (bf16)
    w0c_ref : (3, H)             first-layer weight rows for coords     (bf16)
    b0_ref  : (1, H)             first-layer bias (omega-scaled, f32)
    wh_ref  : (depth, H, H)      hidden weights (omega-scaled, bf16)
    bh_ref  : (depth, 1, H)      hidden biases  (omega-scaled, f32)
    wf_ref  : (H, K)             final linear (bias=False for siren, bf16)
    memb_ref: (TILE_N, D_IN)     model_embedding = concat(emb, coords) (f32)
    out_ref : (TILE_N, K)        model_out (f32)
    """
    emb = emb_ref[...]
    cds = cds_ref[...]

    # model_embedding = concat([embeddings, coords], -1) via two static
    # column-slice (masked) stores — no in-kernel concatenate / extra HBM trip.
    memb_ref[:, 0:EMB_DIM] = emb
    memb_ref[:, EMB_DIM:D_IN] = cds

    # First SineLayer: concat fused into the matmul by splitting W0.
    pre = jnp.dot(emb.astype(MATMUL_DTYPE), w0e_ref[...],
                  preferred_element_type=jnp.float32)
    pre = pre + jnp.dot(cds.astype(MATMUL_DTYPE), w0c_ref[...],
                        preferred_element_type=jnp.float32)
    h = jnp.sin(pre + b0_ref[...])

    for i in range(depth):   # static unroll over hidden layers
        h = jnp.sin(jnp.dot(h.astype(MATMUL_DTYPE), wh_ref[i],
                            preferred_element_type=jnp.float32)
                    + bh_ref[i])

    out_ref[...] = jnp.dot(h.astype(MATMUL_DTYPE), wf_ref[...],
                           preferred_element_type=jnp.float32)


def _pick_tile_n(n):
    """Largest power-of-two tile <= MAX_TILE_N that still leaves >= 2 grid
    steps when possible (v7x has 2 TensorCores; the grid axis is 'parallel')."""
    target = max(8, min(MAX_TILE_N, (n + 1) // 2))
    t = 8
    while t * 2 <= target:
        t *= 2
    return t


def siren_mlp_pallas(embeddings, coords, params):
    """embeddings: (N, EMB_DIM) f32, coords: (N, 3) f32.
    Returns (model_embedding (N, D_IN) f32, model_out (N, K_OUT) f32)."""
    n = embeddings.shape[0]
    tile_n = _pick_tile_n(n)
    grid = pl.cdiv(n, tile_n)
    n_pad = grid * tile_n
    if n_pad != n:                     # ragged N: pad, run, slice
        embeddings = jnp.pad(embeddings, ((0, n_pad - n), (0, 0)))
        coords = jnp.pad(coords, ((0, n_pad - n), (0, 0)))

    # Fold omega into BOTH weights and biases once (numerically equivalent:
    # sin(omega*(xW+b)) == sin(x*(omega*W) + omega*b)); cast matmul weights to
    # bf16 (f32 accumulation happens inside the kernel).
    w0 = params["w0"] * OMEGA0
    w0e = w0[:EMB_DIM].astype(MATMUL_DTYPE)
    w0c = w0[EMB_DIM:].astype(MATMUL_DTYPE)
    b0 = params["b0"] * OMEGA0
    wh = (params["wh"] * OMEGA0_HIDDEN).astype(MATMUL_DTYPE)
    bh = params["bh"] * OMEGA0_HIDDEN
    wf = params["wf"].astype(MATMUL_DTYPE)

    hdim = HIDDEN
    depth = params["wh"].shape[0]
    kernel = functools.partial(siren_mlp_kernel, depth=depth)

    memb, out = pl.pallas_call(
        kernel,
        out_shape=(jax.ShapeDtypeStruct((n_pad, D_IN), jnp.float32),
                   jax.ShapeDtypeStruct((n_pad, K_OUT), jnp.float32)),
        grid_spec=pltpu.PrefetchScalarGridSpec(
            num_scalar_prefetch=0,
            grid=(grid,),
            in_specs=[
                pl.BlockSpec((tile_n, EMB_DIM), lambda i: (i, 0)),
                pl.BlockSpec((tile_n, 3), lambda i: (i, 0)),
                # Weights/biases: constant index_map -> DMA'd once, reused.
                pl.BlockSpec((EMB_DIM, hdim), lambda i: (0, 0)),
                pl.BlockSpec((3, hdim), lambda i: (0, 0)),
                pl.BlockSpec((1, hdim), lambda i: (0, 0)),
                pl.BlockSpec((depth, hdim, hdim), lambda i: (0, 0, 0)),
                pl.BlockSpec((depth, 1, hdim), lambda i: (0, 0, 0)),
                pl.BlockSpec((hdim, K_OUT), lambda i: (0, 0)),
            ],
            out_specs=(
                pl.BlockSpec((tile_n, D_IN), lambda i: (i, 0)),
                pl.BlockSpec((tile_n, K_OUT), lambda i: (i, 0)),
            ),
        ),
        compiler_params=pltpu.CompilerParams(
            dimension_semantics=("parallel",)),
    )(embeddings, coords, w0e, w0c, b0, wh, bh, wf)

    if n_pad != n:
        memb = memb[:n]
        out = out[:n]
    return memb, out


# ------------------------ hash embedder (plain JAX) ------------------------
def hash_embed(coords, tables):
    """Multi-resolution hash encoding (Instant-NGP style).

    coords: (N, 3) float32 in the bounding box [-1, 1]^3
    tables: (n_levels, 2**log2_hashmap_size, n_features_per_level)
    returns (N, n_levels * n_features_per_level)
    """
    box_min, box_max = -1.0, 1.0
    primes = jnp.array([1, 2654435761, 805459861], dtype=jnp.uint32)
    table_size = 1 << LOG2_HASHMAP_SIZE
    offsets = jnp.array([[i, j, k]
                         for i in (0, 1) for j in (0, 1) for k in (0, 1)],
                        dtype=jnp.int32)                       # (8, 3)

    feats = []
    for lvl in range(N_LEVELS):
        res = math.floor(BASE_RESOLUTION * (PER_LEVEL_SCALE ** lvl))
        grid_size = (box_max - box_min) / res
        rel = (coords - box_min) / grid_size                   # (N, 3)
        bottom_left = jnp.floor(rel).astype(jnp.int32)         # (N, 3)
        frac = rel - bottom_left.astype(coords.dtype)          # (N, 3)

        corners = bottom_left[:, None, :] + offsets[None, :, :]        # (N,8,3)
        hashed = corners.astype(jnp.uint32) * primes[None, None, :]    # (N,8,3)
        idx = (hashed[..., 0] ^ hashed[..., 1] ^ hashed[..., 2]) \
            & jnp.uint32(table_size - 1)                               # (N,8)
        emb = jnp.take(tables[lvl], idx.astype(jnp.int32), axis=0)     # (N,8,F)

        # trilinear interpolation weights
        w = jnp.where(offsets[None, :, :] == 1,
                      frac[:, None, :], 1.0 - frac[:, None, :])        # (N,8,3)
        w = jnp.prod(w, axis=-1)                                       # (N,8)
        feats.append(jnp.sum(w[..., None] * emb, axis=1))              # (N,F)
    return jnp.concatenate(feats, axis=-1)


# --------------------------- parameter init --------------------------------
def init_params(key):
    keys = jax.random.split(key, 5 + DEPTH * 2)
    kidx = iter(range(len(keys)))

    # hash table embeddings (nn.Embedding per level), uniform(-1e-4, 1e-4)
    tables = jax.random.uniform(
        keys[next(kidx)],
        (N_LEVELS, 1 << LOG2_HASHMAP_SIZE, N_FEATS_PER_LEVEL),
        minval=-1e-4, maxval=1e-4, dtype=jnp.float32)

    # first SineLayer: uniform(-1/in, 1/in)   (stored transposed: (in, out))
    w0 = jax.random.uniform(keys[next(kidx)], (D_IN, HIDDEN),
                            minval=-1.0 / D_IN, maxval=1.0 / D_IN,
                            dtype=jnp.float32)
    b0 = jax.random.uniform(keys[next(kidx)], (1, HIDDEN),
                            minval=-1.0 / math.sqrt(D_IN),
                            maxval=1.0 / math.sqrt(D_IN), dtype=jnp.float32)

    # hidden SineLayers: uniform(-sqrt(6/H)/omega, sqrt(6/H)/omega)
    bound = math.sqrt(6.0 / HIDDEN) / OMEGA0_HIDDEN
    wh = jnp.stack([
        jax.random.uniform(keys[next(kidx)], (HIDDEN, HIDDEN),
                           minval=-bound, maxval=bound, dtype=jnp.float32)
        for _ in range(DEPTH)])
    bh = jnp.stack([
        jax.random.uniform(keys[next(kidx)], (1, HIDDEN),
                           minval=-1.0 / math.sqrt(HIDDEN),
                           maxval=1.0 / math.sqrt(HIDDEN), dtype=jnp.float32)
        for _ in range(DEPTH)])

    # final linear: siren init, bias=False
    wf = jax.random.uniform(keys[next(kidx)], (HIDDEN, K_OUT),
                            minval=-bound, maxval=bound, dtype=jnp.float32)

    return dict(tables=tables, w0=w0, b0=b0, wh=wh, bh=bh, wf=wf)


# ------------------------------ NODF forward -------------------------------
def nodf_forward(coords, params):
    """coords: (1, N, 3) float32 -> dict like NODF.forward."""
    coords = coords.astype(jnp.float32)
    coords_sq = coords[0]                                  # squeeze(0) -> (N, 3)
    embeddings = hash_embed(coords_sq, params["tables"])   # (N, L*F)

    model_embedding, model_out = siren_mlp_pallas(
        embeddings, coords_sq, params)

    return {
        "model_embedding": model_embedding,  # INR's input (= concat(emb, coords))
        "model_out": model_out,              # (N, K) float32 (siren -> real)
        "model_in": coords_sq,               # original (squeezed) coords
    }


if __name__ == "__main__":
    key = jax.random.PRNGKey(0)
    pkey, ckey = jax.random.split(key)
    params = init_params(pkey)

    coords = jax.random.uniform(ckey, (1, N_POINTS, 3),
                                minval=-1.0, maxval=1.0, dtype=jnp.float32)

    out = nodf_forward(coords, params)
    jax.block_until_ready(out["model_out"])

    assert out["model_in"].shape == (N_POINTS, 3)
    assert out["model_embedding"].shape == (N_POINTS, D_IN)
    assert out["model_embedding"].dtype == jnp.float32
    assert out["model_out"].shape == (N_POINTS, K_OUT)
    assert out["model_out"].dtype == jnp.float32
    print("KERNEL_OK")
</pallas_src>

<mosaic_0001>
module attributes {stable_mosaic.version = 11 : i64} {
  func.func @siren_mlp_kernel(%arg0: i32, %arg1: memref<128x8xf32, #tpu.memory_space<vmem>>, %arg2: memref<128x3xf32, #tpu.memory_space<vmem>>, %arg3: memref<8x32xbf16, #tpu.memory_space<vmem>>, %arg4: memref<3x32xbf16, #tpu.memory_space<vmem>>, %arg5: memref<1x32xf32, #tpu.memory_space<vmem>>, %arg6: memref<2x32x32xbf16, #tpu.memory_space<vmem>>, %arg7: memref<2x1x32xf32, #tpu.memory_space<vmem>>, %arg8: memref<32x1xbf16, #tpu.memory_space<vmem>>, %arg9: memref<128x11xf32, #tpu.memory_space<vmem>>, %arg10: memref<128x1xf32, #tpu.memory_space<vmem>>) attributes {dimension_semantics = [#tpu.dimension_semantics<parallel>], iteration_bounds = array<i64: 2>, scalar_prefetch = 0 : i64, scratch_operands = 0 : i64, tpu.core_type = #tpu.core_type<tc>, window_params = [{transform_indices = @transform_0, window_bounds = array<i64: 128, 8>}, {transform_indices = @transform_1, window_bounds = array<i64: 128, 3>}, {pipeline_mode = #tpu.pipeline_mode<synchronous>, transform_indices = @transform_2, window_bounds = array<i64: 8, 32>}, {pipeline_mode = #tpu.pipeline_mode<synchronous>, transform_indices = @transform_3, window_bounds = array<i64: 3, 32>}, {pipeline_mode = #tpu.pipeline_mode<synchronous>, transform_indices = @transform_4, window_bounds = array<i64: 1, 32>}, {pipeline_mode = #tpu.pipeline_mode<synchronous>, transform_indices = @transform_5, window_bounds = array<i64: 2, 32, 32>}, {pipeline_mode = #tpu.pipeline_mode<synchronous>, transform_indices = @transform_6, window_bounds = array<i64: 2, 1, 32>}, {pipeline_mode = #tpu.pipeline_mode<synchronous>, transform_indices = @transform_7, window_bounds = array<i64: 32, 1>}, {transform_indices = @transform_8, window_bounds = array<i64: 128, 11>}, {transform_indices = @transform_9, window_bounds = array<i64: 128, 1>}]} {
    %c0 = arith.constant 0 : index
    %c0_0 = arith.constant 0 : index
    %0 = vector.load %arg1[%c0, %c0_0] : memref<128x8xf32, #tpu.memory_space<vmem>>, vector<128x8xf32>
    %c0_1 = arith.constant 0 : index
    %c0_2 = arith.constant 0 : index
    %1 = vector.load %arg2[%c0_1, %c0_2] : memref<128x3xf32, #tpu.memory_space<vmem>>, vector<128x3xf32>
    %c0_3 = arith.constant 0 : index
    %c0_4 = arith.constant 0 : index
    %2 = vector.load %arg9[%c0_3, %c0_4] : memref<128x11xf32, #tpu.memory_space<vmem>>, vector<128x8xf32>
    tpu.vector_store %arg9[%c0_3, %c0_4], %0 {strides = array<i32>} : memref<128x11xf32, #tpu.memory_space<vmem>>, vector<128x8xf32>,
    %c0_5 = arith.constant 0 : index
    %c8 = arith.constant 8 : index
    %3 = vector.load %arg9[%c0_5, %c8] : memref<128x11xf32, #tpu.memory_space<vmem>>, vector<128x3xf32>
    tpu.vector_store %arg9[%c0_5, %c8], %1 {strides = array<i32>} : memref<128x11xf32, #tpu.memory_space<vmem>>, vector<128x3xf32>,
    %4 = arith.truncf %0 : vector<128x8xf32> to vector<128x8xbf16>
    %c0_6 = arith.constant 0 : index
    %c0_7 = arith.constant 0 : index
    %5 = vector.load %arg3[%c0_6, %c0_7] : memref<8x32xbf16, #tpu.memory_space<vmem>>, vector<8x32xbf16>
    %cst = arith.constant dense<0.000000e+00> : vector<128x32xf32>
    %6 = tpu.matmul %4, %5, %cst {dimension_numbers = #tpu.dot_dimension_numbers<[1], [0], [0], [1], [0, 0, 1, 1], [], []>} : vector<128x8xbf16>, vector<8x32xbf16>, vector<128x32xf32> -> vector<128x32xf32>
    %7 = arith.truncf %1 : vector<128x3xf32> to vector<128x3xbf16>
    %c0_8 = arith.constant 0 : index
    %c0_9 = arith.constant 0 : index
    %8 = vector.load %arg4[%c0_8, %c0_9] : memref<3x32xbf16, #tpu.memory_space<vmem>>, vector<3x32xbf16>
    %cst_10 = arith.constant dense<0.000000e+00> : vector<128x32xf32>
    %9 = tpu.matmul %7, %8, %cst_10 {dimension_numbers = #tpu.dot_dimension_numbers<[1], [0], [0], [1], [0, 0, 1, 1], [], []>} : vector<128x3xbf16>, vector<3x32xbf16>, vector<128x32xf32> -> vector<128x32xf32>
    %10 = arith.addf %6, %9 : vector<128x32xf32>
    %c0_11 = arith.constant 0 : index
    %c0_12 = arith.constant 0 : index
    %11 = vector.load %arg5[%c0_11, %c0_12] : memref<1x32xf32, #tpu.memory_space<vmem>>, vector<1x32xf32>
    %12 = vector.broadcast %11 : vector<1x32xf32> to vector<128x32xf32>
    %13 = arith.addf %10, %12 : vector<128x32xf32>
    %14 = math.sin %13 : vector<128x32xf32>
    %15 = arith.truncf %14 : vector<128x32xf32> to vector<128x32xbf16>
    %c0_13 = arith.constant 0 : index
    %c0_14 = arith.constant 0 : index
    %c0_15 = arith.constant 0 : index
    %16 = vector.load %arg6[%c0_13, %c0_14, %c0_15] : memref<2x32x32xbf16, #tpu.memory_space<vmem>>, vector<1x32x32xbf16>
    %17 = vector.shape_cast %16 : vector<1x32x32xbf16> to vector<32x32xbf16>
    %cst_16 = arith.constant dense<0.000000e+00> : vector<128x32xf32>
    %18 = tpu.matmul %15, %17, %cst_16 {dimension_numbers = #tpu.dot_dimension_numbers<[1], [0], [0], [1], [0, 0, 1, 1], [], []>} : vector<128x32xbf16>, vector<32x32xbf16>, vector<128x32xf32> -> vector<128x32xf32>
    %c0_17 = arith.constant 0 : index
    %c0_18 = arith.constant 0 : index
    %c0_19 = arith.constant 0 : index
    %19 = vector.load %arg7[%c0_17, %c0_18, %c0_19] : memref<2x1x32xf32, #tpu.memory_space<vmem>>, vector<1x1x32xf32>
    %20 = vector.shape_cast %19 : vector<1x1x32xf32> to vector<1x32xf32>
    %21 = vector.broadcast %20 : vector<1x32xf32> to vector<128x32xf32>
    %22 = arith.addf %18, %21 : vector<128x32xf32>
    %23 = math.sin %22 : vector<128x32xf32>
    %24 = arith.truncf %23 : vector<128x32xf32> to vector<128x32xbf16>
    %c1 = arith.constant 1 : index
    %c0_20 = arith.constant 0 : index
    %c0_21 = arith.constant 0 : index
    %25 = vector.load %arg6[%c1, %c0_20, %c0_21] : memref<2x32x32xbf16, #tpu.memory_space<vmem>>, vector<1x32x32xbf16>
    %26 = vector.shape_cast %25 : vector<1x32x32xbf16> to vector<32x32xbf16>
    %cst_22 = arith.constant dense<0.000000e+00> : vector<128x32xf32>
    %27 = tpu.matmul %24, %26, %cst_22 {dimension_numbers = #tpu.dot_dimension_numbers<[1], [0], [0], [1], [0, 0, 1, 1], [], []>} : vector<128x32xbf16>, vector<32x32xbf16>, vector<128x32xf32> -> vector<128x32xf32>
    %c1_23 = arith.constant 1 : index
    %c0_24 = arith.constant 0 : index
    %c0_25 = arith.constant 0 : index
    %28 = vector.load %arg7[%c1_23, %c0_24, %c0_25] : memref<2x1x32xf32, #tpu.memory_space<vmem>>, vector<1x1x32xf32>
    %29 = vector.shape_cast %28 : vector<1x1x32xf32> to vector<1x32xf32>
    %30 = vector.broadcast %29 : vector<1x32xf32> to vector<128x32xf32>
    %31 = arith.addf %27, %30 : vector<128x32xf32>
    %32 = math.sin %31 : vector<128x32xf32>
    %33 = arith.truncf %32 : vector<128x32xf32> to vector<128x32xbf16>
    %c0_26 = arith.constant 0 : index
    %c0_27 = arith.constant 0 : index
    %34 = vector.load %arg8[%c0_26, %c0_27] : memref<32x1xbf16, #tpu.memory_space<vmem>>, vector<32x1xbf16>
    %cst_28 = arith.constant dense<0.000000e+00> : vector<128x1xf32>
    %35 = tpu.matmul %33, %34, %cst_28 {dimension_numbers = #tpu.dot_dimension_numbers<[1], [0], [0], [1], [0, 0, 1, 1], [], []>} : vector<128x32xbf16>, vector<32x1xbf16>, vector<128x1xf32> -> vector<128x1xf32>
    %c0_29 = arith.constant 0 : index
    %c0_30 = arith.constant 0 : index
    %36 = vector.load %arg10[%c0_29, %c0_30] : memref<128x1xf32, #tpu.memory_space<vmem>>, vector<128x1xf32>
    tpu.vector_store %arg10[%c0_29, %c0_30], %35 {strides = array<i32>} : memref<128x1xf32, #tpu.memory_space<vmem>>, vector<128x1xf32>,
    return
  }
  func.func @transform_0(%arg0: i32) -> (i32, i32) {
    %c0_i32 = arith.constant 0 : i32
    %c0_i32_0 = arith.constant 0 : i32
    return %arg0, %c0_i32 : i32, i32
  }
  func.func @transform_1(%arg0: i32) -> (i32, i32) {
    %c0_i32 = arith.constant 0 : i32
    %c0_i32_0 = arith.constant 0 : i32
    return %arg0, %c0_i32 : i32, i32
  }
  func.func @transform_2(%arg0: i32) -> (i32, i32) {
    %c0_i32 = arith.constant 0 : i32
    %c0_i32_0 = arith.constant 0 : i32
    %c0_i32_1 = arith.constant 0 : i32
    return %c0_i32, %c0_i32_0 : i32, i32
  }
  func.func @transform_3(%arg0: i32) -> (i32, i32) {
    %c0_i32 = arith.constant 0 : i32
    %c0_i32_0 = arith.constant 0 : i32
    %c0_i32_1 = arith.constant 0 : i32
    return %c0_i32, %c0_i32_0 : i32, i32
  }
  func.func @transform_4(%arg0: i32) -> (i32, i32) {
    %c0_i32 = arith.constant 0 : i32
    %c0_i32_0 = arith.constant 0 : i32
    %c0_i32_1 = arith.constant 0 : i32
    return %c0_i32, %c0_i32_0 : i32, i32
  }
  func.func @transform_5(%arg0: i32) -> (i32, i32, i32) {
    %c0_i32 = arith.constant 0 : i32
    %c0_i32_0 = arith.constant 0 : i32
    %c0_i32_1 = arith.constant 0 : i32
    %c0_i32_2 = arith.constant 0 : i32
    return %c0_i32, %c0_i32_0, %c0_i32_1 : i32, i32, i32
  }
  func.func @transform_6(%arg0: i32) -> (i32, i32, i32) {
    %c0_i32 = arith.constant 0 : i32
    %c0_i32_0 = arith.constant 0 : i32
    %c0_i32_1 = arith.constant 0 : i32
    %c0_i32_2 = arith.constant 0 : i32
    return %c0_i32, %c0_i32_0, %c0_i32_1 : i32, i32, i32
  }
  func.func @transform_7(%arg0: i32) -> (i32, i32) {
    %c0_i32 = arith.constant 0 : i32
    %c0_i32_0 = arith.constant 0 : i32
    %c0_i32_1 = arith.constant 0 : i32
    return %c0_i32, %c0_i32_0 : i32, i32
  }
  func.func @transform_8(%arg0: i32) -> (i32, i32) {
    %c0_i32 = arith.constant 0 : i32
    %c0_i32_0 = arith.constant 0 : i32
    return %arg0, %c0_i32 : i32, i32
  }
  func.func @transform_9(%arg0: i32) -> (i32, i32) {
    %c0_i32 = arith.constant 0 : i32
    %c0_i32_0 = arith.constant 0 : i32
    return %arg0, %c0_i32 : i32, i32
  }
}

</mosaic_0001>

<llo_original>
// kernel: tpu_custom_call.1
$region0: #{tpu_custom_call.1}
  #allocation0 [shape = 'u32[]', space=smem, size = 0x4, offset = 0x4, fixed_abs, tag = 'smem constant byte address 0x4 - core index']
  #allocation1 [shape = 'u32[144,128]{1,0:T(1,128)}', space=vmem, size = 0x12000, scoped, tag = 'internal scratch']
  %s0 = inlined_call_operand.vmem [shape: f32[256,8], index: 0, kind: input, shape index: {}]
  %s1 = inlined_call_operand.vmem [shape: f32[256,3], index: 1, kind: input, shape index: {}]
  %s2 = inlined_call_operand.vmem [shape: bf16[8,32], index: 2, kind: input, shape index: {}]
  %s3 = inlined_call_operand.vmem [shape: bf16[3,32], index: 3, kind: input, shape index: {}]
  %s4 = inlined_call_operand.vmem [shape: f32[1,32], index: 4, kind: input, shape index: {}]
  %s5 = inlined_call_operand.vmem [shape: bf16[2,32,32], index: 5, kind: input, shape index: {}]
  %s6 = inlined_call_operand.vmem [shape: f32[2,1,32], index: 6, kind: input, shape index: {}]
  %s7 = inlined_call_operand.vmem [shape: bf16[32,1], index: 7, kind: input, shape index: {}]
  %s8 = inlined_call_operand.vmem [shape: f32[256,11], index: 8, kind: output, shape index: {0}]
  %s9 = inlined_call_operand.vmem [shape: f32[256,1], index: 9, kind: output, shape index: {1}]
  %10 = xla_tuple %s8, %s9
  %s11 = sld [smem:[#allocation0]]
  $region73: #{tpu_custom_call.1} parent=0
    _
  %s13 = ssub.s32 1, %s11
  %s14 = scalar_select 0, %s13, %s11
  loop: start=0, step=1, limit=4
  $region2: #{tpu_custom_call.1} parent=0 // loop_pre_header
    _
  $region3: #{tpu_custom_call.1} parent=0 // loop_header
    %s16 = sphi 0, %s20
    %p17 = scmp.ge.s32.totalorder %s16, 4
    %s26 = sphi 0, %s28
    %s29 = sphi 0, %s26
    %s30 = sphi 0, %s29
    %s46 = sphi 0, %s30
    %s52 = sphi 0, %s54
    %s55 = sphi 0, %s52
    %s56 = sphi 0, %s55
    %s72 = sphi 0, %s56
    %s76 = sphi 0, %s76
    %s78 = sphi 0, %s76
    %s79 = sphi 0, %s78
    %s93 = sphi 0, %s79
    %s97 = sphi 0, %s97
    %s99 = sphi 0, %s97
    %s100 = sphi 0, %s99
    %s114 = sphi 0, %s100
    %s118 = sphi 0, %s118
    %s120 = sphi 0, %s118
    %s121 = sphi 0, %s120
    %s135 = sphi 0, %s121
    %s139 = sphi 0, %s139
    %s141 = sphi 0, %s139
    %s142 = sphi 0, %s141
    %s156 = sphi 0, %s142
    %s160 = sphi 0, %s160
    %s162 = sphi 0, %s160
    %s163 = sphi 0, %s162
    %s177 = sphi 0, %s163
    %s181 = sphi 0, %s181
    %s183 = sphi 0, %s181
    %s184 = sphi 0, %s183
    %s198 = sphi 0, %s184
    %s204 = sphi 0, %s206
    %s207 = sphi 0, %s204
    %s208 = sphi 0, %s207
    %s224 = sphi 0, %s208
    %s230 = sphi 0, %s232
    %s233 = sphi 0, %s230
    %s234 = sphi 0, %s233
    %s250 = sphi 0, %s234
  $region4: #{tpu_custom_call.1} parent=0 // loop_header_branch
    %19 = sbr.rel (%p17) target = $region8
  $region5: #{tpu_custom_call.1} parent=0 // loop_body
    %s21 = ssub.s32 %s16, 1
    %s22 = ssub.s32 %s16, 2
    %s23 = sadd.s32 %s16, 1
    %s24 = ssub.s32 %s16, %s23
    %p25 = scmp.eq.s32.totalorder %s24, 0
    %s27 = sadd.s32 %s26, 1
    %s28 = scalar_select %p25, %s26, %s27
    %p31 = pneg %p25
    %p32 = scmp.eq.s32.totalorder %s16, 1
    %p33 = por %p31, %p32
    %p34 = scmp.ne.s32.totalorder %s26, %s29
    %p35 = scmp.eq.s32.totalorder %s16, 0
    %p36 = por %p34, %p35
    %p37 = scmp.ne.s32.totalorder %s26, %s29
    %p38 = scmp.eq.s32.totalorder %s21, 1
    %p39 = por %p37, %p38
    %p40 = scmp.ne.s32.totalorder %s29, %s30
    %p41 = scmp.eq.s32.totalorder %s21, 0
    %p42 = por %p40, %p41
    %p43 = scmp.ne.s32.totalorder %s29, %s30
    %p44 = scmp.eq.s32.totalorder %s22, 1
    %p45 = por %p43, %p44
    %p47 = scmp.ne.s32.totalorder %s30, %s46
    %p48 = scmp.eq.s32.totalorder %s22, 0
    %p49 = por %p47, %p48
    %s50 = ssub.s32 %s16, %s23
    %p51 = scmp.eq.s32.totalorder %s50, 0
    %s53 = sadd.s32 %s52, 1
    %s54 = scalar_select %p51, %s52, %s53
    %p57 = pneg %p51
    %p58 = scmp.eq.s32.totalorder %s16, 1
    %p59 = por %p57, %p58
    %p60 = scmp.ne.s32.totalorder %s52, %s55
    %p61 = scmp.eq.s32.totalorder %s16, 0
    %p62 = por %p60, %p61
    %p63 = scmp.ne.s32.totalorder %s52, %s55
    %p64 = scmp.eq.s32.totalorder %s21, 1
    %p65 = por %p63, %p64
    %p66 = scmp.ne.s32.totalorder %s55, %s56
    %p67 = scmp.eq.s32.totalorder %s21, 0
    %p68 = por %p66, %p67
    %p69 = scmp.ne.s32.totalorder %s55, %s56
    %p70 = scmp.eq.s32.totalorder %s22, 1
    %p71 = por %p69, %p70
    %p73 = scmp.ne.s32.totalorder %s56, %s72
    %p74 = scmp.eq.s32.totalorder %s22, 0
    %p75 = por %p73, %p74
    %s77 = sadd.s32 %s76, 1
    %p80 = scmp.eq.s32.totalorder %s16, 1
    %p81 = scmp.ne.s32.totalorder %s76, %s78
    %p82 = scmp.eq.s32.totalorder %s16, 0
    %p83 = por %p81, %p82
    %p84 = scmp.ne.s32.totalorder %s76, %s78
    %p85 = scmp.eq.s32.totalorder %s21, 1
    %p86 = por %p84, %p85
    %p87 = scmp.ne.s32.totalorder %s78, %s79
    %p88 = scmp.eq.s32.totalorder %s21, 0
    %p89 = por %p87, %p88
    %p90 = scmp.ne.s32.totalorder %s78, %s79
    %p91 = scmp.eq.s32.totalorder %s22, 1
    %p92 = por %p90, %p91
    %p94 = scmp.ne.s32.totalorder %s79, %s93
    %p95 = scmp.eq.s32.totalorder %s22, 0
    %p96 = por %p94, %p95
    %s98 = sadd.s32 %s97, 1
    %p101 = scmp.eq.s32.totalorder %s16, 1
    %p102 = scmp.ne.s32.totalorder %s97, %s99
    %p103 = scmp.eq.s32.totalorder %s16, 0
    %p104 = por %p102, %p103
    %p105 = scmp.ne.s32.totalorder %s97, %s99
    %p106 = scmp.eq.s32.totalorder %s21, 1
    %p107 = por %p105, %p106
    %p108 = scmp.ne.s32.totalorder %s99, %s100
    %p109 = scmp.eq.s32.totalorder %s21, 0
    %p110 = por %p108, %p109
    %p111 = scmp.ne.s32.totalorder %s99, %s100
    %p112 = scmp.eq.s32.totalorder %s22, 1
    %p113 = por %p111, %p112
    %p115 = scmp.ne.s32.totalorder %s100, %s114
    %p116 = scmp.eq.s32.totalorder %s22, 0
    %p117 = por %p115, %p116
    %s119 = sadd.s32 %s118, 1
    %p122 = scmp.eq.s32.totalorder %s16, 1
    %p123 = scmp.ne.s32.totalorder %s118, %s120
    %p124 = scmp.eq.s32.totalorder %s16, 0
    %p125 = por %p123, %p124
    %p126 = scmp.ne.s32.totalorder %s118, %s120
    %p127 = scmp.eq.s32.totalorder %s21, 1
    %p128 = por %p126, %p127
    %p129 = scmp.ne.s32.totalorder %s120, %s121
    %p130 = scmp.eq.s32.totalorder %s21, 0
    %p131 = por %p129, %p130
    %p132 = scmp.ne.s32.totalorder %s120, %s121
    %p133 = scmp.eq.s32.totalorder %s22, 1
    %p134 = por %p132, %p133
    %p136 = scmp.ne.s32.totalorder %s121, %s135
    %p137 = scmp.eq.s32.totalorder %s22, 0
    %p138 = por %p136, %p137
    %s140 = sadd.s32 %s139, 1
    %p143 = scmp.eq.s32.totalorder %s16, 1
    %p144 = scmp.ne.s32.totalorder %s139, %s141
    %p145 = scmp.eq.s32.totalorder %s16, 0
    %p146 = por %p144, %p145
    %p147 = scmp.ne.s32.totalorder %s139, %s141
    %p148 = scmp.eq.s32.totalorder %s21, 1
    %p149 = por %p147, %p148
    %p150 = scmp.ne.s32.totalorder %s141, %s142
    %p151 = scmp.eq.s32.totalorder %s21, 0
    %p152 = por %p150, %p151
    %p153 = scmp.ne.s32.totalorder %s141, %s142
    %p154 = scmp.eq.s32.totalorder %s22, 1
    %p155 = por %p153, %p154
    %p157 = scmp.ne.s32.totalorder %s142, %s156
    %p158 = scmp.eq.s32.totalorder %s22, 0
    %p159 = por %p157, %p158
    %s161 = sadd.s32 %s160, 1
    %p164 = scmp.eq.s32.totalorder %s16, 1
    %p165 = scmp.ne.s32.totalorder %s160, %s162
    %p166 = scmp.eq.s32.totalorder %s16, 0
    %p167 = por %p165, %p166
    %p168 = scmp.ne.s32.totalorder %s160, %s162
    %p169 = scmp.eq.s32.totalorder %s21, 1
    %p170 = por %p168, %p169
    %p171 = scmp.ne.s32.totalorder %s162, %s163
    %p172 = scmp.eq.s32.totalorder %s21, 0
    %p173 = por %p171, %p172
    %p174 = scmp.ne.s32.totalorder %s162, %s163
    %p175 = scmp.eq.s32.totalorder %s22, 1
    %p176 = por %p174, %p175
    %p178 = scmp.ne.s32.totalorder %s163, %s177
    %p179 = scmp.eq.s32.totalorder %s22, 0
    %p180 = por %p178, %p179
    %s182 = sadd.s32 %s181, 1
    %p185 = scmp.eq.s32.totalorder %s16, 1
    %p186 = scmp.ne.s32.totalorder %s181, %s183
    %p187 = scmp.eq.s32.totalorder %s16, 0
    %p188 = por %p186, %p187
    %p189 = scmp.ne.s32.totalorder %s181, %s183
    %p190 = scmp.eq.s32.totalorder %s21, 1
    %p191 = por %p189, %p190
    %p192 = scmp.ne.s32.totalorder %s183, %s184
    %p193 = scmp.eq.s32.totalorder %s21, 0
    %p194 = por %p192, %p193
    %p195 = scmp.ne.s32.totalorder %s183, %s184
    %p196 = scmp.eq.s32.totalorder %s22, 1
    %p197 = por %p195, %p196
    %p199 = scmp.ne.s32.totalorder %s184, %s198
    %p200 = scmp.eq.s32.totalorder %s22, 0
    %p201 = por %p199, %p200
    %s202 = ssub.s32 %s16, %s23
    %p203 = scmp.eq.s32.totalorder %s202, 0
    %s205 = sadd.s32 %s204, 1
    %s206 = scalar_select %p203, %s204, %s205
    %p209 = pneg %p203
    %p210 = scmp.eq.s32.totalorder %s16, 1
    %p211 = por %p209, %p210
    %p212 = scmp.ne.s32.totalorder %s204, %s207
    %p213 = scmp.eq.s32.totalorder %s16, 0
    %p214 = por %p212, %p213
    %p215 = scmp.ne.s32.totalorder %s204, %s207
    %p216 = scmp.eq.s32.totalorder %s21, 1
    %p217 = por %p215, %p216
    %p218 = scmp.ne.s32.totalorder %s207, %s208
    %p219 = scmp.eq.s32.totalorder %s21, 0
    %p220 = por %p218, %p219
    %p221 = scmp.ne.s32.totalorder %s207, %s208
    %p222 = scmp.eq.s32.totalorder %s22, 1
    %p223 = por %p221, %p222
    %p225 = scmp.ne.s32.totalorder %s208, %s224
    %p226 = scmp.eq.s32.totalorder %s22, 0
    %p227 = por %p225, %p226
    %s228 = ssub.s32 %s16, %s23
    %p229 = scmp.eq.s32.totalorder %s228, 0
    %s231 = sadd.s32 %s230, 1
    %s232 = scalar_select %p229, %s230, %s231
    %p235 = pneg %p229
    %p236 = scmp.eq.s32.totalorder %s16, 1
    %p237 = por %p235, %p236
    %p238 = scmp.ne.s32.totalorder %s230, %s233
    %p239 = scmp.eq.s32.totalorder %s16, 0
    %p240 = por %p238, %p239
    %p241 = scmp.ne.s32.totalorder %s230, %s233
    %p242 = scmp.eq.s32.totalorder %s21, 1
    %p243 = por %p241, %p242
    %p244 = scmp.ne.s32.totalorder %s233, %s234
    %p245 = scmp.eq.s32.totalorder %s21, 0
    %p246 = por %p244, %p245
    %p247 = scmp.ne.s32.totalorder %s233, %s234
    %p248 = scmp.eq.s32.totalorder %s22, 1
    %p249 = por %p247, %p248
    %p251 = scmp.ne.s32.totalorder %s234, %s250
    %p252 = scmp.eq.s32.totalorder %s22, 0
    %p253 = por %p251, %p252
    %p254 = scmp.le.s32.totalorder 1, %s16
    %p255 = scmp.lt.s32.totalorder %s16, 3
    %p256 = pnand %p254, %p255
    %p257 = pneg %p256
    // Predicated region
    $region9: #{tpu_custom_call.1} parent=5 // pred_check
      _
    $region10: #{tpu_custom_call.1} parent=5 // pred_check_branch
      %259 = sbr.rel (%p256) target = $region12
    $region11: #{tpu_custom_call.1} parent=5 // pred_region
      %s260 = ssub.s32 %s16, 1
      // Predicated region
      $region13: #{tpu_custom_call.1} parent=11 // pred_check
        %p261 = pneg %p89
      $region14: #{tpu_custom_call.1} parent=11 // pred_check_branch
        %263 = sbr.rel (%p261) target = $region16
      $region15: #{tpu_custom_call.1} parent=11 // pred_region
        _
      $region16: #{tpu_custom_call.1} parent=11 // pred_fallthru
        _
      // Predicated region
      $region17: #{tpu_custom_call.1} parent=11 // pred_check
        %p264 = pneg %p110
      $region18: #{tpu_custom_call.1} parent=11 // pred_check_branch
        %266 = sbr.rel (%p264) target = $region20
      $region19: #{tpu_custom_call.1} parent=11 // pred_region
        _
      $region20: #{tpu_custom_call.1} parent=11 // pred_fallthru
        _
      // Predicated region
      $region21: #{tpu_custom_call.1} parent=11 // pred_check
        %p267 = pneg %p131
      $region22: #{tpu_custom_call.1} parent=11 // pred_check_branch
        %269 = sbr.rel (%p267) target = $region24
      $region23: #{tpu_custom_call.1} parent=11 // pred_region
        _
      $region24: #{tpu_custom_call.1} parent=11 // pred_fallthru
        _
      // Predicated region
      $region25: #{tpu_custom_call.1} parent=11 // pred_check
        %p270 = pneg %p152
      $region26: #{tpu_custom_call.1} parent=11 // pred_check_branch
        %272 = sbr.rel (%p270) target = $region28
      $region27: #{tpu_custom_call.1} parent=11 // pred_region
        _
      $region28: #{tpu_custom_call.1} parent=11 // pred_fallthru
        _
      // Predicated region
      $region29: #{tpu_custom_call.1} parent=11 // pred_check
        %p273 = pneg %p173
      $region30: #{tpu_custom_call.1} parent=11 // pred_check_branch
        %275 = sbr.rel (%p273) target = $region32
      $region31: #{tpu_custom_call.1} parent=11 // pred_region
        _
      $region32: #{tpu_custom_call.1} parent=11 // pred_fallthru
        _
      // Predicated region
      $region33: #{tpu_custom_call.1} parent=11 // pred_check
        %p276 = pneg %p194
      $region34: #{tpu_custom_call.1} parent=11 // pred_check_branch
        %278 = sbr.rel (%p276) target = $region36
      $region35: #{tpu_custom_call.1} parent=11 // pred_region
        _
      $region36: #{tpu_custom_call.1} parent=11 // pred_fallthru
        _
    $region12: #{tpu_custom_call.1} parent=5 // pred_fallthru
      _
    %p279 = scmp.lt.s32.totalorder %s16, 2
    // Predicated region
    $region37: #{tpu_custom_call.1} parent=5 // pred_check
      %p280 = pneg %p279
    $region38: #{tpu_custom_call.1} parent=5 // pred_check_branch
      %282 = sbr.rel (%p280) target = $region40
    $region39: #{tpu_custom_call.1} parent=5 // pred_region
      // Predicated region
      $region41: #{tpu_custom_call.1} parent=39 // pred_check
        %p283 = pneg %p36
      $region42: #{tpu_custom_call.1} parent=39 // pred_check_branch
        %285 = sbr.rel (%p283) target = $region44
      $region43: #{tpu_custom_call.1} parent=39 // pred_region
        %s286 = smul.u32 16, %s16
        %p287 = scmp.lt.s32.totalorder %s286, 31
        %s288 = scalar_select %p287, %s286, 31
        %s289 = smul.addr %s288, 8
        %s290 = scalar_lea.vmem %s0, %s289
        %s291 = smul.u32 16, %s16
      $region44: #{tpu_custom_call.1} parent=39 // pred_fallthru
        _
      // Predicated region
      $region45: #{tpu_custom_call.1} parent=39 // pred_check
        %p292 = pneg %p62
      $region46: #{tpu_custom_call.1} parent=39 // pred_check_branch
        %294 = sbr.rel (%p292) target = $region48
      $region47: #{tpu_custom_call.1} parent=39 // pred_region
        %s295 = smul.u32 16, %s16
        %p296 = scmp.lt.s32.totalorder %s295, 31
        %s297 = scalar_select %p296, %s295, 31
        %s298 = smul.addr %s297, 8
        %s299 = scalar_lea.vmem %s1, %s298
        %s300 = smul.u32 16, %s16
      $region48: #{tpu_custom_call.1} parent=39 // pred_fallthru
        _
    $region40: #{tpu_custom_call.1} parent=5 // pred_fallthru
      _
    %p301 = scmp.le.s32.totalorder 1, %s16
    %p302 = scmp.lt.s32.totalorder %s16, 3
    %p303 = pnand %p301, %p302
    %p304 = pneg %p303
    // Predicated region
    $region49: #{tpu_custom_call.1} parent=5 // pred_check
      _
    $region50: #{tpu_custom_call.1} parent=5 // pred_check_branch
      %306 = sbr.rel (%p303) target = $region52
    $region51: #{tpu_custom_call.1} parent=5 // pred_region
      %s307 = ssub.s32 %s16, 1
      %s308 = smul.u32 16, %s21
      %p309 = scmp.lt.s32.totalorder %s308, 31
      %s310 = scalar_select %p309, %s308, 31
      %s311 = smul.addr %s310, 8
      %s312 = scalar_lea.vmem %s0, %s311
      %p313 = pneg %p42
      %p314 = pneg %p39
      %s315 = smul.u32 16, %s21
      %p316 = scmp.lt.s32.totalorder %s315, 31
      %s317 = scalar_select %p316, %s315, 31
      %s318 = smul.addr %s317, 8
      %s319 = scalar_lea.vmem %s1, %s318
      %p320 = pneg %p68
      %p321 = pneg %p65
      %p322 = pneg %p89
      %p323 = pneg %p86
      %p324 = pneg %p110
      %p325 = pneg %p107
      %p326 = pneg %p131
      %p327 = pneg %p128
      %p328 = pneg %p152
      %p329 = pneg %p149
      %p330 = pneg %p173
      %p331 = pneg %p170
      %p332 = pneg %p194
      %p333 = pneg %p191
      %p334 = pneg %p220
      %p335 = pneg %p217
      %s336 = smul.u32 16, %s21
      %p337 = scmp.lt.s32.totalorder %s336, 31
      %s338 = scalar_select %p337, %s336, 31
      %s339 = smul.addr %s338, 8
      %s340 = scalar_lea.vmem %s8, %s339
      %p341 = pneg %p246
      %p342 = pneg %p243
      %s343 = smul.u32 16, %s21
      %p344 = scmp.lt.s32.totalorder %s343, 31
      %s345 = scalar_select %p344, %s343, 31
      %s346 = smul.addr %s345, 8
      %s347 = scalar_lea.vmem %s9, %s346
      %s348 = smul.u32 16, %s21
      %p349 = scmp.lt.s32.totalorder %s348, 31
      %s350 = scalar_select %p349, %s348, 31
      %s351 = smul.addr %s350, 8
      %s352 = scalar_lea.vmem %s0, %s351
      %s353 = smul.u32 16, %s21
      %s354 = smul.u32 16, %s21
      %p355 = scmp.lt.s32.totalorder %s354, 31
      %s356 = scalar_select %p355, %s354, 31
      %s357 = smul.addr %s356, 8
      %s358 = scalar_lea.vmem %s1, %s357
      %s359 = smul.u32 16, %s21
      %s360 = smul.u32 16, %s21
      %p361 = scmp.lt.s32.totalorder %s360, 31
      %s362 = scalar_select %p361, %s360, 31
      %s363 = smul.addr %s362, 8
      %s364 = scalar_lea.vmem %s8, %s363
      %s365 = smul.u32 16, %s21
      %s366 = smul.u32 16, %s21
      %p367 = scmp.lt.s32.totalorder %s366, 31
      %s368 = scalar_select %p367, %s366, 31
      %s369 = smul.addr %s368, 8
      %s370 = scalar_lea.vmem %s9, %s369
      %s371 = smul.u32 16, %s21
      %v373 = vld [vmem:[%s352] sm:$0xff]
      %v374 = vld [vmem:[%s352 + $0x8] sm:$0xff]
      %v375 = vld [vmem:[%s352 + $0x10] sm:$0xff]
      %v376 = vld [vmem:[%s352 + $0x18] sm:$0xff]
      %v377 = vld [vmem:[%s352 + $0x20] sm:$0xff]
      %v378 = vld [vmem:[%s352 + $0x28] sm:$0xff]
      %v379 = vld [vmem:[%s352 + $0x30] sm:$0xff]
      %v380 = vld [vmem:[%s352 + $0x38] sm:$0xff]
      %v381 = vld [vmem:[%s352 + $0x40] sm:$0xff]
      %v382 = vld [vmem:[%s352 + $0x48] sm:$0xff]
      %v383 = vld [vmem:[%s352 + $0x50] sm:$0xff]
      %v384 = vld [vmem:[%s352 + $0x58] sm:$0xff]
      %v385 = vld [vmem:[%s352 + $0x60] sm:$0xff]
      %v386 = vld [vmem:[%s352 + $0x68] sm:$0xff]
      %v387 = vld [vmem:[%s352 + $0x70] sm:$0xff]
      %v388 = vld [vmem:[%s352 + $0x78] sm:$0xff]
      %v389 = vld [vmem:[%s358] sm:$0xff]
      %v390 = vld [vmem:[%s358 + $0x8] sm:$0xff]
      %v391 = vld [vmem:[%s358 + $0x10] sm:$0xff]
      %v392 = vld [vmem:[%s358 + $0x18] sm:$0xff]
      %v393 = vld [vmem:[%s358 + $0x20] sm:$0xff]
      %v394 = vld [vmem:[%s358 + $0x28] sm:$0xff]
      %v395 = vld [vmem:[%s358 + $0x30] sm:$0xff]
      %v396 = vld [vmem:[%s358 + $0x38] sm:$0xff]
      %v397 = vld [vmem:[%s358 + $0x40] sm:$0xff]
      %v398 = vld [vmem:[%s358 + $0x48] sm:$0xff]
      %v399 = vld [vmem:[%s358 + $0x50] sm:$0xff]
      %v400 = vld [vmem:[%s358 + $0x58] sm:$0xff]
      %v401 = vld [vmem:[%s358 + $0x60] sm:$0xff]
      %v402 = vld [vmem:[%s358 + $0x68] sm:$0xff]
      %v403 = vld [vmem:[%s358 + $0x70] sm:$0xff]
      %v404 = vld [vmem:[%s358 + $0x78] sm:$0xff]
      %vm405 = vcmask 64512
      %406 = vst.msk [vmem:[%s364] sm:$0xff] %vm405, %v373
      %407 = vst.msk [vmem:[%s364 + $0x8] sm:$0xff] %vm405, %v374
      %408 = vst.msk [vmem:[%s364 + $0x10] sm:$0xff] %vm405, %v375
      %409 = vst.msk [vmem:[%s364 + $0x18] sm:$0xff] %vm405, %v376
      %410 = vst.msk [vmem:[%s364 + $0x20] sm:$0xff] %vm405, %v377
      %411 = vst.msk [vmem:[%s364 + $0x28] sm:$0xff] %vm405, %v378
      %412 = vst.msk [vmem:[%s364 + $0x30] sm:$0xff] %vm405, %v379
      %413 = vst.msk [vmem:[%s364 + $0x38] sm:$0xff] %vm405, %v380
      %414 = vst.msk [vmem:[%s364 + $0x40] sm:$0xff] %vm405, %v381
      %415 = vst.msk [vmem:[%s364 + $0x48] sm:$0xff] %vm405, %v382
      %416 = vst.msk [vmem:[%s364 + $0x50] sm:$0xff] %vm405, %v383
      %417 = vst.msk [vmem:[%s364 + $0x58] sm:$0xff] %vm405, %v384
      %418 = vst.msk [vmem:[%s364 + $0x60] sm:$0xff] %vm405, %v385
      %419 = vst.msk [vmem:[%s364 + $0x68] sm:$0xff] %vm405, %v386
      %420 = vst.msk [vmem:[%s364 + $0x70] sm:$0xff] %vm405, %v387
      %421 = vst.msk [vmem:[%s364 + $0x78] sm:$0xff] %vm405, %v388
      %438 = vrot.lane.b32.xlu0 %v389, 8
      %v439 = vpop.permute.xlu0 %438
      %440 = vrot.lane.b32.xlu0 %v390, 8
      %v441 = vpop.permute.xlu0 %440
      %442 = vrot.lane.b32.xlu0 %v391, 8
      %v443 = vpop.permute.xlu0 %442
      %444 = vrot.lane.b32.xlu0 %v392, 8
      %v445 = vpop.permute.xlu0 %444
      %446 = vrot.lane.b32.xlu0 %v393, 8
      %v447 = vpop.permute.xlu0 %446
      %448 = vrot.lane.b32.xlu0 %v394, 8
      %v449 = vpop.permute.xlu0 %448
      %450 = vrot.lane.b32.xlu0 %v395, 8
      %v451 = vpop.permute.xlu0 %450
      %452 = vrot.lane.b32.xlu0 %v396, 8
      %v453 = vpop.permute.xlu0 %452
      %454 = vrot.lane.b32.xlu0 %v397, 8
      %v455 = vpop.permute.xlu0 %454
      %456 = vrot.lane.b32.xlu0 %v398, 8
      %v457 = vpop.permute.xlu0 %456
      %458 = vrot.lane.b32.xlu0 %v399, 8
      %v459 = vpop.permute.xlu0 %458
      %460 = vrot.lane.b32.xlu0 %v400, 8
      %v461 = vpop.permute.xlu0 %460
      %462 = vrot.lane.b32.xlu0 %v401, 8
      %v463 = vpop.permute.xlu0 %462
      %464 = vrot.lane.b32.xlu0 %v402, 8
      %v465 = vpop.permute.xlu0 %464
      %466 = vrot.lane.b32.xlu0 %v403, 8
      %v467 = vpop.permute.xlu0 %466
      %468 = vrot.lane.b32.xlu0 %v404, 8
      %v469 = vpop.permute.xlu0 %468
      %vm486 = vcmask 89152
      %487 = vst.msk [vmem:[%s364] sm:$0xff] %vm486, %v439
      %488 = vst.msk [vmem:[%s364 + $0x8] sm:$0xff] %vm486, %v441
      %489 = vst.msk [vmem:[%s364 + $0x10] sm:$0xff] %vm486, %v443
      %490 = vst.msk [vmem:[%s364 + $0x18] sm:$0xff] %vm486, %v445
      %491 = vst.msk [vmem:[%s364 + $0x20] sm:$0xff] %vm486, %v447
      %492 = vst.msk [vmem:[%s364 + $0x28] sm:$0xff] %vm486, %v449
      %493 = vst.msk [vmem:[%s364 + $0x30] sm:$0xff] %vm486, %v451
      %494 = vst.msk [vmem:[%s364 + $0x38] sm:$0xff] %vm486, %v453
      %495 = vst.msk [vmem:[%s364 + $0x40] sm:$0xff] %vm486, %v455
      %496 = vst.msk [vmem:[%s364 + $0x48] sm:$0xff] %vm486, %v457
      %497 = vst.msk [vmem:[%s364 + $0x50] sm:$0xff] %vm486, %v459
      %498 = vst.msk [vmem:[%s364 + $0x58] sm:$0xff] %vm486, %v461
      %499 = vst.msk [vmem:[%s364 + $0x60] sm:$0xff] %vm486, %v463
      %500 = vst.msk [vmem:[%s364 + $0x68] sm:$0xff] %vm486, %v465
      %501 = vst.msk [vmem:[%s364 + $0x70] sm:$0xff] %vm486, %v467
      %502 = vst.msk [vmem:[%s364 + $0x78] sm:$0xff] %vm486, %v469
      %v503 = vpack.c.bf16 %v374, %v373
      %v504 = vpack.c.bf16 %v376, %v375
      %v505 = vpack.c.bf16 %v378, %v377
      %v506 = vpack.c.bf16 %v380, %v379
      %v507 = vpack.c.bf16 %v382, %v381
      %v508 = vpack.c.bf16 %v384, %v383
      %v509 = vpack.c.bf16 %v386, %v385
      %v510 = vpack.c.bf16 %v388, %v387
      %v511 = vld [vmem:[%s2] sm:$0xf]
      %v512 = vpack.c.bf16 %v390, %v389
      %v513 = vpack.c.bf16 %v392, %v391
      %v514 = vpack.c.bf16 %v394, %v393
      %v515 = vpack.c.bf16 %v396, %v395
      %v516 = vpack.c.bf16 %v398, %v397
      %v517 = vpack.c.bf16 %v400, %v399
      %v518 = vpack.c.bf16 %v402, %v401
      %v519 = vpack.c.bf16 %v404, %v403
      %v520 = vld [vmem:[%s3] sm:$0x3]
      %vm521 = vcmask 23552
      %v523 = vsel %vm521, %v512, 0
      %v526 = vsel %vm521, %v513, 0
      %v529 = vsel %vm521, %v514, 0
      %v532 = vsel %vm521, %v515, 0
      %v535 = vsel %vm521, %v516, 0
      %v538 = vsel %vm521, %v517, 0
      %v541 = vsel %vm521, %v518, 0
      %v544 = vsel %vm521, %v519, 0
      %vm546 = vcmask 1040384
      %vm547 = vcmask 1041408
      %v548 = vsel %vm546, 4294967295, 65535
      %v549 = vsel %vm547, %v548, 0
      %v551 = vand.u32 %v520, %v549
      %553 = vmatprep.subr.bf16.mxu0 0
      %554 = vmatpush1.bf16.msra.mxu0 %v551
      %555 = vmatprep.subr.bf16.mxu0 0
      %556 = vmatpush1.bf16.msra.mxu0 0
      %557 = vmatprep.subr.bf16.mxu0 0
      %558 = vmatpush1.bf16.msra.mxu0 0
      %559 = vmatprep.subr.bf16.mxu0 0
      %560 = vmatpush1.bf16.msra.mxu0 0
      %561 = vmatprep.subr.bf16.mxu0 0
      %562 = vmatpush1.bf16.msra.mxu0 0
      %563 = vmatprep.subr.bf16.mxu0 0
      %564 = vmatpush1.bf16.msra.mxu0 0
      %565 = vmatprep.subr.bf16.mxu0 0
      %566 = vmatpush1.bf16.msra.mxu0 0
      %567 = vmatprep.subr.bf16.mxu0 0
      %568 = vmatpush1.bf16.msra.mxu0 0
      %569 = vmatprep.subr.bf16.mxu0 0
      %570 = vmatpush1.bf16.msra.mxu0 0
      %571 = vmatprep.subr.bf16.mxu0 0
      %572 = vmatpush1.bf16.msra.mxu0 0
      %573 = vmatprep.subr.bf16.mxu0 0
      %574 = vmatpush1.bf16.msra.mxu0 0
      %575 = vmatprep.subr.bf16.mxu0 0
      %576 = vmatpush1.bf16.msra.mxu0 0
      %577 = vmatprep.subr.bf16.mxu0 0
      %578 = vmatpush1.bf16.msra.mxu0 0
      %579 = vmatprep.subr.bf16.mxu0 0
      %580 = vmatpush1.bf16.msra.mxu0 0
      %581 = vmatprep.subr.bf16.mxu0 0
      %582 = vmatpush1.bf16.msra.mxu0 0
      %583 = vmatprep.subr.bf16.mxu0 0
      %584 = vmatpush1.bf16.msra.mxu0 0
      %585 = vmatprep.mubr.bf16.mxu0 0
      %586 = vmatmul.mubr.bf16.gmra.mrb[0].mxu0 %v523
      %v587 = vpop.f32.mrb[0].mxu0
      %v588 = vadd.f32 0.0, %v587
      %v589 = vpop.f32.mrb[0].mxu0
      %v590 = vpop.f32.mrb[0].mxu0
      %v591 = vadd.f32 0.0, %v590
      %v592 = vpop.f32.mrb[0].mxu0
      %593 = vmatprep.mubr.bf16.mxu0 0
      %594 = vmatmul.mubr.bf16.gmra.mrb[0].mxu0 %v526
      %v595 = vpop.f32.mrb[0].mxu0
      %v596 = vadd.f32 0.0, %v595
      %v597 = vpop.f32.mrb[0].mxu0
      %v598 = vpop.f32.mrb[0].mxu0
      %v599 = vadd.f32 0.0, %v598
      %v600 = vpop.f32.mrb[0].mxu0
      %601 = vmatprep.mubr.bf16.mxu0 0
      %602 = vmatmul.mubr.bf16.gmra.mrb[0].mxu0 %v529
      %v603 = vpop.f32.mrb[0].mxu0
      %v604 = vadd.f32 0.0, %v603
      %v605 = vpop.f32.mrb[0].mxu0
      %v606 = vpop.f32.mrb[0].mxu0
      %v607 = vadd.f32 0.0, %v606
      %v608 = vpop.f32.mrb[0].mxu0
      %609 = vmatprep.mubr.bf16.mxu0 0
      %610 = vmatmul.mubr.bf16.gmra.mrb[0].mxu0 %v532
      %v611 = vpop.f32.mrb[0].mxu0
      %v612 = vadd.f32 0.0, %v611
      %v613 = vpop.f32.mrb[0].mxu0
      %v614 = vpop.f32.mrb[0].mxu0
      %v615 = vadd.f32 0.0, %v614
      %v616 = vpop.f32.mrb[0].mxu0
      %617 = vmatprep.mubr.bf16.mxu0 0
      %618 = vmatmul.mubr.bf16.gmra.mrb[0].mxu0 %v535
      %v619 = vpop.f32.mrb[0].mxu0
      %v620 = vadd.f32 0.0, %v619
      %v621 = vpop.f32.mrb[0].mxu0
      %v622 = vpop.f32.mrb[0].mxu0
      %v623 = vadd.f32 0.0, %v622
      %v624 = vpop.f32.mrb[0].mxu0
      %625 = vmatprep.mubr.bf16.mxu0 0
      %626 = vmatmul.mubr.bf16.gmra.mrb[0].mxu0 %v538
      %v627 = vpop.f32.mrb[0].mxu0
      %v628 = vadd.f32 0.0, %v627
      %v629 = vpop.f32.mrb[0].mxu0
      %v630 = vpop.f32.mrb[0].mxu0
      %v631 = vadd.f32 0.0, %v630
      %v632 = vpop.f32.mrb[0].mxu0
      %633 = vmatprep.mubr.bf16.mxu0 0
      %634 = vmatmul.mubr.bf16.gmra.mrb[0].mxu0 %v541
      %v635 = vpop.f32.mrb[0].mxu0
      %v636 = vadd.f32 0.0, %v635
      %v637 = vpop.f32.mrb[0].mxu0
      %v638 = vpop.f32.mrb[0].mxu0
      %v639 = vadd.f32 0.0, %v638
      %v640 = vpop.f32.mrb[0].mxu0
      %641 = vmatprep.mubr.bf16.mxu0 0
      %642 = vmatmul.mubr.bf16.gmra.mrb[0].mxu0 %v544
      %v643 = vpop.f32.mrb[0].mxu0
      %v644 = vadd.f32 0.0, %v643
      %v645 = vpop.f32.mrb[0].mxu0
      %v646 = vpop.f32.mrb[0].mxu0
      %v647 = vadd.f32 0.0, %v646
      %v648 = vpop.f32.mrb[0].mxu0
      %649 = vdwg.mxu0
      %v651 = vsel %vm405, %v503, 0
      %v654 = vsel %vm405, %v504, 0
      %v657 = vsel %vm405, %v505, 0
      %v660 = vsel %vm405, %v506, 0
      %v663 = vsel %vm405, %v507, 0
      %v666 = vsel %vm405, %v508, 0
      %v669 = vsel %vm405, %v509, 0
      %v672 = vsel %vm405, %v510, 0
      %vm674 = vcmask 1043456
      %v676 = vsel %vm674, %v511, 0
      %678 = vmatprep.subr.bf16.mxu0 0
      %679 = vmatpush1.bf16.msra.mxu0 %v676
      %680 = vmatprep.subr.bf16.mxu0 0
      %681 = vmatpush1.bf16.msra.mxu0 0
      %682 = vmatprep.subr.bf16.mxu0 0
      %683 = vmatpush1.bf16.msra.mxu0 0
      %684 = vmatprep.subr.bf16.mxu0 0
      %685 = vmatpush1.bf16.msra.mxu0 0
      %686 = vmatprep.subr.bf16.mxu0 0
      %687 = vmatpush1.bf16.msra.mxu0 0
      %688 = vmatprep.subr.bf16.mxu0 0
      %689 = vmatpush1.bf16.msra.mxu0 0
      %690 = vmatprep.subr.bf16.mxu0 0
      %691 = vmatpush1.bf16.msra.mxu0 0
      %692 = vmatprep.subr.bf16.mxu0 0
      %693 = vmatpush1.bf16.msra.mxu0 0
      %694 = vmatprep.subr.bf16.mxu0 0
      %695 = vmatpush1.bf16.msra.mxu0 0
      %696 = vmatprep.subr.bf16.mxu0 0
      %697 = vmatpush1.bf16.msra.mxu0 0
      %698 = vmatprep.subr.bf16.mxu0 0
      %699 = vmatpush1.bf16.msra.mxu0 0
      %700 = vmatprep.subr.bf16.mxu0 0
      %701 = vmatpush1.bf16.msra.mxu0 0
      %702 = vmatprep.subr.bf16.mxu0 0
      %703 = vmatpush1.bf16.msra.mxu0 0
      %704 = vmatprep.subr.bf16.mxu0 0
      %705 = vmatpush1.bf16.msra.mxu0 0
      %706 = vmatprep.subr.bf16.mxu0 0
      %707 = vmatpush1.bf16.msra.mxu0 0
      %708 = vmatprep.subr.bf16.mxu0 0
      %709 = vmatpush1.bf16.msra.mxu0 0
      %710 = vmatprep.mubr.bf16.mxu0 0
      %711 = vmatmul.mubr.bf16.gmra.mrb[0].mxu0 %v651
      %v712 = vpop.f32.mrb[0].mxu0
      %v713 = vadd.f32 %v588, %v712
      %v714 = vpop.f32.mrb[0].mxu0
      %v715 = vpop.f32.mrb[0].mxu0
      %v716 = vadd.f32 %v591, %v715
      %v717 = vpop.f32.mrb[0].mxu0
      %718 = vmatprep.mubr.bf16.mxu0 0
      %719 = vmatmul.mubr.bf16.gmra.mrb[0].mxu0 %v654
      %v720 = vpop.f32.mrb[0].mxu0
      %v721 = vadd.f32 %v596, %v720
      %v722 = vpop.f32.mrb[0].mxu0
      %v723 = vpop.f32.mrb[0].mxu0
      %v724 = vadd.f32 %v599, %v723
      %v725 = vpop.f32.mrb[0].mxu0
      %726 = vmatprep.mubr.bf16.mxu0 0
      %727 = vmatmul.mubr.bf16.gmra.mrb[0].mxu0 %v657
      %v728 = vpop.f32.mrb[0].mxu0
      %v729 = vadd.f32 %v604, %v728
      %v730 = vpop.f32.mrb[0].mxu0
      %v731 = vpop.f32.mrb[0].mxu0
      %v732 = vadd.f32 %v607, %v731
      %v733 = vpop.f32.mrb[0].mxu0
      %734 = vmatprep.mubr.bf16.mxu0 0
      %735 = vmatmul.mubr.bf16.gmra.mrb[0].mxu0 %v660
      %v736 = vpop.f32.mrb[0].mxu0
      %v737 = vadd.f32 %v612, %v736
      %v738 = vpop.f32.mrb[0].mxu0
      %v739 = vpop.f32.mrb[0].mxu0
      %v740 = vadd.f32 %v615, %v739
      %v741 = vpop.f32.mrb[0].mxu0
      %742 = vmatprep.mubr.bf16.mxu0 0
      %743 = vmatmul.mubr.bf16.gmra.mrb[0].mxu0 %v663
      %v744 = vpop.f32.mrb[0].mxu0
      %v745 = vadd.f32 %v620, %v744
      %v746 = vpop.f32.mrb[0].mxu0
      %v747 = vpop.f32.mrb[0].mxu0
      %v748 = vadd.f32 %v623, %v747
      %v749 = vpop.f32.mrb[0].mxu0
      %750 = vmatprep.mubr.bf16.mxu0 0
      %751 = vmatmul.mubr.bf16.gmra.mrb[0].mxu0 %v666
      %v752 = vpop.f32.mrb[0].mxu0
      %v753 = vadd.f32 %v628, %v752
      %v754 = vpop.f32.mrb[0].mxu0
      %v755 = vpop.f32.mrb[0].mxu0
      %v756 = vadd.f32 %v631, %v755
      %v757 = vpop.f32.mrb[0].mxu0
      %758 = vmatprep.mubr.bf16.mxu0 0
      %759 = vmatmul.mubr.bf16.gmra.mrb[0].mxu0 %v669
      %v760 = vpop.f32.mrb[0].mxu0
      %v761 = vadd.f32 %v636, %v760
      %v762 = vpop.f32.mrb[0].mxu0
      %v763 = vpop.f32.mrb[0].mxu0
      %v764 = vadd.f32 %v639, %v763
      %v765 = vpop.f32.mrb[0].mxu0
      %766 = vmatprep.mubr.bf16.mxu0 0
      %767 = vmatmul.mubr.bf16.gmra.mrb[0].mxu0 %v672
      %v768 = vpop.f32.mrb[0].mxu0
      %v769 = vadd.f32 %v644, %v768
      %v770 = vpop.f32.mrb[0].mxu0
      %v771 = vpop.f32.mrb[0].mxu0
      %v772 = vadd.f32 %v647, %v771
      %v773 = vpop.f32.mrb[0].mxu0
      %774 = vdwg.mxu0
      %v775 = vld [vmem:[%s4] sm:$0x1]
      %v777 = vlaneseq
      %v778 = vshrl.u32 %v777, 7
      %v779 = vsub.s32 0, %v778
      %v780 = vrot.slane %v775, %v779
      %v782 = vadd.f32 %v713, %v780
      %v783 = vadd.f32 %v716, %v780
      %v784 = vadd.f32 %v721, %v780
      %v785 = vadd.f32 %v724, %v780
      %v786 = vadd.f32 %v729, %v780
      %v787 = vadd.f32 %v732, %v780
      %v788 = vadd.f32 %v737, %v780
      %v789 = vadd.f32 %v740, %v780
      %v790 = vadd.f32 %v745, %v780
      %v791 = vadd.f32 %v748, %v780
      %v792 = vadd.f32 %v753, %v780
      %v793 = vadd.f32 %v756, %v780
      %v794 = vadd.f32 %v761, %v780
      %v795 = vadd.f32 %v764, %v780
      %v796 = vadd.f32 %v769, %v780
      %v797 = vadd.f32 %v772, %v780
      %v798 = vand.u32 2147483647, %v782
      %vm799 = vcmp.le.f32.partialorder %v798, 0.7853982
      %vm800 = vcmp.lt.s32.totalorder %v782, 0
      %v801 = vand.u32 %v782, 2139095040
      %v802 = vshrl.u32 %v801, 23
      %v803 = vsub.s32 %v802, 127
      %v804 = vand.u32 2147483647, %v782
      %v805 = vand.u32 %v804, 8388607
      %v806 = vor.u32 %v805, 8388608
      %v807 = vsub.s32 0, %v806
      %v808 = vadd.s32 %v803, 1
      %vm809 = vcmp.gt.s32.totalorder %v808, 0
      %v810 = vsel %vm809, %v808, 0
      %v811 = vshrl.u32 %v810, 5
      %v812 = vand.u32 %v810, 31
      %v813 = vsub.s32 32, %v812
      %v814 = vshrl.u32 683565275, %v813
      %v815 = vshll.u32 683565275, %v812
      %v816 = vshrl.u32 2475754826, %v813
      %v817 = vor.u32 %v815, %v816
      %v818 = vshll.u32 2475754826, %v812
      %v819 = vshrl.u32 2131351028, %v813
      %v820 = vor.u32 %v818, %v819
      %v821 = vshll.u32 2131351028, %v812
      %v822 = vshrl.u32 2102212464, %v813
      %v823 = vor.u32 %v821, %v822
      %v824 = vshll.u32 2102212464, %v812
      %v825 = vshrl.u32 920167782, %v813
      %v826 = vor.u32 %v824, %v825
      %v827 = vshll.u32 920167782, %v812
      %v828 = vshrl.u32 1326507024, %v813
      %v829 = vor.u32 %v827, %v828
      %vm830 = vcmp.lt.s32.totalorder %v811, 1
      %vm831 = vcmp.lt.s32.totalorder %v811, 2
      %vm832 = vcmp.lt.s32.totalorder %v811, 3
      %vm833 = vcmp.lt.s32.totalorder %v811, 4
      %v834 = vsel %vm830, %v814, %v817
      %v835 = vsel %vm833, %v823, 2102212464
      %v836 = vsel %vm832, %v820, %v835
      %v837 = vsel %vm831, %v834, %v836
      %v838 = vsel %vm830, %v817, %v820
      %v839 = vsel %vm833, %v826, 920167782
      %v840 = vsel %vm832, %v823, %v839
      %v841 = vsel %vm831, %v838, %v840
      %v842 = vsel %vm830, %v820, %v823
      %v843 = vsel %vm833, %v829, 1326507024
      %v844 = vsel %vm832, %v826, %v843
      %v845 = vsel %vm831, %v842, %v844
      %v846 = vshll.u32 %v806, 8
      %v847 = vmul.u32.u64.compose %v846, %v845
      %v848 = vextract.low.u32 %v847
      %v849 = vextract.high.u32 %v847
      %v850 = vmul.u32.u64.compose %v846, %v841
      %v851 = vextract.low.u32 %v850
      %v852 = vextract.high.u32 %v850
      %v853 = vmul.u32 %v846, %v837
      %v854 = vadd.s32 %v849, %v851
      %vm855 = vc.u32 %v849, %v851
      %v856 = vadd.s32 %v852, 1
      %v857 = vsel %vm855, %v856, %v852
      %v858 = vadd.s32 %v853, %v857
      %v859 = vadd.s32 %v858, 536870912
      %v860 = vshrl.u32 %v859, 30
      %v861 = vshll.u32 %v860, 30
      %v862 = vsub.s32 %v858, %v861
      %vm863 = vcmp.lt.s32.totalorder %v862, 0
      %v864 = vsub.s32 0, %v862
      %v865 = vsel %vm863, %v864, %v862
      %v866 = vclz %v865
      %v867 = vsub.s32 %v866, 2
      %vm868 = vcmp.gt.s32.totalorder 0, %v867
      %v869 = vsel %vm868, 0, %v867
      %v870 = vsub.s32 32, %v869
      %v871 = vshll.u32 %v862, %v869
      %v872 = vshrl.u32 %v854, %v870
      %v873 = vor.u32 %v871, %v872
      %v874 = vsub.s32 4294967266, %v869
      %v875 = vadd.s32 %v874, 127
      %v876 = vshll.u32 %v875, 23
      %v877 = vor.u32 4788187, %v876
      %v878 = vand.u32 2147483647, %v877
      %v880 = vcvt.s32.f32 %v873
      %v881 = vmul.f32 %v880, %v878
      %v882 = vxor.u32 %v881, 2147483648
      %v883 = vsel %vm800, %v882, %v881
      %v884 = vsub.s32 4, %v860
      %v885 = vsel %vm800, %v884, %v860
      %v886 = vsel %vm799, %v782, %v883
      %v887 = vsel %vm799, 0, %v885
      %v888 = vcosq.f32.pop %v886
      %v889 = vsinq.f32.pop %v886
      %vm890 = vweird.f32 %v782
      %v891 = vadd.s32 %v887, 3
      %v892 = vand.u32 %v891, 3
      %vm893 = vcmp.lt.s32.totalorder %v892, 2
      %vm894 = vcmp.eq.s32.totalorder %v892, 0
      %v895 = vxor.u32 %v889, 2147483648
      %v896 = vsel %vm894, %v888, %v895
      %vm897 = vcmp.eq.s32.totalorder %v892, 2
      %v898 = vxor.u32 %v888, 2147483648
      %v899 = vsel %vm897, %v898, %v889
      %v900 = vsel %vm893, %v896, %v899
      %v901 = vsel %vm890, nan, %v900
      %v902 = vand.u32 2147483647, %v783
      %vm903 = vcmp.le.f32.partialorder %v902, 0.7853982
      %vm904 = vcmp.lt.s32.totalorder %v783, 0
      %v905 = vand.u32 %v783, 2139095040
      %v906 = vshrl.u32 %v905, 23
      %v907 = vsub.s32 %v906, 127
      %v908 = vand.u32 2147483647, %v783
      %v909 = vand.u32 %v908, 8388607
      %v910 = vor.u32 %v909, 8388608
      %v911 = vsub.s32 0, %v910
      %v912 = vadd.s32 %v907, 1
      %vm913 = vcmp.gt.s32.totalorder %v912, 0
      %v914 = vsel %vm913, %v912, 0
      %v915 = vshrl.u32 %v914, 5
      %v916 = vand.u32 %v914, 31
      %v917 = vsub.s32 32, %v916
      %v918 = vshrl.u32 683565275, %v917
      %v919 = vshll.u32 683565275, %v916
      %v920 = vshrl.u32 2475754826, %v917
      %v921 = vor.u32 %v919, %v920
      %v922 = vshll.u32 2475754826, %v916
      %v923 = vshrl.u32 2131351028, %v917
      %v924 = vor.u32 %v922, %v923
      %v925 = vshll.u32 2131351028, %v916
      %v926 = vshrl.u32 2102212464, %v917
      %v927 = vor.u32 %v925, %v926
      %v928 = vshll.u32 2102212464, %v916
      %v929 = vshrl.u32 920167782, %v917
      %v930 = vor.u32 %v928, %v929
      %v931 = vshll.u32 920167782, %v916
      %v932 = vshrl.u32 1326507024, %v917
      %v933 = vor.u32 %v931, %v932
      %vm934 = vcmp.lt.s32.totalorder %v915, 1
      %vm935 = vcmp.lt.s32.totalorder %v915, 2
      %vm936 = vcmp.lt.s32.totalorder %v915, 3
      %vm937 = vcmp.lt.s32.totalorder %v915, 4
      %v938 = vsel %vm934, %v918, %v921
      %v939 = vsel %vm937, %v927, 2102212464
      %v940 = vsel %vm936, %v924, %v939
      %v941 = vsel %vm935, %v938, %v940
      %v942 = vsel %vm934, %v921, %v924
      %v943 = vsel %vm937, %v930, 920167782
      %v944 = vsel %vm936, %v927, %v943
      %v945 = vsel %vm935, %v942, %v944
      %v946 = vsel %vm934, %v924, %v927
      %v947 = vsel %vm937, %v933, 1326507024
      %v948 = vsel %vm936, %v930, %v947
      %v949 = vsel %vm935, %v946, %v948
      %v950 = vshll.u32 %v910, 8
      %v951 = vmul.u32.u64.compose %v950, %v949
      %v952 = vextract.low.u32 %v951
      %v953 = vextract.high.u32 %v951
      %v954 = vmul.u32.u64.compose %v950, %v945
      %v955 = vextract.low.u32 %v954
      %v956 = vextract.high.u32 %v954
      %v957 = vmul.u32 %v950, %v941
      %v958 = vadd.s32 %v953, %v955
      %vm959 = vc.u32 %v953, %v955
      %v960 = vadd.s32 %v956, 1
      %v961 = vsel %vm959, %v960, %v956
      %v962 = vadd.s32 %v957, %v961
      %v963 = vadd.s32 %v962, 536870912
      %v964 = vshrl.u32 %v963, 30
      %v965 = vshll.u32 %v964, 30
      %v966 = vsub.s32 %v962, %v965
      %vm967 = vcmp.lt.s32.totalorder %v966, 0
      %v968 = vsub.s32 0, %v966
      %v969 = vsel %vm967, %v968, %v966
      %v970 = vclz %v969
      %v971 = vsub.s32 %v970, 2
      %vm972 = vcmp.gt.s32.totalorder 0, %v971
      %v973 = vsel %vm972, 0, %v971
      %v974 = vsub.s32 32, %v973
      %v975 = vshll.u32 %v966, %v973
      %v976 = vshrl.u32 %v958, %v974
      %v977 = vor.u32 %v975, %v976
      %v978 = vsub.s32 4294967266, %v973
      %v979 = vadd.s32 %v978, 127
      %v980 = vshll.u32 %v979, 23
      %v981 = vor.u32 4788187, %v980
      %v982 = vand.u32 2147483647, %v981
      %v984 = vcvt.s32.f32 %v977
      %v985 = vmul.f32 %v984, %v982
      %v986 = vxor.u32 %v985, 2147483648
      %v987 = vsel %vm904, %v986, %v985
      %v988 = vsub.s32 4, %v964
      %v989 = vsel %vm904, %v988, %v964
      %v990 = vsel %vm903, %v783, %v987
      %v991 = vsel %vm903, 0, %v989
      %v992 = vcosq.f32.pop %v990
      %v993 = vsinq.f32.pop %v990
      %vm994 = vweird.f32 %v783
      %v995 = vadd.s32 %v991, 3
      %v996 = vand.u32 %v995, 3
      %vm997 = vcmp.lt.s32.totalorder %v996, 2
      %vm998 = vcmp.eq.s32.totalorder %v996, 0
      %v999 = vxor.u32 %v993, 2147483648
      %v1000 = vsel %vm998, %v992, %v999
      %vm1001 = vcmp.eq.s32.totalorder %v996, 2
      %v1002 = vxor.u32 %v992, 2147483648
      %v1003 = vsel %vm1001, %v1002, %v993
      %v1004 = vsel %vm997, %v1000, %v1003
      %v1005 = vsel %vm994, nan, %v1004
      %v1006 = vand.u32 2147483647, %v784
      %vm1007 = vcmp.le.f32.partialorder %v1006, 0.7853982
      %vm1008 = vcmp.lt.s32.totalorder %v784, 0
      %v1009 = vand.u32 %v784, 2139095040
      %v1010 = vshrl.u32 %v1009, 23
      %v1011 = vsub.s32 %v1010, 127
      %v1012 = vand.u32 2147483647, %v784
      %v1013 = vand.u32 %v1012, 8388607
      %v1014 = vor.u32 %v1013, 8388608
      %v1015 = vsub.s32 0, %v1014
      %v1016 = vadd.s32 %v1011, 1
      %vm1017 = vcmp.gt.s32.totalorder %v1016, 0
      %v1018 = vsel %vm1017, %v1016, 0
      %v1019 = vshrl.u32 %v1018, 5
      %v1020 = vand.u32 %v1018, 31
      %v1021 = vsub.s32 32, %v1020
      %v1022 = vshrl.u32 683565275, %v1021
      %v1023 = vshll.u32 683565275, %v1020
      %v1024 = vshrl.u32 2475754826, %v1021
      %v1025 = vor.u32 %v1023, %v1024
      %v1026 = vshll.u32 2475754826, %v1020
      %v1027 = vshrl.u32 2131351028, %v1021
      %v1028 = vor.u32 %v1026, %v1027
      %v1029 = vshll.u32 2131351028, %v1020
      %v1030 = vshrl.u32 2102212464, %v1021
      %v1031 = vor.u32 %v1029, %v1030
      %v1032 = vshll.u32 2102212464, %v1020
      %v1033 = vshrl.u32 920167782, %v1021
      %v1034 = vor.u32 %v1032, %v1033
      %v1035 = vshll.u32 920167782, %v1020
      %v1036 = vshrl.u32 1326507024, %v1021
      %v1037 = vor.u32 %v1035, %v1036
      %vm1038 = vcmp.lt.s32.totalorder %v1019, 1
      %vm1039 = vcmp.lt.s32.totalorder %v1019, 2
      %vm1040 = vcmp.lt.s32.totalorder %v1019, 3
      %vm1041 = vcmp.lt.s32.totalorder %v1019, 4
      %v1042 = vsel %vm1038, %v1022, %v1025
      %v1043 = vsel %vm1041, %v1031, 2102212464
      %v1044 = vsel %vm1040, %v1028, %v1043
      %v1045 = vsel %vm1039, %v1042, %v1044
      %v1046 = vsel %vm1038, %v1025, %v1028
      %v1047 = vsel %vm1041, %v1034, 920167782
      %v1048 = vsel %vm1040, %v1031, %v1047
      %v1049 = vsel %vm1039, %v1046, %v1048
      %v1050 = vsel %vm1038, %v1028, %v1031
      %v1051 = vsel %vm1041, %v1037, 1326507024
      %v1052 = vsel %vm1040, %v1034, %v1051
      %v1053 = vsel %vm1039, %v1050, %v1052
      %v1054 = vshll.u32 %v1014, 8
      %v1055 = vmul.u32.u64.compose %v1054, %v1053
      %v1056 = vextract.low.u32 %v1055
      %v1057 = vextract.high.u32 %v1055
      %v1058 = vmul.u32.u64.compose %v1054, %v1049
      %v1059 = vextract.low.u32 %v1058
      %v1060 = vextract.high.u32 %v1058
      %v1061 = vmul.u32 %v1054, %v1045
      %v1062 = vadd.s32 %v1057, %v1059
      %vm1063 = vc.u32 %v1057, %v1059
      %v1064 = vadd.s32 %v1060, 1
      %v1065 = vsel %vm1063, %v1064, %v1060
      %v1066 = vadd.s32 %v1061, %v1065
      %v1067 = vadd.s32 %v1066, 536870912
      %v1068 = vshrl.u32 %v1067, 30
      %v1069 = vshll.u32 %v1068, 30
      %v1070 = vsub.s32 %v1066, %v1069
      %vm1071 = vcmp.lt.s32.totalorder %v1070, 0
      %v1072 = vsub.s32 0, %v1070
      %v1073 = vsel %vm1071, %v1072, %v1070
      %v1074 = vclz %v1073
      %v1075 = vsub.s32 %v1074, 2
      %vm1076 = vcmp.gt.s32.totalorder 0, %v1075
      %v1077 = vsel %vm1076, 0, %v1075
      %v1078 = vsub.s32 32, %v1077
      %v1079 = vshll.u32 %v1070, %v1077
      %v1080 = vshrl.u32 %v1062, %v1078
      %v1081 = vor.u32 %v1079, %v1080
      %v1082 = vsub.s32 4294967266, %v1077
      %v1083 = vadd.s32 %v1082, 127
      %v1084 = vshll.u32 %v1083, 23
      %v1085 = vor.u32 4788187, %v1084
      %v1086 = vand.u32 2147483647, %v1085
      %v1088 = vcvt.s32.f32 %v1081
      %v1089 = vmul.f32 %v1088, %v1086
      %v1090 = vxor.u32 %v1089, 2147483648
      %v1091 = vsel %vm1008, %v1090, %v1089
      %v1092 = vsub.s32 4, %v1068
      %v1093 = vsel %vm1008, %v1092, %v1068
      %v1094 = vsel %vm1007, %v784, %v1091
      %v1095 = vsel %vm1007, 0, %v1093
      %v1096 = vcosq.f32.pop %v1094
      %v1097 = vsinq.f32.pop %v1094
      %vm1098 = vweird.f32 %v784
      %v1099 = vadd.s32 %v1095, 3
      %v1100 = vand.u32 %v1099, 3
      %vm1101 = vcmp.lt.s32.totalorder %v1100, 2
      %vm1102 = vcmp.eq.s32.totalorder %v1100, 0
      %v1103 = vxor.u32 %v1097, 2147483648
      %v1104 = vsel %vm1102, %v1096, %v1103
      %vm1105 = vcmp.eq.s32.totalorder %v1100, 2
      %v1106 = vxor.u32 %v1096, 2147483648
      %v1107 = vsel %vm1105, %v1106, %v1097
      %v1108 = vsel %vm1101, %v1104, %v1107
      %v1109 = vsel %vm1098, nan, %v1108
      %v1110 = vand.u32 2147483647, %v785
      %vm1111 = vcmp.le.f32.partialorder %v1110, 0.7853982
      %vm1112 = vcmp.lt.s32.totalorder %v785, 0
      %v1113 = vand.u32 %v785, 2139095040
      %v1114 = vshrl.u32 %v1113, 23
      %v1115 = vsub.s32 %v1114, 127
      %v1116 = vand.u32 2147483647, %v785
      %v1117 = vand.u32 %v1116, 8388607
      %v1118 = vor.u32 %v1117, 8388608
      %v1119 = vsub.s32 0, %v1118
      %v1120 = vadd.s32 %v1115, 1
      %vm1121 = vcmp.gt.s32.totalorder %v1120, 0
      %v1122 = vsel %vm1121, %v1120, 0
      %v1123 = vshrl.u32 %v1122, 5
      %v1124 = vand.u32 %v1122, 31
      %v1125 = vsub.s32 32, %v1124
      %v1126 = vshrl.u32 683565275, %v1125
      %v1127 = vshll.u32 683565275, %v1124
      %v1128 = vshrl.u32 2475754826, %v1125
      %v1129 = vor.u32 %v1127, %v1128
      %v1130 = vshll.u32 2475754826, %v1124
      %v1131 = vshrl.u32 2131351028, %v1125
      %v1132 = vor.u32 %v1130, %v1131
      %v1133 = vshll.u32 2131351028, %v1124
      %v1134 = vshrl.u32 2102212464, %v1125
      %v1135 = vor.u32 %v1133, %v1134
      %v1136 = vshll.u32 2102212464, %v1124
      %v1137 = vshrl.u32 920167782, %v1125
      %v1138 = vor.u32 %v1136, %v1137
      %v1139 = vshll.u32 920167782, %v1124
      %v1140 = vshrl.u32 1326507024, %v1125
      %v1141 = vor.u32 %v1139, %v1140
      %vm1142 = vcmp.lt.s32.totalorder %v1123, 1
      %vm1143 = vcmp.lt.s32.totalorder %v1123, 2
      %vm1144 = vcmp.lt.s32.totalorder %v1123, 3
      %vm1145 = vcmp.lt.s32.totalorder %v1123, 4
      %v1146 = vsel %vm1142, %v1126, %v1129
      %v1147 = vsel %vm1145, %v1135, 2102212464
      %v1148 = vsel %vm1144, %v1132, %v1147
      %v1149 = vsel %vm1143, %v1146, %v1148
      %v1150 = vsel %vm1142, %v1129, %v1132
      %v1151 = vsel %vm1145, %v1138, 920167782
      %v1152 = vsel %vm1144, %v1135, %v1151
      %v1153 = vsel %vm1143, %v1150, %v1152
      %v1154 = vsel %vm1142, %v1132, %v1135
      %v1155 = vsel %vm1145, %v1141, 1326507024
      %v1156 = vsel %vm1144, %v1138, %v1155
      %v1157 = vsel %vm1143, %v1154, %v1156
      %v1158 = vshll.u32 %v1118, 8
      %v1159 = vmul.u32.u64.compose %v1158, %v1157
      %v1160 = vextract.low.u32 %v1159
      %v1161 = vextract.high.u32 %v1159
      %v1162 = vmul.u32.u64.compose %v1158, %v1153
      %v1163 = vextract.low.u32 %v1162
      %v1164 = vextract.high.u32 %v1162
      %v1165 = vmul.u32 %v1158, %v1149
      %v1166 = vadd.s32 %v1161, %v1163
      %vm1167 = vc.u32 %v1161, %v1163
      %v1168 = vadd.s32 %v1164, 1
      %v1169 = vsel %vm1167, %v1168, %v1164
      %v1170 = vadd.s32 %v1165, %v1169
      %v1171 = vadd.s32 %v1170, 536870912
      %v1172 = vshrl.u32 %v1171, 30
      %v1173 = vshll.u32 %v1172, 30
      %v1174 = vsub.s32 %v1170, %v1173
      %vm1175 = vcmp.lt.s32.totalorder %v1174, 0
      %v1176 = vsub.s32 0, %v1174
      %v1177 = vsel %vm1175, %v1176, %v1174
      %v1178 = vclz %v1177
      %v1179 = vsub.s32 %v1178, 2
      %vm1180 = vcmp.gt.s32.totalorder 0, %v1179
      %v1181 = vsel %vm1180, 0, %v1179
      %v1182 = vsub.s32 32, %v1181
      %v1183 = vshll.u32 %v1174, %v1181
      %v1184 = vshrl.u32 %v1166, %v1182
      %v1185 = vor.u32 %v1183, %v1184
      %v1186 = vsub.s32 4294967266, %v1181
      %v1187 = vadd.s32 %v1186, 127
      %v1188 = vshll.u32 %v1187, 23
      %v1189 = vor.u32 4788187, %v1188
      %v1190 = vand.u32 2147483647, %v1189
      %v1192 = vcvt.s32.f32 %v1185
      %v1193 = vmul.f32 %v1192, %v1190
      %v1194 = vxor.u32 %v1193, 2147483648
      %v1195 = vsel %vm1112, %v1194, %v1193
      %v1196 = vsub.s32 4, %v1172
      %v1197 = vsel %vm1112, %v1196, %v1172
      %v1198 = vsel %vm1111, %v785, %v1195
      %v1199 = vsel %vm1111, 0, %v1197
      %v1200 = vcosq.f32.pop %v1198
      %v1201 = vsinq.f32.pop %v1198
      %vm1202 = vweird.f32 %v785
      %v1203 = vadd.s32 %v1199, 3
      %v1204 = vand.u32 %v1203, 3
      %vm1205 = vcmp.lt.s32.totalorder %v1204, 2
      %vm1206 = vcmp.eq.s32.totalorder %v1204, 0
      %v1207 = vxor.u32 %v1201, 2147483648
      %v1208 = vsel %vm1206, %v1200, %v1207
      %vm1209 = vcmp.eq.s32.totalorder %v1204, 2
      %v1210 = vxor.u32 %v1200, 2147483648
      %v1211 = vsel %vm1209, %v1210, %v1201
      %v1212 = vsel %vm1205, %v1208, %v1211
      %v1213 = vsel %vm1202, nan, %v1212
      %v1214 = vand.u32 2147483647, %v786
      %vm1215 = vcmp.le.f32.partialorder %v1214, 0.7853982
      %vm1216 = vcmp.lt.s32.totalorder %v786, 0
      %v1217 = vand.u32 %v786, 2139095040
      %v1218 = vshrl.u32 %v1217, 23
      %v1219 = vsub.s32 %v1218, 127
      %v1220 = vand.u32 2147483647, %v786
      %v1221 = vand.u32 %v1220, 8388607
      %v1222 = vor.u32 %v1221, 8388608
      %v1223 = vsub.s32 0, %v1222
      %v1224 = vadd.s32 %v1219, 1
      %vm1225 = vcmp.gt.s32.totalorder %v1224, 0
      %v1226 = vsel %vm1225, %v1224, 0
      %v1227 = vshrl.u32 %v1226, 5
      %v1228 = vand.u32 %v1226, 31
      %v1229 = vsub.s32 32, %v1228
      %v1230 = vshrl.u32 683565275, %v1229
      %v1231 = vshll.u32 683565275, %v1228
      %v1232 = vshrl.u32 2475754826, %v1229
      %v1233 = vor.u32 %v1231, %v1232
      %v1234 = vshll.u32 2475754826, %v1228
      %v1235 = vshrl.u32 2131351028, %v1229
      %v1236 = vor.u32 %v1234, %v1235
      %v1237 = vshll.u32 2131351028, %v1228
      %v1238 = vshrl.u32 2102212464, %v1229
      %v1239 = vor.u32 %v1237, %v1238
      %v1240 = vshll.u32 2102212464, %v1228
      %v1241 = vshrl.u32 920167782, %v1229
      %v1242 = vor.u32 %v1240, %v1241
      %v1243 = vshll.u32 920167782, %v1228
      %v1244 = vshrl.u32 1326507024, %v1229
      %v1245 = vor.u32 %v1243, %v1244
      %vm1246 = vcmp.lt.s32.totalorder %v1227, 1
      %vm1247 = vcmp.lt.s32.totalorder %v1227, 2
      %vm1248 = vcmp.lt.s32.totalorder %v1227, 3
      %vm1249 = vcmp.lt.s32.totalorder %v1227, 4
      %v1250 = vsel %vm1246, %v1230, %v1233
      %v1251 = vsel %vm1249, %v1239, 2102212464
      %v1252 = vsel %vm1248, %v1236, %v1251
      %v1253 = vsel %vm1247, %v1250, %v1252
      %v1254 = vsel %vm1246, %v1233, %v1236
      %v1255 = vsel %vm1249, %v1242, 920167782
      %v1256 = vsel %vm1248, %v1239, %v1255
      %v1257 = vsel %vm1247, %v1254, %v1256
      %v1258 = vsel %vm1246, %v1236, %v1239
      %v1259 = vsel %vm1249, %v1245, 1326507024
      %v1260 = vsel %vm1248, %v1242, %v1259
      %v1261 = vsel %vm1247, %v1258, %v1260
      %v1262 = vshll.u32 %v1222, 8
      %v1263 = vmul.u32.u64.compose %v1262, %v1261
      %v1264 = vextract.low.u32 %v1263
      %v1265 = vextract.high.u32 %v1263
      %v1266 = vmul.u32.u64.compose %v1262, %v1257
      %v1267 = vextract.low.u32 %v1266
      %v1268 = vextract.high.u32 %v1266
      %v1269 = vmul.u32 %v1262, %v1253
      %v1270 = vadd.s32 %v1265, %v1267
      %vm1271 = vc.u32 %v1265, %v1267
      %v1272 = vadd.s32 %v1268, 1
      %v1273 = vsel %vm1271, %v1272, %v1268
      %v1274 = vadd.s32 %v1269, %v1273
      %v1275 = vadd.s32 %v1274, 536870912
      %v1276 = vshrl.u32 %v1275, 30
      %v1277 = vshll.u32 %v1276, 30
      %v1278 = vsub.s32 %v1274, %v1277
      %vm1279 = vcmp.lt.s32.totalorder %v1278, 0
      %v1280 = vsub.s32 0, %v1278
      %v1281 = vsel %vm1279, %v1280, %v1278
      %v1282 = vclz %v1281
      %v1283 = vsub.s32 %v1282, 2
      %vm1284 = vcmp.gt.s32.totalorder 0, %v1283
      %v1285 = vsel %vm1284, 0, %v1283
      %v1286 = vsub.s32 32, %v1285
      %v1287 = vshll.u32 %v1278, %v1285
      %v1288 = vshrl.u32 %v1270, %v1286
      %v1289 = vor.u32 %v1287, %v1288
      %v1290 = vsub.s32 4294967266, %v1285
      %v1291 = vadd.s32 %v1290, 127
      %v1292 = vshll.u32 %v1291, 23
      %v1293 = vor.u32 4788187, %v1292
      %v1294 = vand.u32 2147483647, %v1293
      %v1296 = vcvt.s32.f32 %v1289
      %v1297 = vmul.f32 %v1296, %v1294
      %v1298 = vxor.u32 %v1297, 2147483648
      %v1299 = vsel %vm1216, %v1298, %v1297
      %v1300 = vsub.s32 4, %v1276
      %v1301 = vsel %vm1216, %v1300, %v1276
      %v1302 = vsel %vm1215, %v786, %v1299
      %v1303 = vsel %vm1215, 0, %v1301
      %v1304 = vcosq.f32.pop %v1302
      %v1305 = vsinq.f32.pop %v1302
      %vm1306 = vweird.f32 %v786
      %v1307 = vadd.s32 %v1303, 3
      %v1308 = vand.u32 %v1307, 3
      %vm1309 = vcmp.lt.s32.totalorder %v1308, 2
      %vm1310 = vcmp.eq.s32.totalorder %v1308, 0
      %v1311 = vxor.u32 %v1305, 2147483648
      %v1312 = vsel %vm1310, %v1304, %v1311
      %vm1313 = vcmp.eq.s32.totalorder %v1308, 2
      %v1314 = vxor.u32 %v1304, 2147483648
      %v1315 = vsel %vm1313, %v1314, %v1305
      %v1316 = vsel %vm1309, %v1312, %v1315
      %v1317 = vsel %vm1306, nan, %v1316
      %v1318 = vand.u32 2147483647, %v787
      %vm1319 = vcmp.le.f32.partialorder %v1318, 0.7853982
      %vm1320 = vcmp.lt.s32.totalorder %v787, 0
      %v1321 = vand.u32 %v787, 2139095040
      %v1322 = vshrl.u32 %v1321, 23
      %v1323 = vsub.s32 %v1322, 127
      %v1324 = vand.u32 2147483647, %v787
      %v1325 = vand.u32 %v1324, 8388607
      %v1326 = vor.u32 %v1325, 8388608
      %v1327 = vsub.s32 0, %v1326
      %v1328 = vadd.s32 %v1323, 1
      %vm1329 = vcmp.gt.s32.totalorder %v1328, 0
      %v1330 = vsel %vm1329, %v1328, 0
      %v1331 = vshrl.u32 %v1330, 5
      %v1332 = vand.u32 %v1330, 31
      %v1333 = vsub.s32 32, %v1332
      %v1334 = vshrl.u32 683565275, %v1333
      %v1335 = vshll.u32 683565275, %v1332
      %v1336 = vshrl.u32 2475754826, %v1333
      %v1337 = vor.u32 %v1335, %v1336
      %v1338 = vshll.u32 2475754826, %v1332
      %v1339 = vshrl.u32 2131351028, %v1333
      %v1340 = vor.u32 %v1338, %v1339
      %v1341 = vshll.u32 2131351028, %v1332
      %v1342 = vshrl.u32 2102212464, %v1333
      %v1343 = vor.u32 %v1341, %v1342
      %v1344 = vshll.u32 2102212464, %v1332
      %v1345 = vshrl.u32 920167782, %v1333
      %v1346 = vor.u32 %v1344, %v1345
      %v1347 = vshll.u32 920167782, %v1332
      %v1348 = vshrl.u32 1326507024, %v1333
      %v1349 = vor.u32 %v1347, %v1348
      %vm1350 = vcmp.lt.s32.totalorder %v1331, 1
      %vm1351 = vcmp.lt.s32.totalorder %v1331, 2
      %vm1352 = vcmp.lt.s32.totalorder %v1331, 3
      %vm1353 = vcmp.lt.s32.totalorder %v1331, 4
      %v1354 = vsel %vm1350, %v1334, %v1337
      %v1355 = vsel %vm1353, %v1343, 2102212464
      %v1356 = vsel %vm1352, %v1340, %v1355
      %v1357 = vsel %vm1351, %v1354, %v1356
      %v1358 = vsel %vm1350, %v1337, %v1340
      %v1359 = vsel %vm1353, %v1346, 920167782
      %v1360 = vsel %vm1352, %v1343, %v1359
      %v1361 = vsel %vm1351, %v1358, %v1360
      %v1362 = vsel %vm1350, %v1340, %v1343
      %v1363 = vsel %vm1353, %v1349, 1326507024
      %v1364 = vsel %vm1352, %v1346, %v1363
      %v1365 = vsel %vm1351, %v1362, %v1364
      %v1366 = vshll.u32 %v1326, 8
      %v1367 = vmul.u32.u64.compose %v1366, %v1365
      %v1368 = vextract.low.u32 %v1367
      %v1369 = vextract.high.u32 %v1367
      %v1370 = vmul.u32.u64.compose %v1366, %v1361
      %v1371 = vextract.low.u32 %v1370
      %v1372 = vextract.high.u32 %v1370
      %v1373 = vmul.u32 %v1366, %v1357
      %v1374 = vadd.s32 %v1369, %v1371
      %vm1375 = vc.u32 %v1369, %v1371
      %v1376 = vadd.s32 %v1372, 1
      %v1377 = vsel %vm1375, %v1376, %v1372
      %v1378 = vadd.s32 %v1373, %v1377
      %v1379 = vadd.s32 %v1378, 536870912
      %v1380 = vshrl.u32 %v1379, 30
      %v1381 = vshll.u32 %v1380, 30
      %v1382 = vsub.s32 %v1378, %v1381
      %vm1383 = vcmp.lt.s32.totalorder %v1382, 0
      %v1384 = vsub.s32 0, %v1382
      %v1385 = vsel %vm1383, %v1384, %v1382
      %v1386 = vclz %v1385
      %v1387 = vsub.s32 %v1386, 2
      %vm1388 = vcmp.gt.s32.totalorder 0, %v1387
      %v1389 = vsel %vm1388, 0, %v1387
      %v1390 = vsub.s32 32, %v1389
      %v1391 = vshll.u32 %v1382, %v1389
      %v1392 = vshrl.u32 %v1374, %v1390
      %v1393 = vor.u32 %v1391, %v1392
      %v1394 = vsub.s32 4294967266, %v1389
      %v1395 = vadd.s32 %v1394, 127
      %v1396 = vshll.u32 %v1395, 23
      %v1397 = vor.u32 4788187, %v1396
      %v1398 = vand.u32 2147483647, %v1397
      %v1400 = vcvt.s32.f32 %v1393
      %v1401 = vmul.f32 %v1400, %v1398
      %v1402 = vxor.u32 %v1401, 2147483648
      %v1403 = vsel %vm1320, %v1402, %v1401
      %v1404 = vsub.s32 4, %v1380
      %v1405 = vsel %vm1320, %v1404, %v1380
      %v1406 = vsel %vm1319, %v787, %v1403
      %v1407 = vsel %vm1319, 0, %v1405
      %v1408 = vcosq.f32.pop %v1406
      %v1409 = vsinq.f32.pop %v1406
      %vm1410 = vweird.f32 %v787
      %v1411 = vadd.s32 %v1407, 3
      %v1412 = vand.u32 %v1411, 3
      %vm1413 = vcmp.lt.s32.totalorder %v1412, 2
      %vm1414 = vcmp.eq.s32.totalorder %v1412, 0
      %v1415 = vxor.u32 %v1409, 2147483648
      %v1416 = vsel %vm1414, %v1408, %v1415
      %vm1417 = vcmp.eq.s32.totalorder %v1412, 2
      %v1418 = vxor.u32 %v1408, 2147483648
      %v1419 = vsel %vm1417, %v1418, %v1409
      %v1420 = vsel %vm1413, %v1416, %v1419
      %v1421 = vsel %vm1410, nan, %v1420
      %v1422 = vand.u32 2147483647, %v788
      %vm1423 = vcmp.le.f32.partialorder %v1422, 0.7853982
      %vm1424 = vcmp.lt.s32.totalorder %v788, 0
      %v1425 = vand.u32 %v788, 2139095040
      %v1426 = vshrl.u32 %v1425, 23
      %v1427 = vsub.s32 %v1426, 127
      %v1428 = vand.u32 2147483647, %v788
      %v1429 = vand.u32 %v1428, 8388607
      %v1430 = vor.u32 %v1429, 8388608
      %v1431 = vsub.s32 0, %v1430
      %v1432 = vadd.s32 %v1427, 1
      %vm1433 = vcmp.gt.s32.totalorder %v1432, 0
      %v1434 = vsel %vm1433, %v1432, 0
      %v1435 = vshrl.u32 %v1434, 5
      %v1436 = vand.u32 %v1434, 31
      %v1437 = vsub.s32 32, %v1436
      %v1438 = vshrl.u32 683565275, %v1437
      %v1439 = vshll.u32 683565275, %v1436
      %v1440 = vshrl.u32 2475754826, %v1437
      %v1441 = vor.u32 %v1439, %v1440
      %v1442 = vshll.u32 2475754826, %v1436
      %v1443 = vshrl.u32 2131351028, %v1437
      %v1444 = vor.u32 %v1442, %v1443
      %v1445 = vshll.u32 2131351028, %v1436
      %v1446 = vshrl.u32 2102212464, %v1437
      %v1447 = vor.u32 %v1445, %v1446
      %v1448 = vshll.u32 2102212464, %v1436
      %v1449 = vshrl.u32 920167782, %v1437
      %v1450 = vor.u32 %v1448, %v1449
      %v1451 = vshll.u32 920167782, %v1436
      %v1452 = vshrl.u32 1326507024, %v1437
      %v1453 = vor.u32 %v1451, %v1452
      %vm1454 = vcmp.lt.s32.totalorder %v1435, 1
      %vm1455 = vcmp.lt.s32.totalorder %v1435, 2
      %vm1456 = vcmp.lt.s32.totalorder %v1435, 3
      %vm1457 = vcmp.lt.s32.totalorder %v1435, 4
      %v1458 = vsel %vm1454, %v1438, %v1441
      %v1459 = vsel %vm1457, %v1447, 2102212464
      %v1460 = vsel %vm1456, %v1444, %v1459
      %v1461 = vsel %vm1455, %v1458, %v1460
      %v1462 = vsel %vm1454, %v1441, %v1444
      %v1463 = vsel %vm1457, %v1450, 920167782
      %v1464 = vsel %vm1456, %v1447, %v1463
      %v1465 = vsel %vm1455, %v1462, %v1464
      %v1466 = vsel %vm1454, %v1444, %v1447
      %v1467 = vsel %vm1457, %v1453, 1326507024
      %v1468 = vsel %vm1456, %v1450, %v1467
      %v1469 = vsel %vm1455, %v1466, %v1468
      %v1470 = vshll.u32 %v1430, 8
      %v1471 = vmul.u32.u64.compose %v1470, %v1469
      %v1472 = vextract.low.u32 %v1471
      %v1473 = vextract.high.u32 %v1471
      %v1474 = vmul.u32.u64.compose %v1470, %v1465
      %v1475 = vextract.low.u32 %v1474
      %v1476 = vextract.high.u32 %v1474
      %v1477 = vmul.u32 %v1470, %v1461
      %v1478 = vadd.s32 %v1473, %v1475
      %vm1479 = vc.u32 %v1473, %v1475
      %v1480 = vadd.s32 %v1476, 1
      %v1481 = vsel %vm1479, %v1480, %v1476
      %v1482 = vadd.s32 %v1477, %v1481
      %v1483 = vadd.s32 %v1482, 536870912
      %v1484 = vshrl.u32 %v1483, 30
      %v1485 = vshll.u32 %v1484, 30
      %v1486 = vsub.s32 %v1482, %v1485
      %vm1487 = vcmp.lt.s32.totalorder %v1486, 0
      %v1488 = vsub.s32 0, %v1486
      %v1489 = vsel %vm1487, %v1488, %v1486
      %v1490 = vclz %v1489
      %v1491 = vsub.s32 %v1490, 2
      %vm1492 = vcmp.gt.s32.totalorder 0, %v1491
      %v1493 = vsel %vm1492, 0, %v1491
      %v1494 = vsub.s32 32, %v1493
      %v1495 = vshll.u32 %v1486, %v1493
      %v1496 = vshrl.u32 %v1478, %v1494
      %v1497 = vor.u32 %v1495, %v1496
      %v1498 = vsub.s32 4294967266, %v1493
      %v1499 = vadd.s32 %v1498, 127
      %v1500 = vshll.u32 %v1499, 23
      %v1501 = vor.u32 4788187, %v1500
      %v1502 = vand.u32 2147483647, %v1501
      %v1504 = vcvt.s32.f32 %v1497
      %v1505 = vmul.f32 %v1504, %v1502
      %v1506 = vxor.u32 %v1505, 2147483648
      %v1507 = vsel %vm1424, %v1506, %v1505
      %v1508 = vsub.s32 4, %v1484
      %v1509 = vsel %vm1424, %v1508, %v1484
      %v1510 = vsel %vm1423, %v788, %v1507
      %v1511 = vsel %vm1423, 0, %v1509
      %v1512 = vcosq.f32.pop %v1510
      %v1513 = vsinq.f32.pop %v1510
      %vm1514 = vweird.f32 %v788
      %v1515 = vadd.s32 %v1511, 3
      %v1516 = vand.u32 %v1515, 3
      %vm1517 = vcmp.lt.s32.totalorder %v1516, 2
      %vm1518 = vcmp.eq.s32.totalorder %v1516, 0
      %v1519 = vxor.u32 %v1513, 2147483648
      %v1520 = vsel %vm1518, %v1512, %v1519
      %vm1521 = vcmp.eq.s32.totalorder %v1516, 2
      %v1522 = vxor.u32 %v1512, 2147483648
      %v1523 = vsel %vm1521, %v1522, %v1513
      %v1524 = vsel %vm1517, %v1520, %v1523
      %v1525 = vsel %vm1514, nan, %v1524
      %v1526 = vand.u32 2147483647, %v789
      %vm1527 = vcmp.le.f32.partialorder %v1526, 0.7853982
      %vm1528 = vcmp.lt.s32.totalorder %v789, 0
      %v1529 = vand.u32 %v789, 2139095040
      %v1530 = vshrl.u32 %v1529, 23
      %v1531 = vsub.s32 %v1530, 127
      %v1532 = vand.u32 2147483647, %v789
      %v1533 = vand.u32 %v1532, 8388607
      %v1534 = vor.u32 %v1533, 8388608
      %v1535 = vsub.s32 0, %v1534
      %v1536 = vadd.s32 %v1531, 1
      %vm1537 = vcmp.gt.s32.totalorder %v1536, 0
      %v1538 = vsel %vm1537, %v1536, 0
      %v1539 = vshrl.u32 %v1538, 5
      %v1540 = vand.u32 %v1538, 31
      %v1541 = vsub.s32 32, %v1540
      %v1542 = vshrl.u32 683565275, %v1541
      %v1543 = vshll.u32 683565275, %v1540
      %v1544 = vshrl.u32 2475754826, %v1541
      %v1545 = vor.u32 %v1543, %v1544
      %v1546 = vshll.u32 2475754826, %v1540
      %v1547 = vshrl.u32 2131351028, %v1541
      %v1548 = vor.u32 %v1546, %v1547
      %v1549 = vshll.u32 2131351028, %v1540
      %v1550 = vshrl.u32 2102212464, %v1541
      %v1551 = vor.u32 %v1549, %v1550
      %v1552 = vshll.u32 2102212464, %v1540
      %v1553 = vshrl.u32 920167782, %v1541
      %v1554 = vor.u32 %v1552, %v1553
      %v1555 = vshll.u32 920167782, %v1540
      %v1556 = vshrl.u32 1326507024, %v1541
      %v1557 = vor.u32 %v1555, %v1556
      %vm1558 = vcmp.lt.s32.totalorder %v1539, 1
      %vm1559 = vcmp.lt.s32.totalorder %v1539, 2
      %vm1560 = vcmp.lt.s32.totalorder %v1539, 3
      %vm1561 = vcmp.lt.s32.totalorder %v1539, 4
      %v1562 = vsel %vm1558, %v1542, %v1545
      %v1563 = vsel %vm1561, %v1551, 2102212464
      %v1564 = vsel %vm1560, %v1548, %v1563
      %v1565 = vsel %vm1559, %v1562, %v1564
      %v1566 = vsel %vm1558, %v1545, %v1548
      %v1567 = vsel %vm1561, %v1554, 920167782
      %v1568 = vsel %vm1560, %v1551, %v1567
      %v1569 = vsel %vm1559, %v1566, %v1568
      %v1570 = vsel %vm1558, %v1548, %v1551
      %v1571 = vsel %vm1561, %v1557, 1326507024
      %v1572 = vsel %vm1560, %v1554, %v1571
      %v1573 = vsel %vm1559, %v1570, %v1572
      %v1574 = vshll.u32 %v1534, 8
      %v1575 = vmul.u32.u64.compose %v1574, %v1573
      %v1576 = vextract.low.u32 %v1575
      %v1577 = vextract.high.u32 %v1575
      %v1578 = vmul.u32.u64.compose %v1574, %v1569
      %v1579 = vextract.low.u32 %v1578
      %v1580 = vextract.high.u32 %v1578
      %v1581 = vmul.u32 %v1574, %v1565
      %v1582 = vadd.s32 %v1577, %v1579
      %vm1583 = vc.u32 %v1577, %v1579
      %v1584 = vadd.s32 %v1580, 1
      %v1585 = vsel %vm1583, %v1584, %v1580
      %v1586 = vadd.s32 %v1581, %v1585
      %v1587 = vadd.s32 %v1586, 536870912
      %v1588 = vshrl.u32 %v1587, 30
      %v1589 = vshll.u32 %v1588, 30
      %v1590 = vsub.s32 %v1586, %v1589
      %vm1591 = vcmp.lt.s32.totalorder %v1590, 0
      %v1592 = vsub.s32 0, %v1590
      %v1593 = vsel %vm1591, %v1592, %v1590
      %v1594 = vclz %v1593
      %v1595 = vsub.s32 %v1594, 2
      %vm1596 = vcmp.gt.s32.totalorder 0, %v1595
      %v1597 = vsel %vm1596, 0, %v1595
      %v1598 = vsub.s32 32, %v1597
      %v1599 = vshll.u32 %v1590, %v1597
      %v1600 = vshrl.u32 %v1582, %v1598
      %v1601 = vor.u32 %v1599, %v1600
      %v1602 = vsub.s32 4294967266, %v1597
      %v1603 = vadd.s32 %v1602, 127
      %v1604 = vshll.u32 %v1603, 23
      %v1605 = vor.u32 4788187, %v1604
      %v1606 = vand.u32 2147483647, %v1605
      %v1608 = vcvt.s32.f32 %v1601
      %v1609 = vmul.f32 %v1608, %v1606
      %v1610 = vxor.u32 %v1609, 2147483648
      %v1611 = vsel %vm1528, %v1610, %v1609
      %v1612 = vsub.s32 4, %v1588
      %v1613 = vsel %vm1528, %v1612, %v1588
      %v1614 = vsel %vm1527, %v789, %v1611
      %v1615 = vsel %vm1527, 0, %v1613
      %v1616 = vcosq.f32.pop %v1614
      %v1617 = vsinq.f32.pop %v1614
      %vm1618 = vweird.f32 %v789
      %v1619 = vadd.s32 %v1615, 3
      %v1620 = vand.u32 %v1619, 3
      %vm1621 = vcmp.lt.s32.totalorder %v1620, 2
      %vm1622 = vcmp.eq.s32.totalorder %v1620, 0
      %v1623 = vxor.u32 %v1617, 2147483648
      %v1624 = vsel %vm1622, %v1616, %v1623
      %vm1625 = vcmp.eq.s32.totalorder %v1620, 2
      %v1626 = vxor.u32 %v1616, 2147483648
      %v1627 = vsel %vm1625, %v1626, %v1617
      %v1628 = vsel %vm1621, %v1624, %v1627
      %v1629 = vsel %vm1618, nan, %v1628
      %v1630 = vand.u32 2147483647, %v790
      %vm1631 = vcmp.le.f32.partialorder %v1630, 0.7853982
      %vm1632 = vcmp.lt.s32.totalorder %v790, 0
      %v1633 = vand.u32 %v790, 2139095040
      %v1634 = vshrl.u32 %v1633, 23
      %v1635 = vsub.s32 %v1634, 127
      %v1636 = vand.u32 2147483647, %v790
      %v1637 = vand.u32 %v1636, 8388607
      %v1638 = vor.u32 %v1637, 8388608
      %v1639 = vsub.s32 0, %v1638
      %v1640 = vadd.s32 %v1635, 1
      %vm1641 = vcmp.gt.s32.totalorder %v1640, 0
      %v1642 = vsel %vm1641, %v1640, 0
      %v1643 = vshrl.u32 %v1642, 5
      %v1644 = vand.u32 %v1642, 31
      %v1645 = vsub.s32 32, %v1644
      %v1646 = vshrl.u32 683565275, %v1645
      %v1647 = vshll.u32 683565275, %v1644
      %v1648 = vshrl.u32 2475754826, %v1645
      %v1649 = vor.u32 %v1647, %v1648
      %v1650 = vshll.u32 2475754826, %v1644
      %v1651 = vshrl.u32 2131351028, %v1645
      %v1652 = vor.u32 %v1650, %v1651
      %v1653 = vshll.u32 2131351028, %v1644
      %v1654 = vshrl.u32 2102212464, %v1645
      %v1655 = vor.u32 %v1653, %v1654
      %v1656 = vshll.u32 2102212464, %v1644
      %v1657 = vshrl.u32 920167782, %v1645
      %v1658 = vor.u32 %v1656, %v1657
      %v1659 = vshll.u32 920167782, %v1644
      %v1660 = vshrl.u32 1326507024, %v1645
      %v1661 = vor.u32 %v1659, %v1660
      %vm1662 = vcmp.lt.s32.totalorder %v1643, 1
      %vm1663 = vcmp.lt.s32.totalorder %v1643, 2
      %vm1664 = vcmp.lt.s32.totalorder %v1643, 3
      %vm1665 = vcmp.lt.s32.totalorder %v1643, 4
      %v1666 = vsel %vm1662, %v1646, %v1649
      %v1667 = vsel %vm1665, %v1655, 2102212464
      %v1668 = vsel %vm1664, %v1652, %v1667
      %v1669 = vsel %vm1663, %v1666, %v1668
      %v1670 = vsel %vm1662, %v1649, %v1652
      %v1671 = vsel %vm1665, %v1658, 920167782
      %v1672 = vsel %vm1664, %v1655, %v1671
      %v1673 = vsel %vm1663, %v1670, %v1672
      %v1674 = vsel %vm1662, %v1652, %v1655
      %v1675 = vsel %vm1665, %v1661, 1326507024
      %v1676 = vsel %vm1664, %v1658, %v1675
      %v1677 = vsel %vm1663, %v1674, %v1676
      %v1678 = vshll.u32 %v1638, 8
      %v1679 = vmul.u32.u64.compose %v1678, %v1677
      %v1680 = vextract.low.u32 %v1679
      %v1681 = vextract.high.u32 %v1679
      %v1682 = vmul.u32.u64.compose %v1678, %v1673
      %v1683 = vextract.low.u32 %v1682
      %v1684 = vextract.high.u32 %v1682
      %v1685 = vmul.u32 %v1678, %v1669
      %v1686 = vadd.s32 %v1681, %v1683
      %vm1687 = vc.u32 %v1681, %v1683
      %v1688 = vadd.s32 %v1684, 1
      %v1689 = vsel %vm1687, %v1688, %v1684
      %v1690 = vadd.s32 %v1685, %v1689
      %v1691 = vadd.s32 %v1690, 536870912
      %v1692 = vshrl.u32 %v1691, 30
      %v1693 = vshll.u32 %v1692, 30
      %v1694 = vsub.s32 %v1690, %v1693
      %vm1695 = vcmp.lt.s32.totalorder %v1694, 0
      %v1696 = vsub.s32 0, %v1694
      %v1697 = vsel %vm1695, %v1696, %v1694
      %v1698 = vclz %v1697
      %v1699 = vsub.s32 %v1698, 2
      %vm1700 = vcmp.gt.s32.totalorder 0, %v1699
      %v1701 = vsel %vm1700, 0, %v1699
      %v1702 = vsub.s32 32, %v1701
      %v1703 = vshll.u32 %v1694, %v1701
      %v1704 = vshrl.u32 %v1686, %v1702
      %v1705 = vor.u32 %v1703, %v1704
      %v1706 = vsub.s32 4294967266, %v1701
      %v1707 = vadd.s32 %v1706, 127
      %v1708 = vshll.u32 %v1707, 23
      %v1709 = vor.u32 4788187, %v1708
      %v1710 = vand.u32 2147483647, %v1709
      %v1712 = vcvt.s32.f32 %v1705
      %v1713 = vmul.f32 %v1712, %v1710
      %v1714 = vxor.u32 %v1713, 2147483648
      %v1715 = vsel %vm1632, %v1714, %v1713
      %v1716 = vsub.s32 4, %v1692
      %v1717 = vsel %vm1632, %v1716, %v1692
      %v1718 = vsel %vm1631, %v790, %v1715
      %v1719 = vsel %vm1631, 0, %v1717
      %v1720 = vcosq.f32.pop %v1718
      %v1721 = vsinq.f32.pop %v1718
      %vm1722 = vweird.f32 %v790
      %v1723 = vadd.s32 %v1719, 3
      %v1724 = vand.u32 %v1723, 3
      %vm1725 = vcmp.lt.s32.totalorder %v1724, 2
      %vm1726 = vcmp.eq.s32.totalorder %v1724, 0
      %v1727 = vxor.u32 %v1721, 2147483648
      %v1728 = vsel %vm1726, %v1720, %v1727
      %vm1729 = vcmp.eq.s32.totalorder %v1724, 2
      %v1730 = vxor.u32 %v1720, 2147483648
      %v1731 = vsel %vm1729, %v1730, %v1721
      %v1732 = vsel %vm1725, %v1728, %v1731
      %v1733 = vsel %vm1722, nan, %v1732
      %v1734 = vand.u32 2147483647, %v791
      %vm1735 = vcmp.le.f32.partialorder %v1734, 0.7853982
      %vm1736 = vcmp.lt.s32.totalorder %v791, 0
      %v1737 = vand.u32 %v791, 2139095040
      %v1738 = vshrl.u32 %v1737, 23
      %v1739 = vsub.s32 %v1738, 127
      %v1740 = vand.u32 2147483647, %v791
      %v1741 = vand.u32 %v1740, 8388607
      %v1742 = vor.u32 %v1741, 8388608
      %v1743 = vsub.s32 0, %v1742
      %v1744 = vadd.s32 %v1739, 1
      %vm1745 = vcmp.gt.s32.totalorder %v1744, 0
      %v1746 = vsel %vm1745, %v1744, 0
      %v1747 = vshrl.u32 %v1746, 5
      %v1748 = vand.u32 %v1746, 31
      %v1749 = vsub.s32 32, %v1748
      %v1750 = vshrl.u32 683565275, %v1749
      %v1751 = vshll.u32 683565275, %v1748
      %v1752 = vshrl.u32 2475754826, %v1749
      %v1753 = vor.u32 %v1751, %v1752
      %v1754 = vshll.u32 2475754826, %v1748
      %v1755 = vshrl.u32 2131351028, %v1749
      %v1756 = vor.u32 %v1754, %v1755
      %v1757 = vshll.u32 2131351028, %v1748
      %v1758 = vshrl.u32 2102212464, %v1749
      %v1759 = vor.u32 %v1757, %v1758
      %v1760 = vshll.u32 2102212464, %v1748
      %v1761 = vshrl.u32 920167782, %v1749
      %v1762 = vor.u32 %v1760, %v1761
      %v1763 = vshll.u32 920167782, %v1748
      %v1764 = vshrl.u32 1326507024, %v1749
      %v1765 = vor.u32 %v1763, %v1764
      %vm1766 = vcmp.lt.s32.totalorder %v1747, 1
      %vm1767 = vcmp.lt.s32.totalorder %v1747, 2
      %vm1768 = vcmp.lt.s32.totalorder %v1747, 3
      %vm1769 = vcmp.lt.s32.totalorder %v1747, 4
      %v1770 = vsel %vm1766, %v1750, %v1753
      %v1771 = vsel %vm1769, %v1759, 2102212464
      %v1772 = vsel %vm1768, %v1756, %v1771
      %v1773 = vsel %vm1767, %v1770, %v1772
      %v1774 = vsel %vm1766, %v1753, %v1756
      %v1775 = vsel %vm1769, %v1762, 920167782
      %v1776 = vsel %vm1768, %v1759, %v1775
      %v1777 = vsel %vm1767, %v1774, %v1776
      %v1778 = vsel %vm1766, %v1756, %v1759
      %v1779 = vsel %vm1769, %v1765, 1326507024
      %v1780 = vsel %vm1768, %v1762, %v1779
      %v1781 = vsel %vm1767, %v1778, %v1780
      %v1782 = vshll.u32 %v1742, 8
      %v1783 = vmul.u32.u64.compose %v1782, %v1781
      %v1784 = vextract.low.u32 %v1783
      %v1785 = vextract.high.u32 %v1783
      %v1786 = vmul.u32.u64.compose %v1782, %v1777
      %v1787 = vextract.low.u32 %v1786
      %v1788 = vextract.high.u32 %v1786
      %v1789 = vmul.u32 %v1782, %v1773
      %v1790 = vadd.s32 %v1785, %v1787
      %vm1791 = vc.u32 %v1785, %v1787
      %v1792 = vadd.s32 %v1788, 1
      %v1793 = vsel %vm1791, %v1792, %v1788
      %v1794 = vadd.s32 %v1789, %v1793
      %v1795 = vadd.s32 %v1794, 536870912
      %v1796 = vshrl.u32 %v1795, 30
      %v1797 = vshll.u32 %v1796, 30
      %v1798 = vsub.s32 %v1794, %v1797
      %vm1799 = vcmp.lt.s32.totalorder %v1798, 0
      %v1800 = vsub.s32 0, %v1798
      %v1801 = vsel %vm1799, %v1800, %v1798
      %v1802 = vclz %v1801
      %v1803 = vsub.s32 %v1802, 2
      %vm1804 = vcmp.gt.s32.totalorder 0, %v1803
      %v1805 = vsel %vm1804, 0, %v1803
      %v1806 = vsub.s32 32, %v1805
      %v1807 = vshll.u32 %v1798, %v1805
      %v1808 = vshrl.u32 %v1790, %v1806
      %v1809 = vor.u32 %v1807, %v1808
      %v1810 = vsub.s32 4294967266, %v1805
      %v1811 = vadd.s32 %v1810, 127
      %v1812 = vshll.u32 %v1811, 23
      %v1813 = vor.u32 4788187, %v1812
      %v1814 = vand.u32 2147483647, %v1813
      %v1816 = vcvt.s32.f32 %v1809
      %v1817 = vmul.f32 %v1816, %v1814
      %v1818 = vxor.u32 %v1817, 2147483648
      %v1819 = vsel %vm1736, %v1818, %v1817
      %v1820 = vsub.s32 4, %v1796
      %v1821 = vsel %vm1736, %v1820, %v1796
      %v1822 = vsel %vm1735, %v791, %v1819
      %v1823 = vsel %vm1735, 0, %v1821
      %v1824 = vcosq.f32.pop %v1822
      %v1825 = vsinq.f32.pop %v1822
      %vm1826 = vweird.f32 %v791
      %v1827 = vadd.s32 %v1823, 3
      %v1828 = vand.u32 %v1827, 3
      %vm1829 = vcmp.lt.s32.totalorder %v1828, 2
      %vm1830 = vcmp.eq.s32.totalorder %v1828, 0
      %v1831 = vxor.u32 %v1825, 2147483648
      %v1832 = vsel %vm1830, %v1824, %v1831
      %vm1833 = vcmp.eq.s32.totalorder %v1828, 2
      %v1834 = vxor.u32 %v1824, 2147483648
      %v1835 = vsel %vm1833, %v1834, %v1825
      %v1836 = vsel %vm1829, %v1832, %v1835
      %v1837 = vsel %vm1826, nan, %v1836
      %v1838 = vand.u32 2147483647, %v792
      %vm1839 = vcmp.le.f32.partialorder %v1838, 0.7853982
      %vm1840 = vcmp.lt.s32.totalorder %v792, 0
      %v1841 = vand.u32 %v792, 2139095040
      %v1842 = vshrl.u32 %v1841, 23
      %v1843 = vsub.s32 %v1842, 127
      %v1844 = vand.u32 2147483647, %v792
      %v1845 = vand.u32 %v1844, 8388607
      %v1846 = vor.u32 %v1845, 8388608
      %v1847 = vsub.s32 0, %v1846
      %v1848 = vadd.s32 %v1843, 1
      %vm1849 = vcmp.gt.s32.totalorder %v1848, 0
      %v1850 = vsel %vm1849, %v1848, 0
      %v1851 = vshrl.u32 %v1850, 5
      %v1852 = vand.u32 %v1850, 31
      %v1853 = vsub.s32 32, %v1852
      %v1854 = vshrl.u32 683565275, %v1853
      %v1855 = vshll.u32 683565275, %v1852
      %v1856 = vshrl.u32 2475754826, %v1853
      %v1857 = vor.u32 %v1855, %v1856
      %v1858 = vshll.u32 2475754826, %v1852
      %v1859 = vshrl.u32 2131351028, %v1853
      %v1860 = vor.u32 %v1858, %v1859
      %v1861 = vshll.u32 2131351028, %v1852
      %v1862 = vshrl.u32 2102212464, %v1853
      %v1863 = vor.u32 %v1861, %v1862
      %v1864 = vshll.u32 2102212464, %v1852
      %v1865 = vshrl.u32 920167782, %v1853
      %v1866 = vor.u32 %v1864, %v1865
      %v1867 = vshll.u32 920167782, %v1852
      %v1868 = vshrl.u32 1326507024, %v1853
      %v1869 = vor.u32 %v1867, %v1868
      %vm1870 = vcmp.lt.s32.totalorder %v1851, 1
      %vm1871 = vcmp.lt.s32.totalorder %v1851, 2
      %vm1872 = vcmp.lt.s32.totalorder %v1851, 3
      %vm1873 = vcmp.lt.s32.totalorder %v1851, 4
      %v1874 = vsel %vm1870, %v1854, %v1857
      %v1875 = vsel %vm1873, %v1863, 2102212464
      %v1876 = vsel %vm1872, %v1860, %v1875
      %v1877 = vsel %vm1871, %v1874, %v1876
      %v1878 = vsel %vm1870, %v1857, %v1860
      %v1879 = vsel %vm1873, %v1866, 920167782
      %v1880 = vsel %vm1872, %v1863, %v1879
      %v1881 = vsel %vm1871, %v1878, %v1880
      %v1882 = vsel %vm1870, %v1860, %v1863
      %v1883 = vsel %vm1873, %v1869, 1326507024
      %v1884 = vsel %vm1872, %v1866, %v1883
      %v1885 = vsel %vm1871, %v1882, %v1884
      %v1886 = vshll.u32 %v1846, 8
      %v1887 = vmul.u32.u64.compose %v1886, %v1885
      %v1888 = vextract.low.u32 %v1887
      %v1889 = vextract.high.u32 %v1887
      %v1890 = vmul.u32.u64.compose %v1886, %v1881
      %v1891 = vextract.low.u32 %v1890
      %v1892 = vextract.high.u32 %v1890
      %v1893 = vmul.u32 %v1886, %v1877
      %v1894 = vadd.s32 %v1889, %v1891
      %vm1895 = vc.u32 %v1889, %v1891
      %v1896 = vadd.s32 %v1892, 1
      %v1897 = vsel %vm1895, %v1896, %v1892
      %v1898 = vadd.s32 %v1893, %v1897
      %v1899 = vadd.s32 %v1898, 536870912
      %v1900 = vshrl.u32 %v1899, 30
      %v1901 = vshll.u32 %v1900, 30
      %v1902 = vsub.s32 %v1898, %v1901
      %vm1903 = vcmp.lt.s32.totalorder %v1902, 0
      %v1904 = vsub.s32 0, %v1902
      %v1905 = vsel %vm1903, %v1904, %v1902
      %v1906 = vclz %v1905
      %v1907 = vsub.s32 %v1906, 2
      %vm1908 = vcmp.gt.s32.totalorder 0, %v1907
      %v1909 = vsel %vm1908, 0, %v1907
      %v1910 = vsub.s32 32, %v1909
      %v1911 = vshll.u32 %v1902, %v1909
      %v1912 = vshrl.u32 %v1894, %v1910
      %v1913 = vor.u32 %v1911, %v1912
      %v1914 = vsub.s32 4294967266, %v1909
      %v1915 = vadd.s32 %v1914, 127
      %v1916 = vshll.u32 %v1915, 23
      %v1917 = vor.u32 4788187, %v1916
      %v1918 = vand.u32 2147483647, %v1917
      %v1920 = vcvt.s32.f32 %v1913
      %v1921 = vmul.f32 %v1920, %v1918
      %v1922 = vxor.u32 %v1921, 2147483648
      %v1923 = vsel %vm1840, %v1922, %v1921
      %v1924 = vsub.s32 4, %v1900
      %v1925 = vsel %vm1840, %v1924, %v1900
      %v1926 = vsel %vm1839, %v792, %v1923
      %v1927 = vsel %vm1839, 0, %v1925
      %v1928 = vcosq.f32.pop %v1926
      %v1929 = vsinq.f32.pop %v1926
      %vm1930 = vweird.f32 %v792
      %v1931 = vadd.s32 %v1927, 3
      %v1932 = vand.u32 %v1931, 3
      %vm1933 = vcmp.lt.s32.totalorder %v1932, 2
      %vm1934 = vcmp.eq.s32.totalorder %v1932, 0
      %v1935 = vxor.u32 %v1929, 2147483648
      %v1936 = vsel %vm1934, %v1928, %v1935
      %vm1937 = vcmp.eq.s32.totalorder %v1932, 2
      %v1938 = vxor.u32 %v1928, 2147483648
      %v1939 = vsel %vm1937, %v1938, %v1929
      %v1940 = vsel %vm1933, %v1936, %v1939
      %v1941 = vsel %vm1930, nan, %v1940
      %v1942 = vand.u32 2147483647, %v793
      %vm1943 = vcmp.le.f32.partialorder %v1942, 0.7853982
      %vm1944 = vcmp.lt.s32.totalorder %v793, 0
      %v1945 = vand.u32 %v793, 2139095040
      %v1946 = vshrl.u32 %v1945, 23
      %v1947 = vsub.s32 %v1946, 127
      %v1948 = vand.u32 2147483647, %v793
      %v1949 = vand.u32 %v1948, 8388607
      %v1950 = vor.u32 %v1949, 8388608
      %v1951 = vsub.s32 0, %v1950
      %v1952 = vadd.s32 %v1947, 1
      %vm1953 = vcmp.gt.s32.totalorder %v1952, 0
      %v1954 = vsel %vm1953, %v1952, 0
      %v1955 = vshrl.u32 %v1954, 5
      %v1956 = vand.u32 %v1954, 31
      %v1957 = vsub.s32 32, %v1956
      %v1958 = vshrl.u32 683565275, %v1957
      %v1959 = vshll.u32 683565275, %v1956
      %v1960 = vshrl.u32 2475754826, %v1957
      %v1961 = vor.u32 %v1959, %v1960
      %v1962 = vshll.u32 2475754826, %v1956
      %v1963 = vshrl.u32 2131351028, %v1957
      %v1964 = vor.u32 %v1962, %v1963
      %v1965 = vshll.u32 2131351028, %v1956
      %v1966 = vshrl.u32 2102212464, %v1957
      %v1967 = vor.u32 %v1965, %v1966
      %v1968 = vshll.u32 2102212464, %v1956
      %v1969 = vshrl.u32 920167782, %v1957
      %v1970 = vor.u32 %v1968, %v1969
      %v1971 = vshll.u32 920167782, %v1956
      %v1972 = vshrl.u32 1326507024, %v1957
      %v1973 = vor.u32 %v1971, %v1972
      %vm1974 = vcmp.lt.s32.totalorder %v1955, 1
      %vm1975 = vcmp.lt.s32.totalorder %v1955, 2
      %vm1976 = vcmp.lt.s32.totalorder %v1955, 3
      %vm1977 = vcmp.lt.s32.totalorder %v1955, 4
      %v1978 = vsel %vm1974, %v1958, %v1961
      %v1979 = vsel %vm1977, %v1967, 2102212464
      %v1980 = vsel %vm1976, %v1964, %v1979
      %v1981 = vsel %vm1975, %v1978, %v1980
      %v1982 = vsel %vm1974, %v1961, %v1964
      %v1983 = vsel %vm1977, %v1970, 920167782
      %v1984 = vsel %vm1976, %v1967, %v1983
      %v1985 = vsel %vm1975, %v1982, %v1984
      %v1986 = vsel %vm1974, %v1964, %v1967
      %v1987 = vsel %vm1977, %v1973, 1326507024
      %v1988 = vsel %vm1976, %v1970, %v1987
      %v1989 = vsel %vm1975, %v1986, %v1988
      %v1990 = vshll.u32 %v1950, 8
      %v1991 = vmul.u32.u64.compose %v1990, %v1989
      %v1992 = vextract.low.u32 %v1991
      %v1993 = vextract.high.u32 %v1991
      %v1994 = vmul.u32.u64.compose %v1990, %v1985
      %v1995 = vextract.low.u32 %v1994
      %v1996 = vextract.high.u32 %v1994
      %v1997 = vmul.u32 %v1990, %v1981
      %v1998 = vadd.s32 %v1993, %v1995
      %vm1999 = vc.u32 %v1993, %v1995
      %v2000 = vadd.s32 %v1996, 1
      %v2001 = vsel %vm1999, %v2000, %v1996
      %v2002 = vadd.s32 %v1997, %v2001
      %v2003 = vadd.s32 %v2002, 536870912
      %v2004 = vshrl.u32 %v2003, 30
      %v2005 = vshll.u32 %v2004, 30
      %v2006 = vsub.s32 %v2002, %v2005
      %vm2007 = vcmp.lt.s32.totalorder %v2006, 0
      %v2008 = vsub.s32 0, %v2006
      %v2009 = vsel %vm2007, %v2008, %v2006
      %v2010 = vclz %v2009
      %v2011 = vsub.s32 %v2010, 2
      %vm2012 = vcmp.gt.s32.totalorder 0, %v2011
      %v2013 = vsel %vm2012, 0, %v2011
      %v2014 = vsub.s32 32, %v2013
      %v2015 = vshll.u32 %v2006, %v2013
      %v2016 = vshrl.u32 %v1998, %v2014
      %v2017 = vor.u32 %v2015, %v2016
      %v2018 = vsub.s32 4294967266, %v2013
      %v2019 = vadd.s32 %v2018, 127
      %v2020 = vshll.u32 %v2019, 23
      %v2021 = vor.u32 4788187, %v2020
      %v2022 = vand.u32 2147483647, %v2021
      %v2024 = vcvt.s32.f32 %v2017
      %v2025 = vmul.f32 %v2024, %v2022
      %v2026 = vxor.u32 %v2025, 2147483648
      %v2027 = vsel %vm1944, %v2026, %v2025
      %v2028 = vsub.s32 4, %v2004
      %v2029 = vsel %vm1944, %v2028, %v2004
      %v2030 = vsel %vm1943, %v793, %v2027
      %v2031 = vsel %vm1943, 0, %v2029
      %v2032 = vcosq.f32.pop %v2030
      %v2033 = vsinq.f32.pop %v2030
      %vm2034 = vweird.f32 %v793
      %v2035 = vadd.s32 %v2031, 3
      %v2036 = vand.u32 %v2035, 3
      %vm2037 = vcmp.lt.s32.totalorder %v2036, 2
      %vm2038 = vcmp.eq.s32.totalorder %v2036, 0
      %v2039 = vxor.u32 %v2033, 2147483648
      %v2040 = vsel %vm2038, %v2032, %v2039
      %vm2041 = vcmp.eq.s32.totalorder %v2036, 2
      %v2042 = vxor.u32 %v2032, 2147483648
      %v2043 = vsel %vm2041, %v2042, %v2033
      %v2044 = vsel %vm2037, %v2040, %v2043
      %v2045 = vsel %vm2034, nan, %v2044
      %v2046 = vand.u32 2147483647, %v794
      %vm2047 = vcmp.le.f32.partialorder %v2046, 0.7853982
      %vm2048 = vcmp.lt.s32.totalorder %v794, 0
      %v2049 = vand.u32 %v794, 2139095040
      %v2050 = vshrl.u32 %v2049, 23
      %v2051 = vsub.s32 %v2050, 127
      %v2052 = vand.u32 2147483647, %v794
      %v2053 = vand.u32 %v2052, 8388607
      %v2054 = vor.u32 %v2053, 8388608
      %v2055 = vsub.s32 0, %v2054
      %v2056 = vadd.s32 %v2051, 1
      %vm2057 = vcmp.gt.s32.totalorder %v2056, 0
      %v2058 = vsel %vm2057, %v2056, 0
      %v2059 = vshrl.u32 %v2058, 5
      %v2060 = vand.u32 %v2058, 31
      %v2061 = vsub.s32 32, %v2060
      %v2062 = vshrl.u32 683565275, %v2061
      %v2063 = vshll.u32 683565275, %v2060
      %v2064 = vshrl.u32 2475754826, %v2061
      %v2065 = vor.u32 %v2063, %v2064
      %v2066 = vshll.u32 2475754826, %v2060
      %v2067 = vshrl.u32 2131351028, %v2061
      %v2068 = vor.u32 %v2066, %v2067
      %v2069 = vshll.u32 2131351028, %v2060
      %v2070 = vshrl.u32 2102212464, %v2061
      %v2071 = vor.u32 %v2069, %v2070
      %v2072 = vshll.u32 2102212464, %v2060
      %v2073 = vshrl.u32 920167782, %v2061
      %v2074 = vor.u32 %v2072, %v2073
      %v2075 = vshll.u32 920167782, %v2060
      %v2076 = vshrl.u32 1326507024, %v2061
      %v2077 = vor.u32 %v2075, %v2076
      %vm2078 = vcmp.lt.s32.totalorder %v2059, 1
      %vm2079 = vcmp.lt.s32.totalorder %v2059, 2
      %vm2080 = vcmp.lt.s32.totalorder %v2059, 3
      %vm2081 = vcmp.lt.s32.totalorder %v2059, 4
      %v2082 = vsel %vm2078, %v2062, %v2065
      %v2083 = vsel %vm2081, %v2071, 2102212464
      %v2084 = vsel %vm2080, %v2068, %v2083
      %v2085 = vsel %vm2079, %v2082, %v2084
      %v2086 = vsel %vm2078, %v2065, %v2068
      %v2087 = vsel %vm2081, %v2074, 920167782
      %v2088 = vsel %vm2080, %v2071, %v2087
      %v2089 = vsel %vm2079, %v2086, %v2088
      %v2090 = vsel %vm2078, %v2068, %v2071
      %v2091 = vsel %vm2081, %v2077, 1326507024
      %v2092 = vsel %vm2080, %v2074, %v2091
      %v2093 = vsel %vm2079, %v2090, %v2092
      %v2094 = vshll.u32 %v2054, 8
      %v2095 = vmul.u32.u64.compose %v2094, %v2093
      %v2096 = vextract.low.u32 %v2095
      %v2097 = vextract.high.u32 %v2095
      %v2098 = vmul.u32.u64.compose %v2094, %v2089
      %v2099 = vextract.low.u32 %v2098
      %v2100 = vextract.high.u32 %v2098
      %v2101 = vmul.u32 %v2094, %v2085
      %v2102 = vadd.s32 %v2097, %v2099
      %vm2103 = vc.u32 %v2097, %v2099
      %v2104 = vadd.s32 %v2100, 1
      %v2105 = vsel %vm2103, %v2104, %v2100
      %v2106 = vadd.s32 %v2101, %v2105
      %v2107 = vadd.s32 %v2106, 536870912
      %v2108 = vshrl.u32 %v2107, 30
      %v2109 = vshll.u32 %v2108, 30
      %v2110 = vsub.s32 %v2106, %v2109
      %vm2111 = vcmp.lt.s32.totalorder %v2110, 0
      %v2112 = vsub.s32 0, %v2110
      %v2113 = vsel %vm2111, %v2112, %v2110
      %v2114 = vclz %v2113
      %v2115 = vsub.s32 %v2114, 2
      %vm2116 = vcmp.gt.s32.totalorder 0, %v2115
      %v2117 = vsel %vm2116, 0, %v2115
      %v2118 = vsub.s32 32, %v2117
      %v2119 = vshll.u32 %v2110, %v2117
      %v2120 = vshrl.u32 %v2102, %v2118
      %v2121 = vor.u32 %v2119, %v2120
      %v2122 = vsub.s32 4294967266, %v2117
      %v2123 = vadd.s32 %v2122, 127
      %v2124 = vshll.u32 %v2123, 23
      %v2125 = vor.u32 4788187, %v2124
      %v2126 = vand.u32 2147483647, %v2125
      %v2128 = vcvt.s32.f32 %v2121
      %v2129 = vmul.f32 %v2128, %v2126
      %v2130 = vxor.u32 %v2129, 2147483648
      %v2131 = vsel %vm2048, %v2130, %v2129
      %v2132 = vsub.s32 4, %v2108
      %v2133 = vsel %vm2048, %v2132, %v2108
      %v2134 = vsel %vm2047, %v794, %v2131
      %v2135 = vsel %vm2047, 0, %v2133
      %v2136 = vcosq.f32.pop %v2134
      %v2137 = vsinq.f32.pop %v2134
      %vm2138 = vweird.f32 %v794
      %v2139 = vadd.s32 %v2135, 3
      %v2140 = vand.u32 %v2139, 3
      %vm2141 = vcmp.lt.s32.totalorder %v2140, 2
      %vm2142 = vcmp.eq.s32.totalorder %v2140, 0
      %v2143 = vxor.u32 %v2137, 2147483648
      %v2144 = vsel %vm2142, %v2136, %v2143
      %vm2145 = vcmp.eq.s32.totalorder %v2140, 2
      %v2146 = vxor.u32 %v2136, 2147483648
      %v2147 = vsel %vm2145, %v2146, %v2137
      %v2148 = vsel %vm2141, %v2144, %v2147
      %v2149 = vsel %vm2138, nan, %v2148
      %v2150 = vand.u32 2147483647, %v795
      %vm2151 = vcmp.le.f32.partialorder %v2150, 0.7853982
      %vm2152 = vcmp.lt.s32.totalorder %v795, 0
      %v2153 = vand.u32 %v795, 2139095040
      %v2154 = vshrl.u32 %v2153, 23
      %v2155 = vsub.s32 %v2154, 127
      %v2156 = vand.u32 2147483647, %v795
      %v2157 = vand.u32 %v2156, 8388607
      %v2158 = vor.u32 %v2157, 8388608
      %v2159 = vsub.s32 0, %v2158
      %v2160 = vadd.s32 %v2155, 1
      %vm2161 = vcmp.gt.s32.totalorder %v2160, 0
      %v2162 = vsel %vm2161, %v2160, 0
      %v2163 = vshrl.u32 %v2162, 5
      %v2164 = vand.u32 %v2162, 31
      %v2165 = vsub.s32 32, %v2164
      %v2166 = vshrl.u32 683565275, %v2165
      %v2167 = vshll.u32 683565275, %v2164
      %v2168 = vshrl.u32 2475754826, %v2165
      %v2169 = vor.u32 %v2167, %v2168
      %v2170 = vshll.u32 2475754826, %v2164
      %v2171 = vshrl.u32 2131351028, %v2165
      %v2172 = vor.u32 %v2170, %v2171
      %v2173 = vshll.u32 2131351028, %v2164
      %v2174 = vshrl.u32 2102212464, %v2165
      %v2175 = vor.u32 %v2173, %v2174
      %v2176 = vshll.u32 2102212464, %v2164
      %v2177 = vshrl.u32 920167782, %v2165
      %v2178 = vor.u32 %v2176, %v2177
      %v2179 = vshll.u32 920167782, %v2164
      %v2180 = vshrl.u32 1326507024, %v2165
      %v2181 = vor.u32 %v2179, %v2180
      %vm2182 = vcmp.lt.s32.totalorder %v2163, 1
      %vm2183 = vcmp.lt.s32.totalorder %v2163, 2
      %vm2184 = vcmp.lt.s32.totalorder %v2163, 3
      %vm2185 = vcmp.lt.s32.totalorder %v2163, 4
      %v2186 = vsel %vm2182, %v2166, %v2169
      %v2187 = vsel %vm2185, %v2175, 2102212464
      %v2188 = vsel %vm2184, %v2172, %v2187
      %v2189 = vsel %vm2183, %v2186, %v2188
      %v2190 = vsel %vm2182, %v2169, %v2172
      %v2191 = vsel %vm2185, %v2178, 920167782
      %v2192 = vsel %vm2184, %v2175, %v2191
      %v2193 = vsel %vm2183, %v2190, %v2192
      %v2194 = vsel %vm2182, %v2172, %v2175
      %v2195 = vsel %vm2185, %v2181, 1326507024
      %v2196 = vsel %vm2184, %v2178, %v2195
      %v2197 = vsel %vm2183, %v2194, %v2196
      %v2198 = vshll.u32 %v2158, 8
      %v2199 = vmul.u32.u64.compose %v2198, %v2197
      %v2200 = vextract.low.u32 %v2199
      %v2201 = vextract.high.u32 %v2199
      %v2202 = vmul.u32.u64.compose %v2198, %v2193
      %v2203 = vextract.low.u32 %v2202
      %v2204 = vextract.high.u32 %v2202
      %v2205 = vmul.u32 %v2198, %v2189
      %v2206 = vadd.s32 %v2201, %v2203
      %vm2207 = vc.u32 %v2201, %v2203
      %v2208 = vadd.s32 %v2204, 1
      %v2209 = vsel %vm2207, %v2208, %v2204
      %v2210 = vadd.s32 %v2205, %v2209
      %v2211 = vadd.s32 %v2210, 536870912
      %v2212 = vshrl.u32 %v2211, 30
      %v2213 = vshll.u32 %v2212, 30
      %v2214 = vsub.s32 %v2210, %v2213
      %vm2215 = vcmp.lt.s32.totalorder %v2214, 0
      %v2216 = vsub.s32 0, %v2214
      %v2217 = vsel %vm2215, %v2216, %v2214
      %v2218 = vclz %v2217
      %v2219 = vsub.s32 %v2218, 2
      %vm2220 = vcmp.gt.s32.totalorder 0, %v2219
      %v2221 = vsel %vm2220, 0, %v2219
      %v2222 = vsub.s32 32, %v2221
      %v2223 = vshll.u32 %v2214, %v2221
      %v2224 = vshrl.u32 %v2206, %v2222
      %v2225 = vor.u32 %v2223, %v2224
      %v2226 = vsub.s32 4294967266, %v2221
      %v2227 = vadd.s32 %v2226, 127
      %v2228 = vshll.u32 %v2227, 23
      %v2229 = vor.u32 4788187, %v2228
      %v2230 = vand.u32 2147483647, %v2229
      %v2232 = vcvt.s32.f32 %v2225
      %v2233 = vmul.f32 %v2232, %v2230
      %v2234 = vxor.u32 %v2233, 2147483648
      %v2235 = vsel %vm2152, %v2234, %v2233
      %v2236 = vsub.s32 4, %v2212
      %v2237 = vsel %vm2152, %v2236, %v2212
      %v2238 = vsel %vm2151, %v795, %v2235
      %v2239 = vsel %vm2151, 0, %v2237
      %v2240 = vcosq.f32.pop %v2238
      %v2241 = vsinq.f32.pop %v2238
      %vm2242 = vweird.f32 %v795
      %v2243 = vadd.s32 %v2239, 3
      %v2244 = vand.u32 %v2243, 3
      %vm2245 = vcmp.lt.s32.totalorder %v2244, 2
      %vm2246 = vcmp.eq.s32.totalorder %v2244, 0
      %v2247 = vxor.u32 %v2241, 2147483648
      %v2248 = vsel %vm2246, %v2240, %v2247
      %vm2249 = vcmp.eq.s32.totalorder %v2244, 2
      %v2250 = vxor.u32 %v2240, 2147483648
      %v2251 = vsel %vm2249, %v2250, %v2241
      %v2252 = vsel %vm2245, %v2248, %v2251
      %v2253 = vsel %vm2242, nan, %v2252
      %v2254 = vand.u32 2147483647, %v796
      %vm2255 = vcmp.le.f32.partialorder %v2254, 0.7853982
      %vm2256 = vcmp.lt.s32.totalorder %v796, 0
      %v2257 = vand.u32 %v796, 2139095040
      %v2258 = vshrl.u32 %v2257, 23
      %v2259 = vsub.s32 %v2258, 127
      %v2260 = vand.u32 2147483647, %v796
      %v2261 = vand.u32 %v2260, 8388607
      %v2262 = vor.u32 %v2261, 8388608
      %v2263 = vsub.s32 0, %v2262
      %v2264 = vadd.s32 %v2259, 1
      %vm2265 = vcmp.gt.s32.totalorder %v2264, 0
      %v2266 = vsel %vm2265, %v2264, 0
      %v2267 = vshrl.u32 %v2266, 5
      %v2268 = vand.u32 %v2266, 31
      %v2269 = vsub.s32 32, %v2268
      %v2270 = vshrl.u32 683565275, %v2269
      %v2271 = vshll.u32 683565275, %v2268
      %v2272 = vshrl.u32 2475754826, %v2269
      %v2273 = vor.u32 %v2271, %v2272
      %v2274 = vshll.u32 2475754826, %v2268
      %v2275 = vshrl.u32 2131351028, %v2269
      %v2276 = vor.u32 %v2274, %v2275
      %v2277 = vshll.u32 2131351028, %v2268
      %v2278 = vshrl.u32 2102212464, %v2269
      %v2279 = vor.u32 %v2277, %v2278
      %v2280 = vshll.u32 2102212464, %v2268
      %v2281 = vshrl.u32 920167782, %v2269
      %v2282 = vor.u32 %v2280, %v2281
      %v2283 = vshll.u32 920167782, %v2268
      %v2284 = vshrl.u32 1326507024, %v2269
      %v2285 = vor.u32 %v2283, %v2284
      %vm2286 = vcmp.lt.s32.totalorder %v2267, 1
      %vm2287 = vcmp.lt.s32.totalorder %v2267, 2
      %vm2288 = vcmp.lt.s32.totalorder %v2267, 3
      %vm2289 = vcmp.lt.s32.totalorder %v2267, 4
      %v2290 = vsel %vm2286, %v2270, %v2273
      %v2291 = vsel %vm2289, %v2279, 2102212464
      %v2292 = vsel %vm2288, %v2276, %v2291
      %v2293 = vsel %vm2287, %v2290, %v2292
      %v2294 = vsel %vm2286, %v2273, %v2276
      %v2295 = vsel %vm2289, %v2282, 920167782
      %v2296 = vsel %vm2288, %v2279, %v2295
      %v2297 = vsel %vm2287, %v2294, %v2296
      %v2298 = vsel %vm2286, %v2276, %v2279
      %v2299 = vsel %vm2289, %v2285, 1326507024
      %v2300 = vsel %vm2288, %v2282, %v2299
      %v2301 = vsel %vm2287, %v2298, %v2300
      %v2302 = vshll.u32 %v2262, 8
      %v2303 = vmul.u32.u64.compose %v2302, %v2301
      %v2304 = vextract.low.u32 %v2303
      %v2305 = vextract.high.u32 %v2303
      %v2306 = vmul.u32.u64.compose %v2302, %v2297
      %v2307 = vextract.low.u32 %v2306
      %v2308 = vextract.high.u32 %v2306
      %v2309 = vmul.u32 %v2302, %v2293
      %v2310 = vadd.s32 %v2305, %v2307
      %vm2311 = vc.u32 %v2305, %v2307
      %v2312 = vadd.s32 %v2308, 1
      %v2313 = vsel %vm2311, %v2312, %v2308
      %v2314 = vadd.s32 %v2309, %v2313
      %v2315 = vadd.s32 %v2314, 536870912
      %v2316 = vshrl.u32 %v2315, 30
      %v2317 = vshll.u32 %v2316, 30
      %v2318 = vsub.s32 %v2314, %v2317
      %vm2319 = vcmp.lt.s32.totalorder %v2318, 0
      %v2320 = vsub.s32 0, %v2318
      %v2321 = vsel %vm2319, %v2320, %v2318
      %v2322 = vclz %v2321
      %v2323 = vsub.s32 %v2322, 2
      %vm2324 = vcmp.gt.s32.totalorder 0, %v2323
      %v2325 = vsel %vm2324, 0, %v2323
      %v2326 = vsub.s32 32, %v2325
      %v2327 = vshll.u32 %v2318, %v2325
      %v2328 = vshrl.u32 %v2310, %v2326
      %v2329 = vor.u32 %v2327, %v2328
      %v2330 = vsub.s32 4294967266, %v2325
      %v2331 = vadd.s32 %v2330, 127
      %v2332 = vshll.u32 %v2331, 23
      %v2333 = vor.u32 4788187, %v2332
      %v2334 = vand.u32 2147483647, %v2333
      %v2336 = vcvt.s32.f32 %v2329
      %v2337 = vmul.f32 %v2336, %v2334
      %v2338 = vxor.u32 %v2337, 2147483648
      %v2339 = vsel %vm2256, %v2338, %v2337
      %v2340 = vsub.s32 4, %v2316
      %v2341 = vsel %vm2256, %v2340, %v2316
      %v2342 = vsel %vm2255, %v796, %v2339
      %v2343 = vsel %vm2255, 0, %v2341
      %v2344 = vcosq.f32.pop %v2342
      %v2345 = vsinq.f32.pop %v2342
      %vm2346 = vweird.f32 %v796
      %v2347 = vadd.s32 %v2343, 3
      %v2348 = vand.u32 %v2347, 3
      %vm2349 = vcmp.lt.s32.totalorder %v2348, 2
      %vm2350 = vcmp.eq.s32.totalorder %v2348, 0
      %v2351 = vxor.u32 %v2345, 2147483648
      %v2352 = vsel %vm2350, %v2344, %v2351
      %vm2353 = vcmp.eq.s32.totalorder %v2348, 2
      %v2354 = vxor.u32 %v2344, 2147483648
      %v2355 = vsel %vm2353, %v2354, %v2345
      %v2356 = vsel %vm2349, %v2352, %v2355
      %v2357 = vsel %vm2346, nan, %v2356
      %v2358 = vand.u32 2147483647, %v797
      %vm2359 = vcmp.le.f32.partialorder %v2358, 0.7853982
      %vm2360 = vcmp.lt.s32.totalorder %v797, 0
      %v2361 = vand.u32 %v797, 2139095040
      %v2362 = vshrl.u32 %v2361, 23
      %v2363 = vsub.s32 %v2362, 127
      %v2364 = vand.u32 2147483647, %v797
      %v2365 = vand.u32 %v2364, 8388607
      %v2366 = vor.u32 %v2365, 8388608
      %v2367 = vsub.s32 0, %v2366
      %v2368 = vadd.s32 %v2363, 1
      %vm2369 = vcmp.gt.s32.totalorder %v2368, 0
      %v2370 = vsel %vm2369, %v2368, 0
      %v2371 = vshrl.u32 %v2370, 5
      %v2372 = vand.u32 %v2370, 31
      %v2373 = vsub.s32 32, %v2372
      %v2374 = vshrl.u32 683565275, %v2373
      %v2375 = vshll.u32 683565275, %v2372
      %v2376 = vshrl.u32 2475754826, %v2373
      %v2377 = vor.u32 %v2375, %v2376
      %v2378 = vshll.u32 2475754826, %v2372
      %v2379 = vshrl.u32 2131351028, %v2373
      %v2380 = vor.u32 %v2378, %v2379
      %v2381 = vshll.u32 2131351028, %v2372
      %v2382 = vshrl.u32 2102212464, %v2373
      %v2383 = vor.u32 %v2381, %v2382
      %v2384 = vshll.u32 2102212464, %v2372
      %v2385 = vshrl.u32 920167782, %v2373
      %v2386 = vor.u32 %v2384, %v2385
      %v2387 = vshll.u32 920167782, %v2372
      %v2388 = vshrl.u32 1326507024, %v2373
      %v2389 = vor.u32 %v2387, %v2388
      %vm2390 = vcmp.lt.s32.totalorder %v2371, 1
      %vm2391 = vcmp.lt.s32.totalorder %v2371, 2
      %vm2392 = vcmp.lt.s32.totalorder %v2371, 3
      %vm2393 = vcmp.lt.s32.totalorder %v2371, 4
      %v2394 = vsel %vm2390, %v2374, %v2377
      %v2395 = vsel %vm2393, %v2383, 2102212464
      %v2396 = vsel %vm2392, %v2380, %v2395
      %v2397 = vsel %vm2391, %v2394, %v2396
      %v2398 = vsel %vm2390, %v2377, %v2380
      %v2399 = vsel %vm2393, %v2386, 920167782
      %v2400 = vsel %vm2392, %v2383, %v2399
      %v2401 = vsel %vm2391, %v2398, %v2400
      %v2402 = vsel %vm2390, %v2380, %v2383
      %v2403 = vsel %vm2393, %v2389, 1326507024
      %v2404 = vsel %vm2392, %v2386, %v2403
      %v2405 = vsel %vm2391, %v2402, %v2404
      %v2406 = vshll.u32 %v2366, 8
      %v2407 = vmul.u32.u64.compose %v2406, %v2405
      %v2408 = vextract.low.u32 %v2407
      %v2409 = vextract.high.u32 %v2407
      %v2410 = vmul.u32.u64.compose %v2406, %v2401
      %v2411 = vextract.low.u32 %v2410
      %v2412 = vextract.high.u32 %v2410
      %v2413 = vmul.u32 %v2406, %v2397
      %v2414 = vadd.s32 %v2409, %v2411
      %vm2415 = vc.u32 %v2409, %v2411
      %v2416 = vadd.s32 %v2412, 1
      %v2417 = vsel %vm2415, %v2416, %v2412
      %v2418 = vadd.s32 %v2413, %v2417
      %v2419 = vadd.s32 %v2418, 536870912
      %v2420 = vshrl.u32 %v2419, 30
      %v2421 = vshll.u32 %v2420, 30
      %v2422 = vsub.s32 %v2418, %v2421
      %vm2423 = vcmp.lt.s32.totalorder %v2422, 0
      %v2424 = vsub.s32 0, %v2422
      %v2425 = vsel %vm2423, %v2424, %v2422
      %v2426 = vclz %v2425
      %v2427 = vsub.s32 %v2426, 2
      %vm2428 = vcmp.gt.s32.totalorder 0, %v2427
      %v2429 = vsel %vm2428, 0, %v2427
      %v2430 = vsub.s32 32, %v2429
      %v2431 = vshll.u32 %v2422, %v2429
      %v2432 = vshrl.u32 %v2414, %v2430
      %v2433 = vor.u32 %v2431, %v2432
      %v2434 = vsub.s32 4294967266, %v2429
      %v2435 = vadd.s32 %v2434, 127
      %v2436 = vshll.u32 %v2435, 23
      %v2437 = vor.u32 4788187, %v2436
      %v2438 = vand.u32 2147483647, %v2437
      %v2440 = vcvt.s32.f32 %v2433
      %v2441 = vmul.f32 %v2440, %v2438
      %v2442 = vxor.u32 %v2441, 2147483648
      %v2443 = vsel %vm2360, %v2442, %v2441
      %v2444 = vsub.s32 4, %v2420
      %v2445 = vsel %vm2360, %v2444, %v2420
      %v2446 = vsel %vm2359, %v797, %v2443
      %v2447 = vsel %vm2359, 0, %v2445
      %v2448 = vcosq.f32.pop %v2446
      %v2449 = vsinq.f32.pop %v2446
      %vm2450 = vweird.f32 %v797
      %v2451 = vadd.s32 %v2447, 3
      %v2452 = vand.u32 %v2451, 3
      %vm2453 = vcmp.lt.s32.totalorder %v2452, 2
      %vm2454 = vcmp.eq.s32.totalorder %v2452, 0
      %v2455 = vxor.u32 %v2449, 2147483648
      %v2456 = vsel %vm2454, %v2448, %v2455
      %vm2457 = vcmp.eq.s32.totalorder %v2452, 2
      %v2458 = vxor.u32 %v2448, 2147483648
      %v2459 = vsel %vm2457, %v2458, %v2449
      %v2460 = vsel %vm2453, %v2456, %v2459
      %v2461 = vsel %vm2450, nan, %v2460
      %v2462 = vpack.c.bf16 %v1005, %v901
      %v2463 = vpack.c.bf16 %v1213, %v1109
      %v2464 = vpack.c.bf16 %v1421, %v1317
      %v2465 = vpack.c.bf16 %v1629, %v1525
      %v2466 = vpack.c.bf16 %v1837, %v1733
      %v2467 = vpack.c.bf16 %v2045, %v1941
      %v2468 = vpack.c.bf16 %v2253, %v2149
      %v2469 = vpack.c.bf16 %v2461, %v2357
      %v2470 = vld [vmem:[%s5] sm:$0xf]
      %v2471 = vld [vmem:[%s5 + $0x4] sm:$0xf]
      %v2472 = vld [vmem:[%s5 + $0x8] sm:$0xf]
      %v2473 = vld [vmem:[%s5 + $0xc] sm:$0xf]
      %v2474 = vld [vmem:[%s6] sm:$0x1]
      %v2476 = vlaneseq
      %v2477 = vshrl.u32 %v2476, 7
      %v2478 = vsub.s32 0, %v2477
      %v2479 = vrot.slane %v2474, %v2478
      %v2485 = vunpack.c.l.b16 %v2470
      %v2486 = vunpack.c.l.b16 %v2471
      %v2487 = vunpack.c.l.b16 %v2472
      %v2488 = vunpack.c.l.b16 %v2473
      %v2489 = vpack.c.b16 %v2486, %v2485
      %v2490 = vpack.c.b16 %v2488, %v2487
      %vm2493 = vcmask 261120
      %v2495 = vsel %vm2493, %v2462, 0
      %v2498 = vsel %vm2493, %v2463, 0
      %v2501 = vsel %vm2493, %v2464, 0
      %v2504 = vsel %vm2493, %v2465, 0
      %v2507 = vsel %vm2493, %v2466, 0
      %v2510 = vsel %vm2493, %v2467, 0
      %v2513 = vsel %vm2493, %v2468, 0
      %v2516 = vsel %vm2493, %v2469, 0
      %2518 = vmatprep.subr.bf16.mxu0 0
      %2519 = vmatpush1.bf16.msra.mxu0 %v2489
      %2520 = vmatprep.subr.bf16.mxu0 0
      %2521 = vmatpush1.bf16.msra.mxu0 %v2490
      %2522 = vmatprep.subr.bf16.mxu0 0
      %2523 = vmatpush1.bf16.msra.mxu0 0
      %2524 = vmatprep.subr.bf16.mxu0 0
      %2525 = vmatpush1.bf16.msra.mxu0 0
      %2526 = vmatprep.subr.bf16.mxu0 0
      %2527 = vmatpush1.bf16.msra.mxu0 0
      %2528 = vmatprep.subr.bf16.mxu0 0
      %2529 = vmatpush1.bf16.msra.mxu0 0
      %2530 = vmatprep.subr.bf16.mxu0 0
      %2531 = vmatpush1.bf16.msra.mxu0 0
      %2532 = vmatprep.subr.bf16.mxu0 0
      %2533 = vmatpush1.bf16.msra.mxu0 0
      %2534 = vmatprep.subr.bf16.mxu0 0
      %2535 = vmatpush1.bf16.msra.mxu0 0
      %2536 = vmatprep.subr.bf16.mxu0 0
      %2537 = vmatpush1.bf16.msra.mxu0 0
      %2538 = vmatprep.subr.bf16.mxu0 0
      %2539 = vmatpush1.bf16.msra.mxu0 0
      %2540 = vmatprep.subr.bf16.mxu0 0
      %2541 = vmatpush1.bf16.msra.mxu0 0
      %2542 = vmatprep.subr.bf16.mxu0 0
      %2543 = vmatpush1.bf16.msra.mxu0 0
      %2544 = vmatprep.subr.bf16.mxu0 0
      %2545 = vmatpush1.bf16.msra.mxu0 0
      %2546 = vmatprep.subr.bf16.mxu0 0
      %2547 = vmatpush1.bf16.msra.mxu0 0
      %2548 = vmatprep.subr.bf16.mxu0 0
      %2549 = vmatpush1.bf16.msra.mxu0 0
      %2550 = vmatprep.mubr.bf16.mxu0 0
      %2551 = vmatmul.mubr.bf16.gmra.mrb[0].mxu0 %v2495
      %v2552 = vpop.f32.mrb[0].mxu0
      %v2553 = vadd.f32 %v2479, %v2552
      %v2554 = vpop.f32.mrb[0].mxu0
      %v2555 = vpop.f32.mrb[0].mxu0
      %v2556 = vadd.f32 %v2479, %v2555
      %v2557 = vpop.f32.mrb[0].mxu0
      %2558 = vmatprep.mubr.bf16.mxu0 0
      %2559 = vmatmul.mubr.bf16.gmra.mrb[0].mxu0 %v2498
      %v2560 = vpop.f32.mrb[0].mxu0
      %v2561 = vadd.f32 %v2479, %v2560
      %v2562 = vpop.f32.mrb[0].mxu0
      %v2563 = vpop.f32.mrb[0].mxu0
      %v2564 = vadd.f32 %v2479, %v2563
      %v2565 = vpop.f32.mrb[0].mxu0
      %2566 = vmatprep.mubr.bf16.mxu0 0
      %2567 = vmatmul.mubr.bf16.gmra.mrb[0].mxu0 %v2501
      %v2568 = vpop.f32.mrb[0].mxu0
      %v2569 = vadd.f32 %v2479, %v2568
      %v2570 = vpop.f32.mrb[0].mxu0
      %v2571 = vpop.f32.mrb[0].mxu0
      %v2572 = vadd.f32 %v2479, %v2571
      %v2573 = vpop.f32.mrb[0].mxu0
      %2574 = vmatprep.mubr.bf16.mxu0 0
      %2575 = vmatmul.mubr.bf16.gmra.mrb[0].mxu0 %v2504
      %v2576 = vpop.f32.mrb[0].mxu0
      %v2577 = vadd.f32 %v2479, %v2576
      %v2578 = vpop.f32.mrb[0].mxu0
      %v2579 = vpop.f32.mrb[0].mxu0
      %v2580 = vadd.f32 %v2479, %v2579
      %v2581 = vpop.f32.mrb[0].mxu0
      %2582 = vmatprep.mubr.bf16.mxu0 0
      %2583 = vmatmul.mubr.bf16.gmra.mrb[0].mxu0 %v2507
      %v2584 = vpop.f32.mrb[0].mxu0
      %v2585 = vadd.f32 %v2479, %v2584
      %v2586 = vpop.f32.mrb[0].mxu0
      %v2587 = vpop.f32.mrb[0].mxu0
      %v2588 = vadd.f32 %v2479, %v2587
      %v2589 = vpop.f32.mrb[0].mxu0
      %2590 = vmatprep.mubr.bf16.mxu0 0
      %2591 = vmatmul.mubr.bf16.gmra.mrb[0].mxu0 %v2510
      %v2592 = vpop.f32.mrb[0].mxu0
      %v2593 = vadd.f32 %v2479, %v2592
      %v2594 = vpop.f32.mrb[0].mxu0
      %v2595 = vpop.f32.mrb[0].mxu0
      %v2596 = vadd.f32 %v2479, %v2595
      %v2597 = vpop.f32.mrb[0].mxu0
      %2598 = vmatprep.mubr.bf16.mxu0 0
      %2599 = vmatmul.mubr.bf16.gmra.mrb[0].mxu0 %v2513
      %v2600 = vpop.f32.mrb[0].mxu0
      %v2601 = vadd.f32 %v2479, %v2600
      %v2602 = vpop.f32.mrb[0].mxu0
      %v2603 = vpop.f32.mrb[0].mxu0
      %v2604 = vadd.f32 %v2479, %v2603
      %v2605 = vpop.f32.mrb[0].mxu0
      %2606 = vmatprep.mubr.bf16.mxu0 0
      %2607 = vmatmul.mubr.bf16.gmra.mrb[0].mxu0 %v2516
      %v2608 = vpop.f32.mrb[0].mxu0
      %v2609 = vadd.f32 %v2479, %v2608
      %v2610 = vpop.f32.mrb[0].mxu0
      %v2611 = vpop.f32.mrb[0].mxu0
      %v2612 = vadd.f32 %v2479, %v2611
      %v2613 = vpop.f32.mrb[0].mxu0
      %2614 = vdwg.mxu0
      %v2615 = vand.u32 2147483647, %v2553
      %vm2616 = vcmp.le.f32.partialorder %v2615, 0.7853982
      %vm2617 = vcmp.lt.s32.totalorder %v2553, 0
      %v2618 = vand.u32 %v2553, 2139095040
      %v2619 = vshrl.u32 %v2618, 23
      %v2620 = vsub.s32 %v2619, 127
      %v2621 = vand.u32 2147483647, %v2553
      %v2622 = vand.u32 %v2621, 8388607
      %v2623 = vor.u32 %v2622, 8388608
      %v2624 = vsub.s32 0, %v2623
      %v2625 = vadd.s32 %v2620, 1
      %vm2626 = vcmp.gt.s32.totalorder %v2625, 0
      %v2627 = vsel %vm2626, %v2625, 0
      %v2628 = vshrl.u32 %v2627, 5
      %v2629 = vand.u32 %v2627, 31
      %v2630 = vsub.s32 32, %v2629
      %v2631 = vshrl.u32 683565275, %v2630
      %v2632 = vshll.u32 683565275, %v2629
      %v2633 = vshrl.u32 2475754826, %v2630
      %v2634 = vor.u32 %v2632, %v2633
      %v2635 = vshll.u32 2475754826, %v2629
      %v2636 = vshrl.u32 2131351028, %v2630
      %v2637 = vor.u32 %v2635, %v2636
      %v2638 = vshll.u32 2131351028, %v2629
      %v2639 = vshrl.u32 2102212464, %v2630
      %v2640 = vor.u32 %v2638, %v2639
      %v2641 = vshll.u32 2102212464, %v2629
      %v2642 = vshrl.u32 920167782, %v2630
      %v2643 = vor.u32 %v2641, %v2642
      %v2644 = vshll.u32 920167782, %v2629
      %v2645 = vshrl.u32 1326507024, %v2630
      %v2646 = vor.u32 %v2644, %v2645
      %vm2647 = vcmp.lt.s32.totalorder %v2628, 1
      %vm2648 = vcmp.lt.s32.totalorder %v2628, 2
      %vm2649 = vcmp.lt.s32.totalorder %v2628, 3
      %vm2650 = vcmp.lt.s32.totalorder %v2628, 4
      %v2651 = vsel %vm2647, %v2631, %v2634
      %v2652 = vsel %vm2650, %v2640, 2102212464
      %v2653 = vsel %vm2649, %v2637, %v2652
      %v2654 = vsel %vm2648, %v2651, %v2653
      %v2655 = vsel %vm2647, %v2634, %v2637
      %v2656 = vsel %vm2650, %v2643, 920167782
      %v2657 = vsel %vm2649, %v2640, %v2656
      %v2658 = vsel %vm2648, %v2655, %v2657
      %v2659 = vsel %vm2647, %v2637, %v2640
      %v2660 = vsel %vm2650, %v2646, 1326507024
      %v2661 = vsel %vm2649, %v2643, %v2660
      %v2662 = vsel %vm2648, %v2659, %v2661
      %v2663 = vshll.u32 %v2623, 8
      %v2664 = vmul.u32.u64.compose %v2663, %v2662
      %v2665 = vextract.low.u32 %v2664
      %v2666 = vextract.high.u32 %v2664
      %v2667 = vmul.u32.u64.compose %v2663, %v2658
      %v2668 = vextract.low.u32 %v2667
      %v2669 = vextract.high.u32 %v2667
      %v2670 = vmul.u32 %v2663, %v2654
      %v2671 = vadd.s32 %v2666, %v2668
      %vm2672 = vc.u32 %v2666, %v2668
      %v2673 = vadd.s32 %v2669, 1
      %v2674 = vsel %vm2672, %v2673, %v2669
      %v2675 = vadd.s32 %v2670, %v2674
      %v2676 = vadd.s32 %v2675, 536870912
      %v2677 = vshrl.u32 %v2676, 30
      %v2678 = vshll.u32 %v2677, 30
      %v2679 = vsub.s32 %v2675, %v2678
      %vm2680 = vcmp.lt.s32.totalorder %v2679, 0
      %v2681 = vsub.s32 0, %v2679
      %v2682 = vsel %vm2680, %v2681, %v2679
      %v2683 = vclz %v2682
      %v2684 = vsub.s32 %v2683, 2
      %vm2685 = vcmp.gt.s32.totalorder 0, %v2684
      %v2686 = vsel %vm2685, 0, %v2684
      %v2687 = vsub.s32 32, %v2686
      %v2688 = vshll.u32 %v2679, %v2686
      %v2689 = vshrl.u32 %v2671, %v2687
      %v2690 = vor.u32 %v2688, %v2689
      %v2691 = vsub.s32 4294967266, %v2686
      %v2692 = vadd.s32 %v2691, 127
      %v2693 = vshll.u32 %v2692, 23
      %v2694 = vor.u32 4788187, %v2693
      %v2695 = vand.u32 2147483647, %v2694
      %v2697 = vcvt.s32.f32 %v2690
      %v2698 = vmul.f32 %v2697, %v2695
      %v2699 = vxor.u32 %v2698, 2147483648
      %v2700 = vsel %vm2617, %v2699, %v2698
      %v2701 = vsub.s32 4, %v2677
      %v2702 = vsel %vm2617, %v2701, %v2677
      %v2703 = vsel %vm2616, %v2553, %v2700
      %v2704 = vsel %vm2616, 0, %v2702
      %v2705 = vcosq.f32.pop %v2703
      %v2706 = vsinq.f32.pop %v2703
      %vm2707 = vweird.f32 %v2553
      %v2708 = vadd.s32 %v2704, 3
      %v2709 = vand.u32 %v2708, 3
      %vm2710 = vcmp.lt.s32.totalorder %v2709, 2
      %vm2711 = vcmp.eq.s32.totalorder %v2709, 0
      %v2712 = vxor.u32 %v2706, 2147483648
      %v2713 = vsel %vm2711, %v2705, %v2712
      %vm2714 = vcmp.eq.s32.totalorder %v2709, 2
      %v2715 = vxor.u32 %v2705, 2147483648
      %v2716 = vsel %vm2714, %v2715, %v2706
      %v2717 = vsel %vm2710, %v2713, %v2716
      %v2718 = vsel %vm2707, nan, %v2717
      %v2719 = vand.u32 2147483647, %v2556
      %vm2720 = vcmp.le.f32.partialorder %v2719, 0.7853982
      %vm2721 = vcmp.lt.s32.totalorder %v2556, 0
      %v2722 = vand.u32 %v2556, 2139095040
      %v2723 = vshrl.u32 %v2722, 23
      %v2724 = vsub.s32 %v2723, 127
      %v2725 = vand.u32 2147483647, %v2556
      %v2726 = vand.u32 %v2725, 8388607
      %v2727 = vor.u32 %v2726, 8388608
      %v2728 = vsub.s32 0, %v2727
      %v2729 = vadd.s32 %v2724, 1
      %vm2730 = vcmp.gt.s32.totalorder %v2729, 0
      %v2731 = vsel %vm2730, %v2729, 0
      %v2732 = vshrl.u32 %v2731, 5
      %v2733 = vand.u32 %v2731, 31
      %v2734 = vsub.s32 32, %v2733
      %v2735 = vshrl.u32 683565275, %v2734
      %v2736 = vshll.u32 683565275, %v2733
      %v2737 = vshrl.u32 2475754826, %v2734
      %v2738 = vor.u32 %v2736, %v2737
      %v2739 = vshll.u32 2475754826, %v2733
      %v2740 = vshrl.u32 2131351028, %v2734
      %v2741 = vor.u32 %v2739, %v2740
      %v2742 = vshll.u32 2131351028, %v2733
      %v2743 = vshrl.u32 2102212464, %v2734
      %v2744 = vor.u32 %v2742, %v2743
      %v2745 = vshll.u32 2102212464, %v2733
      %v2746 = vshrl.u32 920167782, %v2734
      %v2747 = vor.u32 %v2745, %v2746
      %v2748 = vshll.u32 920167782, %v2733
      %v2749 = vshrl.u32 1326507024, %v2734
      %v2750 = vor.u32 %v2748, %v2749
      %vm2751 = vcmp.lt.s32.totalorder %v2732, 1
      %vm2752 = vcmp.lt.s32.totalorder %v2732, 2
      %vm2753 = vcmp.lt.s32.totalorder %v2732, 3
      %vm2754 = vcmp.lt.s32.totalorder %v2732, 4
      %v2755 = vsel %vm2751, %v2735, %v2738
      %v2756 = vsel %vm2754, %v2744, 2102212464
      %v2757 = vsel %vm2753, %v2741, %v2756
      %v2758 = vsel %vm2752, %v2755, %v2757
      %v2759 = vsel %vm2751, %v2738, %v2741
      %v2760 = vsel %vm2754, %v2747, 920167782
      %v2761 = vsel %vm2753, %v2744, %v2760
      %v2762 = vsel %vm2752, %v2759, %v2761
      %v2763 = vsel %vm2751, %v2741, %v2744
      %v2764 = vsel %vm2754, %v2750, 1326507024
      %v2765 = vsel %vm2753, %v2747, %v2764
      %v2766 = vsel %vm2752, %v2763, %v2765
      %v2767 = vshll.u32 %v2727, 8
      %v2768 = vmul.u32.u64.compose %v2767, %v2766
      %v2769 = vextract.low.u32 %v2768
      %v2770 = vextract.high.u32 %v2768
      %v2771 = vmul.u32.u64.compose %v2767, %v2762
      %v2772 = vextract.low.u32 %v2771
      %v2773 = vextract.high.u32 %v2771
      %v2774 = vmul.u32 %v2767, %v2758
      %v2775 = vadd.s32 %v2770, %v2772
      %vm2776 = vc.u32 %v2770, %v2772
      %v2777 = vadd.s32 %v2773, 1
      %v2778 = vsel %vm2776, %v2777, %v2773
      %v2779 = vadd.s32 %v2774, %v2778
      %v2780 = vadd.s32 %v2779, 536870912
      %v2781 = vshrl.u32 %v2780, 30
      %v2782 = vshll.u32 %v2781, 30
      %v2783 = vsub.s32 %v2779, %v2782
      %vm2784 = vcmp.lt.s32.totalorder %v2783, 0
      %v2785 = vsub.s32 0, %v2783
      %v2786 = vsel %vm2784, %v2785, %v2783
      %v2787 = vclz %v2786
      %v2788 = vsub.s32 %v2787, 2
      %vm2789 = vcmp.gt.s32.totalorder 0, %v2788
      %v2790 = vsel %vm2789, 0, %v2788
      %v2791 = vsub.s32 32, %v2790
      %v2792 = vshll.u32 %v2783, %v2790
      %v2793 = vshrl.u32 %v2775, %v2791
      %v2794 = vor.u32 %v2792, %v2793
      %v2795 = vsub.s32 4294967266, %v2790
      %v2796 = vadd.s32 %v2795, 127
      %v2797 = vshll.u32 %v2796, 23
      %v2798 = vor.u32 4788187, %v2797
      %v2799 = vand.u32 2147483647, %v2798
      %v2801 = vcvt.s32.f32 %v2794
      %v2802 = vmul.f32 %v2801, %v2799
      %v2803 = vxor.u32 %v2802, 2147483648
      %v2804 = vsel %vm2721, %v2803, %v2802
      %v2805 = vsub.s32 4, %v2781
      %v2806 = vsel %vm2721, %v2805, %v2781
      %v2807 = vsel %vm2720, %v2556, %v2804
      %v2808 = vsel %vm2720, 0, %v2806
      %v2809 = vcosq.f32.pop %v2807
      %v2810 = vsinq.f32.pop %v2807
      %vm2811 = vweird.f32 %v2556
      %v2812 = vadd.s32 %v2808, 3
      %v2813 = vand.u32 %v2812, 3
      %vm2814 = vcmp.lt.s32.totalorder %v2813, 2
      %vm2815 = vcmp.eq.s32.totalorder %v2813, 0
      %v2816 = vxor.u32 %v2810, 2147483648
      %v2817 = vsel %vm2815, %v2809, %v2816
      %vm2818 = vcmp.eq.s32.totalorder %v2813, 2
      %v2819 = vxor.u32 %v2809, 2147483648
      %v2820 = vsel %vm2818, %v2819, %v2810
      %v2821 = vsel %vm2814, %v2817, %v2820
      %v2822 = vsel %vm2811, nan, %v2821
      %v2823 = vand.u32 2147483647, %v2561
      %vm2824 = vcmp.le.f32.partialorder %v2823, 0.7853982
      %vm2825 = vcmp.lt.s32.totalorder %v2561, 0
      %v2826 = vand.u32 %v2561, 2139095040
      %v2827 = vshrl.u32 %v2826, 23
      %v2828 = vsub.s32 %v2827, 127
      %v2829 = vand.u32 2147483647, %v2561
      %v2830 = vand.u32 %v2829, 8388607
      %v2831 = vor.u32 %v2830, 8388608
      %v2832 = vsub.s32 0, %v2831
      %v2833 = vadd.s32 %v2828, 1
      %vm2834 = vcmp.gt.s32.totalorder %v2833, 0
      %v2835 = vsel %vm2834, %v2833, 0
      %v2836 = vshrl.u32 %v2835, 5
      %v2837 = vand.u32 %v2835, 31
      %v2838 = vsub.s32 32, %v2837
      %v2839 = vshrl.u32 683565275, %v2838
      %v2840 = vshll.u32 683565275, %v2837
      %v2841 = vshrl.u32 2475754826, %v2838
      %v2842 = vor.u32 %v2840, %v2841
      %v2843 = vshll.u32 2475754826, %v2837
      %v2844 = vshrl.u32 2131351028, %v2838
      %v2845 = vor.u32 %v2843, %v2844
      %v2846 = vshll.u32 2131351028, %v2837
      %v2847 = vshrl.u32 2102212464, %v2838
      %v2848 = vor.u32 %v2846, %v2847
      %v2849 = vshll.u32 2102212464, %v2837
      %v2850 = vshrl.u32 920167782, %v2838
      %v2851 = vor.u32 %v2849, %v2850
      %v2852 = vshll.u32 920167782, %v2837
      %v2853 = vshrl.u32 1326507024, %v2838
      %v2854 = vor.u32 %v2852, %v2853
      %vm2855 = vcmp.lt.s32.totalorder %v2836, 1
      %vm2856 = vcmp.lt.s32.totalorder %v2836, 2
      %vm2857 = vcmp.lt.s32.totalorder %v2836, 3
      %vm2858 = vcmp.lt.s32.totalorder %v2836, 4
      %v2859 = vsel %vm2855, %v2839, %v2842
      %v2860 = vsel %vm2858, %v2848, 2102212464
      %v2861 = vsel %vm2857, %v2845, %v2860
      %v2862 = vsel %vm2856, %v2859, %v2861
      %v2863 = vsel %vm2855, %v2842, %v2845
      %v2864 = vsel %vm2858, %v2851, 920167782
      %v2865 = vsel %vm2857, %v2848, %v2864
      %v2866 = vsel %vm2856, %v2863, %v2865
      %v2867 = vsel %vm2855, %v2845, %v2848
      %v2868 = vsel %vm2858, %v2854, 1326507024
      %v2869 = vsel %vm2857, %v2851, %v2868
      %v2870 = vsel %vm2856, %v2867, %v2869
      %v2871 = vshll.u32 %v2831, 8
      %v2872 = vmul.u32.u64.compose %v2871, %v2870
      %v2873 = vextract.low.u32 %v2872
      %v2874 = vextract.high.u32 %v2872
      %v2875 = vmul.u32.u64.compose %v2871, %v2866
      %v2876 = vextract.low.u32 %v2875
      %v2877 = vextract.high.u32 %v2875
      %v2878 = vmul.u32 %v2871, %v2862
      %v2879 = vadd.s32 %v2874, %v2876
      %vm2880 = vc.u32 %v2874, %v2876
      %v2881 = vadd.s32 %v2877, 1
      %v2882 = vsel %vm2880, %v2881, %v2877
      %v2883 = vadd.s32 %v2878, %v2882
      %v2884 = vadd.s32 %v2883, 536870912
      %v2885 = vshrl.u32 %v2884, 30
      %v2886 = vshll.u32 %v2885, 30
      %v2887 = vsub.s32 %v2883, %v2886
      %vm2888 = vcmp.lt.s32.totalorder %v2887, 0
      %v2889 = vsub.s32 0, %v2887
      %v2890 = vsel %vm2888, %v2889, %v2887
      %v2891 = vclz %v2890
      %v2892 = vsub.s32 %v2891, 2
      %vm2893 = vcmp.gt.s32.totalorder 0, %v2892
      %v2894 = vsel %vm2893, 0, %v2892
      %v2895 = vsub.s32 32, %v2894
      %v2896 = vshll.u32 %v2887, %v2894
      %v2897 = vshrl.u32 %v2879, %v2895
      %v2898 = vor.u32 %v2896, %v2897
      %v2899 = vsub.s32 4294967266, %v2894
      %v2900 = vadd.s32 %v2899, 127
      %v2901 = vshll.u32 %v2900, 23
      %v2902 = vor.u32 4788187, %v2901
      %v2903 = vand.u32 2147483647, %v2902
      %v2905 = vcvt.s32.f32 %v2898
      %v2906 = vmul.f32 %v2905, %v2903
      %v2907 = vxor.u32 %v2906, 2147483648
      %v2908 = vsel %vm2825, %v2907, %v2906
      %v2909 = vsub.s32 4, %v2885
      %v2910 = vsel %vm2825, %v2909, %v2885
      %v2911 = vsel %vm2824, %v2561, %v2908
      %v2912 = vsel %vm2824, 0, %v2910
      %v2913 = vcosq.f32.pop %v2911
      %v2914 = vsinq.f32.pop %v2911
      %vm2915 = vweird.f32 %v2561
      %v2916 = vadd.s32 %v2912, 3
      %v2917 = vand.u32 %v2916, 3
      %vm2918 = vcmp.lt.s32.totalorder %v2917, 2
      %vm2919 = vcmp.eq.s32.totalorder %v2917, 0
      %v2920 = vxor.u32 %v2914, 2147483648
      %v2921 = vsel %vm2919, %v2913, %v2920
      %vm2922 = vcmp.eq.s32.totalorder %v2917, 2
      %v2923 = vxor.u32 %v2913, 2147483648
      %v2924 = vsel %vm2922, %v2923, %v2914
      %v2925 = vsel %vm2918, %v2921, %v2924
      %v2926 = vsel %vm2915, nan, %v2925
      %v2927 = vand.u32 2147483647, %v2564
      %vm2928 = vcmp.le.f32.partialorder %v2927, 0.7853982
      %vm2929 = vcmp.lt.s32.totalorder %v2564, 0
      %v2930 = vand.u32 %v2564, 2139095040
      %v2931 = vshrl.u32 %v2930, 23
      %v2932 = vsub.s32 %v2931, 127
      %v2933 = vand.u32 2147483647, %v2564
      %v2934 = vand.u32 %v2933, 8388607
      %v2935 = vor.u32 %v2934, 8388608
      %v2936 = vsub.s32 0, %v2935
      %v2937 = vadd.s32 %v2932, 1
      %vm2938 = vcmp.gt.s32.totalorder %v2937, 0
      %v2939 = vsel %vm2938, %v2937, 0
      %v2940 = vshrl.u32 %v2939, 5
      %v2941 = vand.u32 %v2939, 31
      %v2942 = vsub.s32 32, %v2941
      %v2943 = vshrl.u32 683565275, %v2942
      %v2944 = vshll.u32 683565275, %v2941
      %v2945 = vshrl.u32 2475754826, %v2942
      %v2946 = vor.u32 %v2944, %v2945
      %v2947 = vshll.u32 2475754826, %v2941
      %v2948 = vshrl.u32 2131351028, %v2942
      %v2949 = vor.u32 %v2947, %v2948
      %v2950 = vshll.u32 2131351028, %v2941
      %v2951 = vshrl.u32 2102212464, %v2942
      %v2952 = vor.u32 %v2950, %v2951
      %v2953 = vshll.u32 2102212464, %v2941
      %v2954 = vshrl.u32 920167782, %v2942
      %v2955 = vor.u32 %v2953, %v2954
      %v2956 = vshll.u32 920167782, %v2941
      %v2957 = vshrl.u32 1326507024, %v2942
      %v2958 = vor.u32 %v2956, %v2957
      %vm2959 = vcmp.lt.s32.totalorder %v2940, 1
      %vm2960 = vcmp.lt.s32.totalorder %v2940, 2
      %vm2961 = vcmp.lt.s32.totalorder %v2940, 3
      %vm2962 = vcmp.lt.s32.totalorder %v2940, 4
      %v2963 = vsel %vm2959, %v2943, %v2946
      %v2964 = vsel %vm2962, %v2952, 2102212464
      %v2965 = vsel %vm2961, %v2949, %v2964
      %v2966 = vsel %vm2960, %v2963, %v2965
      %v2967 = vsel %vm2959, %v2946, %v2949
      %v2968 = vsel %vm2962, %v2955, 920167782
      %v2969 = vsel %vm2961, %v2952, %v2968
      %v2970 = vsel %vm2960, %v2967, %v2969
      %v2971 = vsel %vm2959, %v2949, %v2952
      %v2972 = vsel %vm2962, %v2958, 1326507024
      %v2973 = vsel %vm2961, %v2955, %v2972
      %v2974 = vsel %vm2960, %v2971, %v2973
      %v2975 = vshll.u32 %v2935, 8
      %v2976 = vmul.u32.u64.compose %v2975, %v2974
      %v2977 = vextract.low.u32 %v2976
      %v2978 = vextract.high.u32 %v2976
      %v2979 = vmul.u32.u64.compose %v2975, %v2970
      %v2980 = vextract.low.u32 %v2979
      %v2981 = vextract.high.u32 %v2979
      %v2982 = vmul.u32 %v2975, %v2966
      %v2983 = vadd.s32 %v2978, %v2980
      %vm2984 = vc.u32 %v2978, %v2980
      %v2985 = vadd.s32 %v2981, 1
      %v2986 = vsel %vm2984, %v2985, %v2981
      %v2987 = vadd.s32 %v2982, %v2986
      %v2988 = vadd.s32 %v2987, 536870912
      %v2989 = vshrl.u32 %v2988, 30
      %v2990 = vshll.u32 %v2989, 30
      %v2991 = vsub.s32 %v2987, %v2990
      %vm2992 = vcmp.lt.s32.totalorder %v2991, 0
      %v2993 = vsub.s32 0, %v2991
      %v2994 = vsel %vm2992, %v2993, %v2991
      %v2995 = vclz %v2994
      %v2996 = vsub.s32 %v2995, 2
      %vm2997 = vcmp.gt.s32.totalorder 0, %v2996
      %v2998 = vsel %vm2997, 0, %v2996
      %v2999 = vsub.s32 32, %v2998
      %v3000 = vshll.u32 %v2991, %v2998
      %v3001 = vshrl.u32 %v2983, %v2999
      %v3002 = vor.u32 %v3000, %v3001
      %v3003 = vsub.s32 4294967266, %v2998
      %v3004 = vadd.s32 %v3003, 127
      %v3005 = vshll.u32 %v3004, 23
      %v3006 = vor.u32 4788187, %v3005
      %v3007 = vand.u32 2147483647, %v3006
      %v3009 = vcvt.s32.f32 %v3002
      %v3010 = vmul.f32 %v3009, %v3007
      %v3011 = vxor.u32 %v3010, 2147483648
      %v3012 = vsel %vm2929, %v3011, %v3010
      %v3013 = vsub.s32 4, %v2989
      %v3014 = vsel %vm2929, %v3013, %v2989
      %v3015 = vsel %vm2928, %v2564, %v3012
      %v3016 = vsel %vm2928, 0, %v3014
      %v3017 = vcosq.f32.pop %v3015
      %v3018 = vsinq.f32.pop %v3015
      %vm3019 = vweird.f32 %v2564
      %v3020 = vadd.s32 %v3016, 3
      %v3021 = vand.u32 %v3020, 3
      %vm3022 = vcmp.lt.s32.totalorder %v3021, 2
      %vm3023 = vcmp.eq.s32.totalorder %v3021, 0
      %v3024 = vxor.u32 %v3018, 2147483648
      %v3025 = vsel %vm3023, %v3017, %v3024
      %vm3026 = vcmp.eq.s32.totalorder %v3021, 2
      %v3027 = vxor.u32 %v3017, 2147483648
      %v3028 = vsel %vm3026, %v3027, %v3018
      %v3029 = vsel %vm3022, %v3025, %v3028
      %v3030 = vsel %vm3019, nan, %v3029
      %v3031 = vand.u32 2147483647, %v2569
      %vm3032 = vcmp.le.f32.partialorder %v3031, 0.7853982
      %vm3033 = vcmp.lt.s32.totalorder %v2569, 0
      %v3034 = vand.u32 %v2569, 2139095040
      %v3035 = vshrl.u32 %v3034, 23
      %v3036 = vsub.s32 %v3035, 127
      %v3037 = vand.u32 2147483647, %v2569
      %v3038 = vand.u32 %v3037, 8388607
      %v3039 = vor.u32 %v3038, 8388608
      %v3040 = vsub.s32 0, %v3039
      %v3041 = vadd.s32 %v3036, 1
      %vm3042 = vcmp.gt.s32.totalorder %v3041, 0
      %v3043 = vsel %vm3042, %v3041, 0
      %v3044 = vshrl.u32 %v3043, 5
      %v3045 = vand.u32 %v3043, 31
      %v3046 = vsub.s32 32, %v3045
      %v3047 = vshrl.u32 683565275, %v3046
      %v3048 = vshll.u32 683565275, %v3045
      %v3049 = vshrl.u32 2475754826, %v3046
      %v3050 = vor.u32 %v3048, %v3049
      %v3051 = vshll.u32 2475754826, %v3045
      %v3052 = vshrl.u32 2131351028, %v3046
      %v3053 = vor.u32 %v3051, %v3052
      %v3054 = vshll.u32 2131351028, %v3045
      %v3055 = vshrl.u32 2102212464, %v3046
      %v3056 = vor.u32 %v3054, %v3055
      %v3057 = vshll.u32 2102212464, %v3045
      %v3058 = vshrl.u32 920167782, %v3046
      %v3059 = vor.u32 %v3057, %v3058
      %v3060 = vshll.u32 920167782, %v3045
      %v3061 = vshrl.u32 1326507024, %v3046
      %v3062 = vor.u32 %v3060, %v3061
      %vm3063 = vcmp.lt.s32.totalorder %v3044, 1
      %vm3064 = vcmp.lt.s32.totalorder %v3044, 2
      %vm3065 = vcmp.lt.s32.totalorder %v3044, 3
      %vm3066 = vcmp.lt.s32.totalorder %v3044, 4
      %v3067 = vsel %vm3063, %v3047, %v3050
      %v3068 = vsel %vm3066, %v3056, 2102212464
      %v3069 = vsel %vm3065, %v3053, %v3068
      %v3070 = vsel %vm3064, %v3067, %v3069
      %v3071 = vsel %vm3063, %v3050, %v3053
      %v3072 = vsel %vm3066, %v3059, 920167782
      %v3073 = vsel %vm3065, %v3056, %v3072
      %v3074 = vsel %vm3064, %v3071, %v3073
      %v3075 = vsel %vm3063, %v3053, %v3056
      %v3076 = vsel %vm3066, %v3062, 1326507024
      %v3077 = vsel %vm3065, %v3059, %v3076
      %v3078 = vsel %vm3064, %v3075, %v3077
      %v3079 = vshll.u32 %v3039, 8
      %v3080 = vmul.u32.u64.compose %v3079, %v3078
      %v3081 = vextract.low.u32 %v3080
      %v3082 = vextract.high.u32 %v3080
      %v3083 = vmul.u32.u64.compose %v3079, %v3074
      %v3084 = vextract.low.u32 %v3083
      %v3085 = vextract.high.u32 %v3083
      %v3086 = vmul.u32 %v3079, %v3070
      %v3087 = vadd.s32 %v3082, %v3084
      %vm3088 = vc.u32 %v3082, %v3084
      %v3089 = vadd.s32 %v3085, 1
      %v3090 = vsel %vm3088, %v3089, %v3085
      %v3091 = vadd.s32 %v3086, %v3090
      %v3092 = vadd.s32 %v3091, 536870912
      %v3093 = vshrl.u32 %v3092, 30
      %v3094 = vshll.u32 %v3093, 30
      %v3095 = vsub.s32 %v3091, %v3094
      %vm3096 = vcmp.lt.s32.totalorder %v3095, 0
      %v3097 = vsub.s32 0, %v3095
      %v3098 = vsel %vm3096, %v3097, %v3095
      %v3099 = vclz %v3098
      %v3100 = vsub.s32 %v3099, 2
      %vm3101 = vcmp.gt.s32.totalorder 0, %v3100
      %v3102 = vsel %vm3101, 0, %v3100
      %v3103 = vsub.s32 32, %v3102
      %v3104 = vshll.u32 %v3095, %v3102
      %v3105 = vshrl.u32 %v3087, %v3103
      %v3106 = vor.u32 %v3104, %v3105
      %v3107 = vsub.s32 4294967266, %v3102
      %v3108 = vadd.s32 %v3107, 127
      %v3109 = vshll.u32 %v3108, 23
      %v3110 = vor.u32 4788187, %v3109
      %v3111 = vand.u32 2147483647, %v3110
      %v3113 = vcvt.s32.f32 %v3106
      %v3114 = vmul.f32 %v3113, %v3111
      %v3115 = vxor.u32 %v3114, 2147483648
      %v3116 = vsel %vm3033, %v3115, %v3114
      %v3117 = vsub.s32 4, %v3093
      %v3118 = vsel %vm3033, %v3117, %v3093
      %v3119 = vsel %vm3032, %v2569, %v3116
      %v3120 = vsel %vm3032, 0, %v3118
      %v3121 = vcosq.f32.pop %v3119
      %v3122 = vsinq.f32.pop %v3119
      %vm3123 = vweird.f32 %v2569
      %v3124 = vadd.s32 %v3120, 3
      %v3125 = vand.u32 %v3124, 3
      %vm3126 = vcmp.lt.s32.totalorder %v3125, 2
      %vm3127 = vcmp.eq.s32.totalorder %v3125, 0
      %v3128 = vxor.u32 %v3122, 2147483648
      %v3129 = vsel %vm3127, %v3121, %v3128
      %vm3130 = vcmp.eq.s32.totalorder %v3125, 2
      %v3131 = vxor.u32 %v3121, 2147483648
      %v3132 = vsel %vm3130, %v3131, %v3122
      %v3133 = vsel %vm3126, %v3129, %v3132
      %v3134 = vsel %vm3123, nan, %v3133
      %v3135 = vand.u32 2147483647, %v2572
      %vm3136 = vcmp.le.f32.partialorder %v3135, 0.7853982
      %vm3137 = vcmp.lt.s32.totalorder %v2572, 0
      %v3138 = vand.u32 %v2572, 2139095040
      %v3139 = vshrl.u32 %v3138, 23
      %v3140 = vsub.s32 %v3139, 127
      %v3141 = vand.u32 2147483647, %v2572
      %v3142 = vand.u32 %v3141, 8388607
      %v3143 = vor.u32 %v3142, 8388608
      %v3144 = vsub.s32 0, %v3143
      %v3145 = vadd.s32 %v3140, 1
      %vm3146 = vcmp.gt.s32.totalorder %v3145, 0
      %v3147 = vsel %vm3146, %v3145, 0
      %v3148 = vshrl.u32 %v3147, 5
      %v3149 = vand.u32 %v3147, 31
      %v3150 = vsub.s32 32, %v3149
      %v3151 = vshrl.u32 683565275, %v3150
      %v3152 = vshll.u32 683565275, %v3149
      %v3153 = vshrl.u32 2475754826, %v3150
      %v3154 = vor.u32 %v3152, %v3153
      %v3155 = vshll.u32 2475754826, %v3149
      %v3156 = vshrl.u32 2131351028, %v3150
      %v3157 = vor.u32 %v3155, %v3156
      %v3158 = vshll.u32 2131351028, %v3149
      %v3159 = vshrl.u32 2102212464, %v3150
      %v3160 = vor.u32 %v3158, %v3159
      %v3161 = vshll.u32 2102212464, %v3149
      %v3162 = vshrl.u32 920167782, %v3150
      %v3163 = vor.u32 %v3161, %v3162
      %v3164 = vshll.u32 920167782, %v3149
      %v3165 = vshrl.u32 1326507024, %v3150
      %v3166 = vor.u32 %v3164, %v3165
      %vm3167 = vcmp.lt.s32.totalorder %v3148, 1
      %vm3168 = vcmp.lt.s32.totalorder %v3148, 2
      %vm3169 = vcmp.lt.s32.totalorder %v3148, 3
      %vm3170 = vcmp.lt.s32.totalorder %v3148, 4
      %v3171 = vsel %vm3167, %v3151, %v3154
      %v3172 = vsel %vm3170, %v3160, 2102212464
      %v3173 = vsel %vm3169, %v3157, %v3172
      %v3174 = vsel %vm3168, %v3171, %v3173
      %v3175 = vsel %vm3167, %v3154, %v3157
      %v3176 = vsel %vm3170, %v3163, 920167782
      %v3177 = vsel %vm3169, %v3160, %v3176
      %v3178 = vsel %vm3168, %v3175, %v3177
      %v3179 = vsel %vm3167, %v3157, %v3160
      %v3180 = vsel %vm3170, %v3166, 1326507024
      %v3181 = vsel %vm3169, %v3163, %v3180
      %v3182 = vsel %vm3168, %v3179, %v3181
      %v3183 = vshll.u32 %v3143, 8
      %v3184 = vmul.u32.u64.compose %v3183, %v3182
      %v3185 = vextract.low.u32 %v3184
      %v3186 = vextract.high.u32 %v3184
      %v3187 = vmul.u32.u64.compose %v3183, %v3178
      %v3188 = vextract.low.u32 %v3187
      %v3189 = vextract.high.u32 %v3187
      %v3190 = vmul.u32 %v3183, %v3174
      %v3191 = vadd.s32 %v3186, %v3188
      %vm3192 = vc.u32 %v3186, %v3188
      %v3193 = vadd.s32 %v3189, 1
      %v3194 = vsel %vm3192, %v3193, %v3189
      %v3195 = vadd.s32 %v3190, %v3194
      %v3196 = vadd.s32 %v3195, 536870912
      %v3197 = vshrl.u32 %v3196, 30
      %v3198 = vshll.u32 %v3197, 30
      %v3199 = vsub.s32 %v3195, %v3198
      %vm3200 = vcmp.lt.s32.totalorder %v3199, 0
      %v3201 = vsub.s32 0, %v3199
      %v3202 = vsel %vm3200, %v3201, %v3199
      %v3203 = vclz %v3202
      %v3204 = vsub.s32 %v3203, 2
      %vm3205 = vcmp.gt.s32.totalorder 0, %v3204
      %v3206 = vsel %vm3205, 0, %v3204
      %v3207 = vsub.s32 32, %v3206
      %v3208 = vshll.u32 %v3199, %v3206
      %v3209 = vshrl.u32 %v3191, %v3207
      %v3210 = vor.u32 %v3208, %v3209
      %v3211 = vsub.s32 4294967266, %v3206
      %v3212 = vadd.s32 %v3211, 127
      %v3213 = vshll.u32 %v3212, 23
      %v3214 = vor.u32 4788187, %v3213
      %v3215 = vand.u32 2147483647, %v3214
      %v3217 = vcvt.s32.f32 %v3210
      %v3218 = vmul.f32 %v3217, %v3215
      %v3219 = vxor.u32 %v3218, 2147483648
      %v3220 = vsel %vm3137, %v3219, %v3218
      %v3221 = vsub.s32 4, %v3197
      %v3222 = vsel %vm3137, %v3221, %v3197
      %v3223 = vsel %vm3136, %v2572, %v3220
      %v3224 = vsel %vm3136, 0, %v3222
      %v3225 = vcosq.f32.pop %v3223
      %v3226 = vsinq.f32.pop %v3223
      %vm3227 = vweird.f32 %v2572
      %v3228 = vadd.s32 %v3224, 3
      %v3229 = vand.u32 %v3228, 3
      %vm3230 = vcmp.lt.s32.totalorder %v3229, 2
      %vm3231 = vcmp.eq.s32.totalorder %v3229, 0
      %v3232 = vxor.u32 %v3226, 2147483648
      %v3233 = vsel %vm3231, %v3225, %v3232
      %vm3234 = vcmp.eq.s32.totalorder %v3229, 2
      %v3235 = vxor.u32 %v3225, 2147483648
      %v3236 = vsel %vm3234, %v3235, %v3226
      %v3237 = vsel %vm3230, %v3233, %v3236
      %v3238 = vsel %vm3227, nan, %v3237
      %v3239 = vand.u32 2147483647, %v2577
      %vm3240 = vcmp.le.f32.partialorder %v3239, 0.7853982
      %vm3241 = vcmp.lt.s32.totalorder %v2577, 0
      %v3242 = vand.u32 %v2577, 2139095040
      %v3243 = vshrl.u32 %v3242, 23
      %v3244 = vsub.s32 %v3243, 127
      %v3245 = vand.u32 2147483647, %v2577
      %v3246 = vand.u32 %v3245, 8388607
      %v3247 = vor.u32 %v3246, 8388608
      %v3248 = vsub.s32 0, %v3247
      %v3249 = vadd.s32 %v3244, 1
      %vm3250 = vcmp.gt.s32.totalorder %v3249, 0
      %v3251 = vsel %vm3250, %v3249, 0
      %v3252 = vshrl.u32 %v3251, 5
      %v3253 = vand.u32 %v3251, 31
      %v3254 = vsub.s32 32, %v3253
      %v3255 = vshrl.u32 683565275, %v3254
      %v3256 = vshll.u32 683565275, %v3253
      %v3257 = vshrl.u32 2475754826, %v3254
      %v3258 = vor.u32 %v3256, %v3257
      %v3259 = vshll.u32 2475754826, %v3253
      %v3260 = vshrl.u32 2131351028, %v3254
      %v3261 = vor.u32 %v3259, %v3260
      %v3262 = vshll.u32 2131351028, %v3253
      %v3263 = vshrl.u32 2102212464, %v3254
      %v3264 = vor.u32 %v3262, %v3263
      %v3265 = vshll.u32 2102212464, %v3253
      %v3266 = vshrl.u32 920167782, %v3254
      %v3267 = vor.u32 %v3265, %v3266
      %v3268 = vshll.u32 920167782, %v3253
      %v3269 = vshrl.u32 1326507024, %v3254
      %v3270 = vor.u32 %v3268, %v3269
      %vm3271 = vcmp.lt.s32.totalorder %v3252, 1
      %vm3272 = vcmp.lt.s32.totalorder %v3252, 2
      %vm3273 = vcmp.lt.s32.totalorder %v3252, 3
      %vm3274 = vcmp.lt.s32.totalorder %v3252, 4
      %v3275 = vsel %vm3271, %v3255, %v3258
      %v3276 = vsel %vm3274, %v3264, 2102212464
      %v3277 = vsel %vm3273, %v3261, %v3276
      %v3278 = vsel %vm3272, %v3275, %v3277
      %v3279 = vsel %vm3271, %v3258, %v3261
      %v3280 = vsel %vm3274, %v3267, 920167782
      %v3281 = vsel %vm3273, %v3264, %v3280
      %v3282 = vsel %vm3272, %v3279, %v3281
      %v3283 = vsel %vm3271, %v3261, %v3264
      %v3284 = vsel %vm3274, %v3270, 1326507024
      %v3285 = vsel %vm3273, %v3267, %v3284
      %v3286 = vsel %vm3272, %v3283, %v3285
      %v3287 = vshll.u32 %v3247, 8
      %v3288 = vmul.u32.u64.compose %v3287, %v3286
      %v3289 = vextract.low.u32 %v3288
      %v3290 = vextract.high.u32 %v3288
      %v3291 = vmul.u32.u64.compose %v3287, %v3282
      %v3292 = vextract.low.u32 %v3291
      %v3293 = vextract.high.u32 %v3291
      %v3294 = vmul.u32 %v3287, %v3278
      %v3295 = vadd.s32 %v3290, %v3292
      %vm3296 = vc.u32 %v3290, %v3292
      %v3297 = vadd.s32 %v3293, 1
      %v3298 = vsel %vm3296, %v3297, %v3293
      %v3299 = vadd.s32 %v3294, %v3298
      %v3300 = vadd.s32 %v3299, 536870912
      %v3301 = vshrl.u32 %v3300, 30
      %v3302 = vshll.u32 %v3301, 30
      %v3303 = vsub.s32 %v3299, %v3302
      %vm3304 = vcmp.lt.s32.totalorder %v3303, 0
      %v3305 = vsub.s32 0, %v3303
      %v3306 = vsel %vm3304, %v3305, %v3303
      %v3307 = vclz %v3306
      %v3308 = vsub.s32 %v3307, 2
      %vm3309 = vcmp.gt.s32.totalorder 0, %v3308
      %v3310 = vsel %vm3309, 0, %v3308
      %v3311 = vsub.s32 32, %v3310
      %v3312 = vshll.u32 %v3303, %v3310
      %v3313 = vshrl.u32 %v3295, %v3311
      %v3314 = vor.u32 %v3312, %v3313
      %v3315 = vsub.s32 4294967266, %v3310
      %v3316 = vadd.s32 %v3315, 127
      %v3317 = vshll.u32 %v3316, 23
      %v3318 = vor.u32 4788187, %v3317
      %v3319 = vand.u32 2147483647, %v3318
      %v3321 = vcvt.s32.f32 %v3314
      %v3322 = vmul.f32 %v3321, %v3319
      %v3323 = vxor.u32 %v3322, 2147483648
      %v3324 = vsel %vm3241, %v3323, %v3322
      %v3325 = vsub.s32 4, %v3301
      %v3326 = vsel %vm3241, %v3325, %v3301
      %v3327 = vsel %vm3240, %v2577, %v3324
      %v3328 = vsel %vm3240, 0, %v3326
      %v3329 = vcosq.f32.pop %v3327
      %v3330 = vsinq.f32.pop %v3327
      %vm3331 = vweird.f32 %v2577
      %v3332 = vadd.s32 %v3328, 3
      %v3333 = vand.u32 %v3332, 3
      %vm3334 = vcmp.lt.s32.totalorder %v3333, 2
      %vm3335 = vcmp.eq.s32.totalorder %v3333, 0
      %v3336 = vxor.u32 %v3330, 2147483648
      %v3337 = vsel %vm3335, %v3329, %v3336
      %vm3338 = vcmp.eq.s32.totalorder %v3333, 2
      %v3339 = vxor.u32 %v3329, 2147483648
      %v3340 = vsel %vm3338, %v3339, %v3330
      %v3341 = vsel %vm3334, %v3337, %v3340
      %v3342 = vsel %vm3331, nan, %v3341
      %v3343 = vand.u32 2147483647, %v2580
      %vm3344 = vcmp.le.f32.partialorder %v3343, 0.7853982
      %vm3345 = vcmp.lt.s32.totalorder %v2580, 0
      %v3346 = vand.u32 %v2580, 2139095040
      %v3347 = vshrl.u32 %v3346, 23
      %v3348 = vsub.s32 %v3347, 127
      %v3349 = vand.u32 2147483647, %v2580
      %v3350 = vand.u32 %v3349, 8388607
      %v3351 = vor.u32 %v3350, 8388608
      %v3352 = vsub.s32 0, %v3351
      %v3353 = vadd.s32 %v3348, 1
      %vm3354 = vcmp.gt.s32.totalorder %v3353, 0
      %v3355 = vsel %vm3354, %v3353, 0
      %v3356 = vshrl.u32 %v3355, 5
      %v3357 = vand.u32 %v3355, 31
      %v3358 = vsub.s32 32, %v3357
      %v3359 = vshrl.u32 683565275, %v3358
      %v3360 = vshll.u32 683565275, %v3357
      %v3361 = vshrl.u32 2475754826, %v3358
      %v3362 = vor.u32 %v3360, %v3361
      %v3363 = vshll.u32 2475754826, %v3357
      %v3364 = vshrl.u32 2131351028, %v3358
      %v3365 = vor.u32 %v3363, %v3364
      %v3366 = vshll.u32 2131351028, %v3357
      %v3367 = vshrl.u32 2102212464, %v3358
      %v3368 = vor.u32 %v3366, %v3367
      %v3369 = vshll.u32 2102212464, %v3357
      %v3370 = vshrl.u32 920167782, %v3358
      %v3371 = vor.u32 %v3369, %v3370
      %v3372 = vshll.u32 920167782, %v3357
      %v3373 = vshrl.u32 1326507024, %v3358
      %v3374 = vor.u32 %v3372, %v3373
      %vm3375 = vcmp.lt.s32.totalorder %v3356, 1
      %vm3376 = vcmp.lt.s32.totalorder %v3356, 2
      %vm3377 = vcmp.lt.s32.totalorder %v3356, 3
      %vm3378 = vcmp.lt.s32.totalorder %v3356, 4
      %v3379 = vsel %vm3375, %v3359, %v3362
      %v3380 = vsel %vm3378, %v3368, 2102212464
      %v3381 = vsel %vm3377, %v3365, %v3380
      %v3382 = vsel %vm3376, %v3379, %v3381
      %v3383 = vsel %vm3375, %v3362, %v3365
      %v3384 = vsel %vm3378, %v3371, 920167782
      %v3385 = vsel %vm3377, %v3368, %v3384
      %v3386 = vsel %vm3376, %v3383, %v3385
      %v3387 = vsel %vm3375, %v3365, %v3368
      %v3388 = vsel %vm3378, %v3374, 1326507024
      %v3389 = vsel %vm3377, %v3371, %v3388
      %v3390 = vsel %vm3376, %v3387, %v3389
      %v3391 = vshll.u32 %v3351, 8
      %v3392 = vmul.u32.u64.compose %v3391, %v3390
      %v3393 = vextract.low.u32 %v3392
      %v3394 = vextract.high.u32 %v3392
      %v3395 = vmul.u32.u64.compose %v3391, %v3386
      %v3396 = vextract.low.u32 %v3395
      %v3397 = vextract.high.u32 %v3395
      %v3398 = vmul.u32 %v3391, %v3382
      %v3399 = vadd.s32 %v3394, %v3396
      %vm3400 = vc.u32 %v3394, %v3396
      %v3401 = vadd.s32 %v3397, 1
      %v3402 = vsel %vm3400, %v3401, %v3397
      %v3403 = vadd.s32 %v3398, %v3402
      %v3404 = vadd.s32 %v3403, 536870912
      %v3405 = vshrl.u32 %v3404, 30
      %v3406 = vshll.u32 %v3405, 30
      %v3407 = vsub.s32 %v3403, %v3406
      %vm3408 = vcmp.lt.s32.totalorder %v3407, 0
      %v3409 = vsub.s32 0, %v3407
      %v3410 = vsel %vm3408, %v3409, %v3407
      %v3411 = vclz %v3410
      %v3412 = vsub.s32 %v3411, 2
      %vm3413 = vcmp.gt.s32.totalorder 0, %v3412
      %v3414 = vsel %vm3413, 0, %v3412
      %v3415 = vsub.s32 32, %v3414
      %v3416 = vshll.u32 %v3407, %v3414
      %v3417 = vshrl.u32 %v3399, %v3415
      %v3418 = vor.u32 %v3416, %v3417
      %v3419 = vsub.s32 4294967266, %v3414
      %v3420 = vadd.s32 %v3419, 127
      %v3421 = vshll.u32 %v3420, 23
      %v3422 = vor.u32 4788187, %v3421
      %v3423 = vand.u32 2147483647, %v3422
      %v3425 = vcvt.s32.f32 %v3418
      %v3426 = vmul.f32 %v3425, %v3423
      %v3427 = vxor.u32 %v3426, 2147483648
      %v3428 = vsel %vm3345, %v3427, %v3426
      %v3429 = vsub.s32 4, %v3405
      %v3430 = vsel %vm3345, %v3429, %v3405
      %v3431 = vsel %vm3344, %v2580, %v3428
      %v3432 = vsel %vm3344, 0, %v3430
      %v3433 = vcosq.f32.pop %v3431
      %v3434 = vsinq.f32.pop %v3431
      %vm3435 = vweird.f32 %v2580
      %v3436 = vadd.s32 %v3432, 3
      %v3437 = vand.u32 %v3436, 3
      %vm3438 = vcmp.lt.s32.totalorder %v3437, 2
      %vm3439 = vcmp.eq.s32.totalorder %v3437, 0
      %v3440 = vxor.u32 %v3434, 2147483648
      %v3441 = vsel %vm3439, %v3433, %v3440
      %vm3442 = vcmp.eq.s32.totalorder %v3437, 2
      %v3443 = vxor.u32 %v3433, 2147483648
      %v3444 = vsel %vm3442, %v3443, %v3434
      %v3445 = vsel %vm3438, %v3441, %v3444
      %v3446 = vsel %vm3435, nan, %v3445
      %v3447 = vand.u32 2147483647, %v2585
      %vm3448 = vcmp.le.f32.partialorder %v3447, 0.7853982
      %vm3449 = vcmp.lt.s32.totalorder %v2585, 0
      %v3450 = vand.u32 %v2585, 2139095040
      %v3451 = vshrl.u32 %v3450, 23
      %v3452 = vsub.s32 %v3451, 127
      %v3453 = vand.u32 2147483647, %v2585
      %v3454 = vand.u32 %v3453, 8388607
      %v3455 = vor.u32 %v3454, 8388608
      %v3456 = vsub.s32 0, %v3455
      %v3457 = vadd.s32 %v3452, 1
      %vm3458 = vcmp.gt.s32.totalorder %v3457, 0
      %v3459 = vsel %vm3458, %v3457, 0
      %v3460 = vshrl.u32 %v3459, 5
      %v3461 = vand.u32 %v3459, 31
      %v3462 = vsub.s32 32, %v3461
      %v3463 = vshrl.u32 683565275, %v3462
      %v3464 = vshll.u32 683565275, %v3461
      %v3465 = vshrl.u32 2475754826, %v3462
      %v3466 = vor.u32 %v3464, %v3465
      %v3467 = vshll.u32 2475754826, %v3461
      %v3468 = vshrl.u32 2131351028, %v3462
      %v3469 = vor.u32 %v3467, %v3468
      %v3470 = vshll.u32 2131351028, %v3461
      %v3471 = vshrl.u32 2102212464, %v3462
      %v3472 = vor.u32 %v3470, %v3471
      %v3473 = vshll.u32 2102212464, %v3461
      %v3474 = vshrl.u32 920167782, %v3462
      %v3475 = vor.u32 %v3473, %v3474
      %v3476 = vshll.u32 920167782, %v3461
      %v3477 = vshrl.u32 1326507024, %v3462
      %v3478 = vor.u32 %v3476, %v3477
      %vm3479 = vcmp.lt.s32.totalorder %v3460, 1
      %vm3480 = vcmp.lt.s32.totalorder %v3460, 2
      %vm3481 = vcmp.lt.s32.totalorder %v3460, 3
      %vm3482 = vcmp.lt.s32.totalorder %v3460, 4
      %v3483 = vsel %vm3479, %v3463, %v3466
      %v3484 = vsel %vm3482, %v3472, 2102212464
      %v3485 = vsel %vm3481, %v3469, %v3484
      %v3486 = vsel %vm3480, %v3483, %v3485
      %v3487 = vsel %vm3479, %v3466, %v3469
      %v3488 = vsel %vm3482, %v3475, 920167782
      %v3489 = vsel %vm3481, %v3472, %v3488
      %v3490 = vsel %vm3480, %v3487, %v3489
      %v3491 = vsel %vm3479, %v3469, %v3472
      %v3492 = vsel %vm3482, %v3478, 1326507024
      %v3493 = vsel %vm3481, %v3475, %v3492
      %v3494 = vsel %vm3480, %v3491, %v3493
      %v3495 = vshll.u32 %v3455, 8
      %v3496 = vmul.u32.u64.compose %v3495, %v3494
      %v3497 = vextract.low.u32 %v3496
      %v3498 = vextract.high.u32 %v3496
      %v3499 = vmul.u32.u64.compose %v3495, %v3490
      %v3500 = vextract.low.u32 %v3499
      %v3501 = vextract.high.u32 %v3499
      %v3502 = vmul.u32 %v3495, %v3486
      %v3503 = vadd.s32 %v3498, %v3500
      %vm3504 = vc.u32 %v3498, %v3500
      %v3505 = vadd.s32 %v3501, 1
      %v3506 = vsel %vm3504, %v3505, %v3501
      %v3507 = vadd.s32 %v3502, %v3506
      %v3508 = vadd.s32 %v3507, 536870912
      %v3509 = vshrl.u32 %v3508, 30
      %v3510 = vshll.u32 %v3509, 30
      %v3511 = vsub.s32 %v3507, %v3510
      %vm3512 = vcmp.lt.s32.totalorder %v3511, 0
      %v3513 = vsub.s32 0, %v3511
      %v3514 = vsel %vm3512, %v3513, %v3511
      %v3515 = vclz %v3514
      %v3516 = vsub.s32 %v3515, 2
      %vm3517 = vcmp.gt.s32.totalorder 0, %v3516
      %v3518 = vsel %vm3517, 0, %v3516
      %v3519 = vsub.s32 32, %v3518
      %v3520 = vshll.u32 %v3511, %v3518
      %v3521 = vshrl.u32 %v3503, %v3519
      %v3522 = vor.u32 %v3520, %v3521
      %v3523 = vsub.s32 4294967266, %v3518
      %v3524 = vadd.s32 %v3523, 127
      %v3525 = vshll.u32 %v3524, 23
      %v3526 = vor.u32 4788187, %v3525
      %v3527 = vand.u32 2147483647, %v3526
      %v3529 = vcvt.s32.f32 %v3522
      %v3530 = vmul.f32 %v3529, %v3527
      %v3531 = vxor.u32 %v3530, 2147483648
      %v3532 = vsel %vm3449, %v3531, %v3530
      %v3533 = vsub.s32 4, %v3509
      %v3534 = vsel %vm3449, %v3533, %v3509
      %v3535 = vsel %vm3448, %v2585, %v3532
      %v3536 = vsel %vm3448, 0, %v3534
      %v3537 = vcosq.f32.pop %v3535
      %v3538 = vsinq.f32.pop %v3535
      %vm3539 = vweird.f32 %v2585
      %v3540 = vadd.s32 %v3536, 3
      %v3541 = vand.u32 %v3540, 3
      %vm3542 = vcmp.lt.s32.totalorder %v3541, 2
      %vm3543 = vcmp.eq.s32.totalorder %v3541, 0
      %v3544 = vxor.u32 %v3538, 2147483648
      %v3545 = vsel %vm3543, %v3537, %v3544
      %vm3546 = vcmp.eq.s32.totalorder %v3541, 2
      %v3547 = vxor.u32 %v3537, 2147483648
      %v3548 = vsel %vm3546, %v3547, %v3538
      %v3549 = vsel %vm3542, %v3545, %v3548
      %v3550 = vsel %vm3539, nan, %v3549
      %v3551 = vand.u32 2147483647, %v2588
      %vm3552 = vcmp.le.f32.partialorder %v3551, 0.7853982
      %vm3553 = vcmp.lt.s32.totalorder %v2588, 0
      %v3554 = vand.u32 %v2588, 2139095040
      %v3555 = vshrl.u32 %v3554, 23
      %v3556 = vsub.s32 %v3555, 127
      %v3557 = vand.u32 2147483647, %v2588
      %v3558 = vand.u32 %v3557, 8388607
      %v3559 = vor.u32 %v3558, 8388608
      %v3560 = vsub.s32 0, %v3559
      %v3561 = vadd.s32 %v3556, 1
      %vm3562 = vcmp.gt.s32.totalorder %v3561, 0
      %v3563 = vsel %vm3562, %v3561, 0
      %v3564 = vshrl.u32 %v3563, 5
      %v3565 = vand.u32 %v3563, 31
      %v3566 = vsub.s32 32, %v3565
      %v3567 = vshrl.u32 683565275, %v3566
      %v3568 = vshll.u32 683565275, %v3565
      %v3569 = vshrl.u32 2475754826, %v3566
      %v3570 = vor.u32 %v3568, %v3569
      %v3571 = vshll.u32 2475754826, %v3565
      %v3572 = vshrl.u32 2131351028, %v3566
      %v3573 = vor.u32 %v3571, %v3572
      %v3574 = vshll.u32 2131351028, %v3565
      %v3575 = vshrl.u32 2102212464, %v3566
      %v3576 = vor.u32 %v3574, %v3575
      %v3577 = vshll.u32 2102212464, %v3565
      %v3578 = vshrl.u32 920167782, %v3566
      %v3579 = vor.u32 %v3577, %v3578
      %v3580 = vshll.u32 920167782, %v3565
      %v3581 = vshrl.u32 1326507024, %v3566
      %v3582 = vor.u32 %v3580, %v3581
      %vm3583 = vcmp.lt.s32.totalorder %v3564, 1
      %vm3584 = vcmp.lt.s32.totalorder %v3564, 2
      %vm3585 = vcmp.lt.s32.totalorder %v3564, 3
      %vm3586 = vcmp.lt.s32.totalorder %v3564, 4
      %v3587 = vsel %vm3583, %v3567, %v3570
      %v3588 = vsel %vm3586, %v3576, 2102212464
      %v3589 = vsel %vm3585, %v3573, %v3588
      %v3590 = vsel %vm3584, %v3587, %v3589
      %v3591 = vsel %vm3583, %v3570, %v3573
      %v3592 = vsel %vm3586, %v3579, 920167782
      %v3593 = vsel %vm3585, %v3576, %v3592
      %v3594 = vsel %vm3584, %v3591, %v3593
      %v3595 = vsel %vm3583, %v3573, %v3576
      %v3596 = vsel %vm3586, %v3582, 1326507024
      %v3597 = vsel %vm3585, %v3579, %v3596
      %v3598 = vsel %vm3584, %v3595, %v3597
      %v3599 = vshll.u32 %v3559, 8
      %v3600 = vmul.u32.u64.compose %v3599, %v3598
      %v3601 = vextract.low.u32 %v3600
      %v3602 = vextract.high.u32 %v3600
      %v3603 = vmul.u32.u64.compose %v3599, %v3594
      %v3604 = vextract.low.u32 %v3603
      %v3605 = vextract.high.u32 %v3603
      %v3606 = vmul.u32 %v3599, %v3590
      %v3607 = vadd.s32 %v3602, %v3604
      %vm3608 = vc.u32 %v3602, %v3604
      %v3609 = vadd.s32 %v3605, 1
      %v3610 = vsel %vm3608, %v3609, %v3605
      %v3611 = vadd.s32 %v3606, %v3610
      %v3612 = vadd.s32 %v3611, 536870912
      %v3613 = vshrl.u32 %v3612, 30
      %v3614 = vshll.u32 %v3613, 30
      %v3615 = vsub.s32 %v3611, %v3614
      %vm3616 = vcmp.lt.s32.totalorder %v3615, 0
      %v3617 = vsub.s32 0, %v3615
      %v3618 = vsel %vm3616, %v3617, %v3615
      %v3619 = vclz %v3618
      %v3620 = vsub.s32 %v3619, 2
      %vm3621 = vcmp.gt.s32.totalorder 0, %v3620
      %v3622 = vsel %vm3621, 0, %v3620
      %v3623 = vsub.s32 32, %v3622
      %v3624 = vshll.u32 %v3615, %v3622
      %v3625 = vshrl.u32 %v3607, %v3623
      %v3626 = vor.u32 %v3624, %v3625
      %v3627 = vsub.s32 4294967266, %v3622
      %v3628 = vadd.s32 %v3627, 127
      %v3629 = vshll.u32 %v3628, 23
      %v3630 = vor.u32 4788187, %v3629
      %v3631 = vand.u32 2147483647, %v3630
      %v3633 = vcvt.s32.f32 %v3626
      %v3634 = vmul.f32 %v3633, %v3631
      %v3635 = vxor.u32 %v3634, 2147483648
      %v3636 = vsel %vm3553, %v3635, %v3634
      %v3637 = vsub.s32 4, %v3613
      %v3638 = vsel %vm3553, %v3637, %v3613
      %v3639 = vsel %vm3552, %v2588, %v3636
      %v3640 = vsel %vm3552, 0, %v3638
      %v3641 = vcosq.f32.pop %v3639
      %v3642 = vsinq.f32.pop %v3639
      %vm3643 = vweird.f32 %v2588
      %v3644 = vadd.s32 %v3640, 3
      %v3645 = vand.u32 %v3644, 3
      %vm3646 = vcmp.lt.s32.totalorder %v3645, 2
      %vm3647 = vcmp.eq.s32.totalorder %v3645, 0
      %v3648 = vxor.u32 %v3642, 2147483648
      %v3649 = vsel %vm3647, %v3641, %v3648
      %vm3650 = vcmp.eq.s32.totalorder %v3645, 2
      %v3651 = vxor.u32 %v3641, 2147483648
      %v3652 = vsel %vm3650, %v3651, %v3642
      %v3653 = vsel %vm3646, %v3649, %v3652
      %v3654 = vsel %vm3643, nan, %v3653
      %v3655 = vand.u32 2147483647, %v2593
      %vm3656 = vcmp.le.f32.partialorder %v3655, 0.7853982
      %vm3657 = vcmp.lt.s32.totalorder %v2593, 0
      %v3658 = vand.u32 %v2593, 2139095040
      %v3659 = vshrl.u32 %v3658, 23
      %v3660 = vsub.s32 %v3659, 127
      %v3661 = vand.u32 2147483647, %v2593
      %v3662 = vand.u32 %v3661, 8388607
      %v3663 = vor.u32 %v3662, 8388608
      %v3664 = vsub.s32 0, %v3663
      %v3665 = vadd.s32 %v3660, 1
      %vm3666 = vcmp.gt.s32.totalorder %v3665, 0
      %v3667 = vsel %vm3666, %v3665, 0
      %v3668 = vshrl.u32 %v3667, 5
      %v3669 = vand.u32 %v3667, 31
      %v3670 = vsub.s32 32, %v3669
      %v3671 = vshrl.u32 683565275, %v3670
      %v3672 = vshll.u32 683565275, %v3669
      %v3673 = vshrl.u32 2475754826, %v3670
      %v3674 = vor.u32 %v3672, %v3673
      %v3675 = vshll.u32 2475754826, %v3669
      %v3676 = vshrl.u32 2131351028, %v3670
      %v3677 = vor.u32 %v3675, %v3676
      %v3678 = vshll.u32 2131351028, %v3669
      %v3679 = vshrl.u32 2102212464, %v3670
      %v3680 = vor.u32 %v3678, %v3679
      %v3681 = vshll.u32 2102212464, %v3669
      %v3682 = vshrl.u32 920167782, %v3670
      %v3683 = vor.u32 %v3681, %v3682
      %v3684 = vshll.u32 920167782, %v3669
      %v3685 = vshrl.u32 1326507024, %v3670
      %v3686 = vor.u32 %v3684, %v3685
      %vm3687 = vcmp.lt.s32.totalorder %v3668, 1
      %vm3688 = vcmp.lt.s32.totalorder %v3668, 2
      %vm3689 = vcmp.lt.s32.totalorder %v3668, 3
      %vm3690 = vcmp.lt.s32.totalorder %v3668, 4
      %v3691 = vsel %vm3687, %v3671, %v3674
      %v3692 = vsel %vm3690, %v3680, 2102212464
      %v3693 = vsel %vm3689, %v3677, %v3692
      %v3694 = vsel %vm3688, %v3691, %v3693
      %v3695 = vsel %vm3687, %v3674, %v3677
      %v3696 = vsel %vm3690, %v3683, 920167782
      %v3697 = vsel %vm3689, %v3680, %v3696
      %v3698 = vsel %vm3688, %v3695, %v3697
      %v3699 = vsel %vm3687, %v3677, %v3680
      %v3700 = vsel %vm3690, %v3686, 1326507024
      %v3701 = vsel %vm3689, %v3683, %v3700
      %v3702 = vsel %vm3688, %v3699, %v3701
      %v3703 = vshll.u32 %v3663, 8
      %v3704 = vmul.u32.u64.compose %v3703, %v3702
      %v3705 = vextract.low.u32 %v3704
      %v3706 = vextract.high.u32 %v3704
      %v3707 = vmul.u32.u64.compose %v3703, %v3698
      %v3708 = vextract.low.u32 %v3707
      %v3709 = vextract.high.u32 %v3707
      %v3710 = vmul.u32 %v3703, %v3694
      %v3711 = vadd.s32 %v3706, %v3708
      %vm3712 = vc.u32 %v3706, %v3708
      %v3713 = vadd.s32 %v3709, 1
      %v3714 = vsel %vm3712, %v3713, %v3709
      %v3715 = vadd.s32 %v3710, %v3714
      %v3716 = vadd.s32 %v3715, 536870912
      %v3717 = vshrl.u32 %v3716, 30
      %v3718 = vshll.u32 %v3717, 30
      %v3719 = vsub.s32 %v3715, %v3718
      %vm3720 = vcmp.lt.s32.totalorder %v3719, 0
      %v3721 = vsub.s32 0, %v3719
      %v3722 = vsel %vm3720, %v3721, %v3719
      %v3723 = vclz %v3722
      %v3724 = vsub.s32 %v3723, 2
      %vm3725 = vcmp.gt.s32.totalorder 0, %v3724
      %v3726 = vsel %vm3725, 0, %v3724
      %v3727 = vsub.s32 32, %v3726
      %v3728 = vshll.u32 %v3719, %v3726
      %v3729 = vshrl.u32 %v3711, %v3727
      %v3730 = vor.u32 %v3728, %v3729
      %v3731 = vsub.s32 4294967266, %v3726
      %v3732 = vadd.s32 %v3731, 127
      %v3733 = vshll.u32 %v3732, 23
      %v3734 = vor.u32 4788187, %v3733
      %v3735 = vand.u32 2147483647, %v3734
      %v3737 = vcvt.s32.f32 %v3730
      %v3738 = vmul.f32 %v3737, %v3735
      %v3739 = vxor.u32 %v3738, 2147483648
      %v3740 = vsel %vm3657, %v3739, %v3738
      %v3741 = vsub.s32 4, %v3717
      %v3742 = vsel %vm3657, %v3741, %v3717
      %v3743 = vsel %vm3656, %v2593, %v3740
      %v3744 = vsel %vm3656, 0, %v3742
      %v3745 = vcosq.f32.pop %v3743
      %v3746 = vsinq.f32.pop %v3743
      %vm3747 = vweird.f32 %v2593
      %v3748 = vadd.s32 %v3744, 3
      %v3749 = vand.u32 %v3748, 3
      %vm3750 = vcmp.lt.s32.totalorder %v3749, 2
      %vm3751 = vcmp.eq.s32.totalorder %v3749, 0
      %v3752 = vxor.u32 %v3746, 2147483648
      %v3753 = vsel %vm3751, %v3745, %v3752
      %vm3754 = vcmp.eq.s32.totalorder %v3749, 2
      %v3755 = vxor.u32 %v3745, 2147483648
      %v3756 = vsel %vm3754, %v3755, %v3746
      %v3757 = vsel %vm3750, %v3753, %v3756
      %v3758 = vsel %vm3747, nan, %v3757
      %v3759 = vand.u32 2147483647, %v2596
      %vm3760 = vcmp.le.f32.partialorder %v3759, 0.7853982
      %vm3761 = vcmp.lt.s32.totalorder %v2596, 0
      %v3762 = vand.u32 %v2596, 2139095040
      %v3763 = vshrl.u32 %v3762, 23
      %v3764 = vsub.s32 %v3763, 127
      %v3765 = vand.u32 2147483647, %v2596
      %v3766 = vand.u32 %v3765, 8388607
      %v3767 = vor.u32 %v3766, 8388608
      %v3768 = vsub.s32 0, %v3767
      %v3769 = vadd.s32 %v3764, 1
      %vm3770 = vcmp.gt.s32.totalorder %v3769, 0
      %v3771 = vsel %vm3770, %v3769, 0
      %v3772 = vshrl.u32 %v3771, 5
      %v3773 = vand.u32 %v3771, 31
      %v3774 = vsub.s32 32, %v3773
      %v3775 = vshrl.u32 683565275, %v3774
      %v3776 = vshll.u32 683565275, %v3773
      %v3777 = vshrl.u32 2475754826, %v3774
      %v3778 = vor.u32 %v3776, %v3777
      %v3779 = vshll.u32 2475754826, %v3773
      %v3780 = vshrl.u32 2131351028, %v3774
      %v3781 = vor.u32 %v3779, %v3780
      %v3782 = vshll.u32 2131351028, %v3773
      %v3783 = vshrl.u32 2102212464, %v3774
      %v3784 = vor.u32 %v3782, %v3783
      %v3785 = vshll.u32 2102212464, %v3773
      %v3786 = vshrl.u32 920167782, %v3774
      %v3787 = vor.u32 %v3785, %v3786
      %v3788 = vshll.u32 920167782, %v3773
      %v3789 = vshrl.u32 1326507024, %v3774
      %v3790 = vor.u32 %v3788, %v3789
      %vm3791 = vcmp.lt.s32.totalorder %v3772, 1
      %vm3792 = vcmp.lt.s32.totalorder %v3772, 2
      %vm3793 = vcmp.lt.s32.totalorder %v3772, 3
      %vm3794 = vcmp.lt.s32.totalorder %v3772, 4
      %v3795 = vsel %vm3791, %v3775, %v3778
      %v3796 = vsel %vm3794, %v3784, 2102212464
      %v3797 = vsel %vm3793, %v3781, %v3796
      %v3798 = vsel %vm3792, %v3795, %v3797
      %v3799 = vsel %vm3791, %v3778, %v3781
      %v3800 = vsel %vm3794, %v3787, 920167782
      %v3801 = vsel %vm3793, %v3784, %v3800
      %v3802 = vsel %vm3792, %v3799, %v3801
      %v3803 = vsel %vm3791, %v3781, %v3784
      %v3804 = vsel %vm3794, %v3790, 1326507024
      %v3805 = vsel %vm3793, %v3787, %v3804
      %v3806 = vsel %vm3792, %v3803, %v3805
      %v3807 = vshll.u32 %v3767, 8
      %v3808 = vmul.u32.u64.compose %v3807, %v3806
      %v3809 = vextract.low.u32 %v3808
      %v3810 = vextract.high.u32 %v3808
      %v3811 = vmul.u32.u64.compose %v3807, %v3802
      %v3812 = vextract.low.u32 %v3811
      %v3813 = vextract.high.u32 %v3811
      %v3814 = vmul.u32 %v3807, %v3798
      %v3815 = vadd.s32 %v3810, %v3812
      %vm3816 = vc.u32 %v3810, %v3812
      %v3817 = vadd.s32 %v3813, 1
      %v3818 = vsel %vm3816, %v3817, %v3813
      %v3819 = vadd.s32 %v3814, %v3818
      %v3820 = vadd.s32 %v3819, 536870912
      %v3821 = vshrl.u32 %v3820, 30
      %v3822 = vshll.u32 %v3821, 30
      %v3823 = vsub.s32 %v3819, %v3822
      %vm3824 = vcmp.lt.s32.totalorder %v3823, 0
      %v3825 = vsub.s32 0, %v3823
      %v3826 = vsel %vm3824, %v3825, %v3823
      %v3827 = vclz %v3826
      %v3828 = vsub.s32 %v3827, 2
      %vm3829 = vcmp.gt.s32.totalorder 0, %v3828
      %v3830 = vsel %vm3829, 0, %v3828
      %v3831 = vsub.s32 32, %v3830
      %v3832 = vshll.u32 %v3823, %v3830
      %v3833 = vshrl.u32 %v3815, %v3831
      %v3834 = vor.u32 %v3832, %v3833
      %v3835 = vsub.s32 4294967266, %v3830
      %v3836 = vadd.s32 %v3835, 127
      %v3837 = vshll.u32 %v3836, 23
      %v3838 = vor.u32 4788187, %v3837
      %v3839 = vand.u32 2147483647, %v3838
      %v3841 = vcvt.s32.f32 %v3834
      %v3842 = vmul.f32 %v3841, %v3839
      %v3843 = vxor.u32 %v3842, 2147483648
      %v3844 = vsel %vm3761, %v3843, %v3842
      %v3845 = vsub.s32 4, %v3821
      %v3846 = vsel %vm3761, %v3845, %v3821
      %v3847 = vsel %vm3760, %v2596, %v3844
      %v3848 = vsel %vm3760, 0, %v3846
      %v3849 = vcosq.f32.pop %v3847
      %v3850 = vsinq.f32.pop %v3847
      %vm3851 = vweird.f32 %v2596
      %v3852 = vadd.s32 %v3848, 3
      %v3853 = vand.u32 %v3852, 3
      %vm3854 = vcmp.lt.s32.totalorder %v3853, 2
      %vm3855 = vcmp.eq.s32.totalorder %v3853, 0
      %v3856 = vxor.u32 %v3850, 2147483648
      %v3857 = vsel %vm3855, %v3849, %v3856
      %vm3858 = vcmp.eq.s32.totalorder %v3853, 2
      %v3859 = vxor.u32 %v3849, 2147483648
      %v3860 = vsel %vm3858, %v3859, %v3850
      %v3861 = vsel %vm3854, %v3857, %v3860
      %v3862 = vsel %vm3851, nan, %v3861
      %v3863 = vand.u32 2147483647, %v2601
      %vm3864 = vcmp.le.f32.partialorder %v3863, 0.7853982
      %vm3865 = vcmp.lt.s32.totalorder %v2601, 0
      %v3866 = vand.u32 %v2601, 2139095040
      %v3867 = vshrl.u32 %v3866, 23
      %v3868 = vsub.s32 %v3867, 127
      %v3869 = vand.u32 2147483647, %v2601
      %v3870 = vand.u32 %v3869, 8388607
      %v3871 = vor.u32 %v3870, 8388608
      %v3872 = vsub.s32 0, %v3871
      %v3873 = vadd.s32 %v3868, 1
      %vm3874 = vcmp.gt.s32.totalorder %v3873, 0
      %v3875 = vsel %vm3874, %v3873, 0
      %v3876 = vshrl.u32 %v3875, 5
      %v3877 = vand.u32 %v3875, 31
      %v3878 = vsub.s32 32, %v3877
      %v3879 = vshrl.u32 683565275, %v3878
      %v3880 = vshll.u32 683565275, %v3877
      %v3881 = vshrl.u32 2475754826, %v3878
      %v3882 = vor.u32 %v3880, %v3881
      %v3883 = vshll.u32 2475754826, %v3877
      %v3884 = vshrl.u32 2131351028, %v3878
      %v3885 = vor.u32 %v3883, %v3884
      %v3886 = vshll.u32 2131351028, %v3877
      %v3887 = vshrl.u32 2102212464, %v3878
      %v3888 = vor.u32 %v3886, %v3887
      %v3889 = vshll.u32 2102212464, %v3877
      %v3890 = vshrl.u32 920167782, %v3878
      %v3891 = vor.u32 %v3889, %v3890
      %v3892 = vshll.u32 920167782, %v3877
      %v3893 = vshrl.u32 1326507024, %v3878
      %v3894 = vor.u32 %v3892, %v3893
      %vm3895 = vcmp.lt.s32.totalorder %v3876, 1
      %vm3896 = vcmp.lt.s32.totalorder %v3876, 2
      %vm3897 = vcmp.lt.s32.totalorder %v3876, 3
      %vm3898 = vcmp.lt.s32.totalorder %v3876, 4
      %v3899 = vsel %vm3895, %v3879, %v3882
      %v3900 = vsel %vm3898, %v3888, 2102212464
      %v3901 = vsel %vm3897, %v3885, %v3900
      %v3902 = vsel %vm3896, %v3899, %v3901
      %v3903 = vsel %vm3895, %v3882, %v3885
      %v3904 = vsel %vm3898, %v3891, 920167782
      %v3905 = vsel %vm3897, %v3888, %v3904
      %v3906 = vsel %vm3896, %v3903, %v3905
      %v3907 = vsel %vm3895, %v3885, %v3888
      %v3908 = vsel %vm3898, %v3894, 1326507024
      %v3909 = vsel %vm3897, %v3891, %v3908
      %v3910 = vsel %vm3896, %v3907, %v3909
      %v3911 = vshll.u32 %v3871, 8
      %v3912 = vmul.u32.u64.compose %v3911, %v3910
      %v3913 = vextract.low.u32 %v3912
      %v3914 = vextract.high.u32 %v3912
      %v3915 = vmul.u32.u64.compose %v3911, %v3906
      %v3916 = vextract.low.u32 %v3915
      %v3917 = vextract.high.u32 %v3915
      %v3918 = vmul.u32 %v3911, %v3902
      %v3919 = vadd.s32 %v3914, %v3916
      %vm3920 = vc.u32 %v3914, %v3916
      %v3921 = vadd.s32 %v3917, 1
      %v3922 = vsel %vm3920, %v3921, %v3917
      %v3923 = vadd.s32 %v3918, %v3922
      %v3924 = vadd.s32 %v3923, 536870912
      %v3925 = vshrl.u32 %v3924, 30
      %v3926 = vshll.u32 %v3925, 30
      %v3927 = vsub.s32 %v3923, %v3926
      %vm3928 = vcmp.lt.s32.totalorder %v3927, 0
      %v3929 = vsub.s32 0, %v3927
      %v3930 = vsel %vm3928, %v3929, %v3927
      %v3931 = vclz %v3930
      %v3932 = vsub.s32 %v3931, 2
      %vm3933 = vcmp.gt.s32.totalorder 0, %v3932
      %v3934 = vsel %vm3933, 0, %v3932
      %v3935 = vsub.s32 32, %v3934
      %v3936 = vshll.u32 %v3927, %v3934
      %v3937 = vshrl.u32 %v3919, %v3935
      %v3938 = vor.u32 %v3936, %v3937
      %v3939 = vsub.s32 4294967266, %v3934
      %v3940 = vadd.s32 %v3939, 127
      %v3941 = vshll.u32 %v3940, 23
      %v3942 = vor.u32 4788187, %v3941
      %v3943 = vand.u32 2147483647, %v3942
      %v3945 = vcvt.s32.f32 %v3938
      %v3946 = vmul.f32 %v3945, %v3943
      %v3947 = vxor.u32 %v3946, 2147483648
      %v3948 = vsel %vm3865, %v3947, %v3946
      %v3949 = vsub.s32 4, %v3925
      %v3950 = vsel %vm3865, %v3949, %v3925
      %v3951 = vsel %vm3864, %v2601, %v3948
      %v3952 = vsel %vm3864, 0, %v3950
      %v3953 = vcosq.f32.pop %v3951
      %v3954 = vsinq.f32.pop %v3951
      %vm3955 = vweird.f32 %v2601
      %v3956 = vadd.s32 %v3952, 3
      %v3957 = vand.u32 %v3956, 3
      %vm3958 = vcmp.lt.s32.totalorder %v3957, 2
      %vm3959 = vcmp.eq.s32.totalorder %v3957, 0
      %v3960 = vxor.u32 %v3954, 2147483648
      %v3961 = vsel %vm3959, %v3953, %v3960
      %vm3962 = vcmp.eq.s32.totalorder %v3957, 2
      %v3963 = vxor.u32 %v3953, 2147483648
      %v3964 = vsel %vm3962, %v3963, %v3954
      %v3965 = vsel %vm3958, %v3961, %v3964
      %v3966 = vsel %vm3955, nan, %v3965
      %v3967 = vand.u32 2147483647, %v2604
      %vm3968 = vcmp.le.f32.partialorder %v3967, 0.7853982
      %vm3969 = vcmp.lt.s32.totalorder %v2604, 0
      %v3970 = vand.u32 %v2604, 2139095040
      %v3971 = vshrl.u32 %v3970, 23
      %v3972 = vsub.s32 %v3971, 127
      %v3973 = vand.u32 2147483647, %v2604
      %v3974 = vand.u32 %v3973, 8388607
      %v3975 = vor.u32 %v3974, 8388608
      %v3976 = vsub.s32 0, %v3975
      %v3977 = vadd.s32 %v3972, 1
      %vm3978 = vcmp.gt.s32.totalorder %v3977, 0
      %v3979 = vsel %vm3978, %v3977, 0
      %v3980 = vshrl.u32 %v3979, 5
      %v3981 = vand.u32 %v3979, 31
      %v3982 = vsub.s32 32, %v3981
      %v3983 = vshrl.u32 683565275, %v3982
      %v3984 = vshll.u32 683565275, %v3981
      %v3985 = vshrl.u32 2475754826, %v3982
      %v3986 = vor.u32 %v3984, %v3985
      %v3987 = vshll.u32 2475754826, %v3981
      %v3988 = vshrl.u32 2131351028, %v3982
      %v3989 = vor.u32 %v3987, %v3988
      %v3990 = vshll.u32 2131351028, %v3981
      %v3991 = vshrl.u32 2102212464, %v3982
      %v3992 = vor.u32 %v3990, %v3991
      %v3993 = vshll.u32 2102212464, %v3981
      %v3994 = vshrl.u32 920167782, %v3982
      %v3995 = vor.u32 %v3993, %v3994
      %v3996 = vshll.u32 920167782, %v3981
      %v3997 = vshrl.u32 1326507024, %v3982
      %v3998 = vor.u32 %v3996, %v3997
      %vm3999 = vcmp.lt.s32.totalorder %v3980, 1
      %vm4000 = vcmp.lt.s32.totalorder %v3980, 2
      %vm4001 = vcmp.lt.s32.totalorder %v3980, 3
      %vm4002 = vcmp.lt.s32.totalorder %v3980, 4
      %v4003 = vsel %vm3999, %v3983, %v3986
      %v4004 = vsel %vm4002, %v3992, 2102212464
      %v4005 = vsel %vm4001, %v3989, %v4004
      %v4006 = vsel %vm4000, %v4003, %v4005
      %v4007 = vsel %vm3999, %v3986, %v3989
      %v4008 = vsel %vm4002, %v3995, 920167782
      %v4009 = vsel %vm4001, %v3992, %v4008
      %v4010 = vsel %vm4000, %v4007, %v4009
      %v4011 = vsel %vm3999, %v3989, %v3992
      %v4012 = vsel %vm4002, %v3998, 1326507024
      %v4013 = vsel %vm4001, %v3995, %v4012
      %v4014 = vsel %vm4000, %v4011, %v4013
      %v4015 = vshll.u32 %v3975, 8
      %v4016 = vmul.u32.u64.compose %v4015, %v4014
      %v4017 = vextract.low.u32 %v4016
      %v4018 = vextract.high.u32 %v4016
      %v4019 = vmul.u32.u64.compose %v4015, %v4010
      %v4020 = vextract.low.u32 %v4019
      %v4021 = vextract.high.u32 %v4019
      %v4022 = vmul.u32 %v4015, %v4006
      %v4023 = vadd.s32 %v4018, %v4020
      %vm4024 = vc.u32 %v4018, %v4020
      %v4025 = vadd.s32 %v4021, 1
      %v4026 = vsel %vm4024, %v4025, %v4021
      %v4027 = vadd.s32 %v4022, %v4026
      %v4028 = vadd.s32 %v4027, 536870912
      %v4029 = vshrl.u32 %v4028, 30
      %v4030 = vshll.u32 %v4029, 30
      %v4031 = vsub.s32 %v4027, %v4030
      %vm4032 = vcmp.lt.s32.totalorder %v4031, 0
      %v4033 = vsub.s32 0, %v4031
      %v4034 = vsel %vm4032, %v4033, %v4031
      %v4035 = vclz %v4034
      %v4036 = vsub.s32 %v4035, 2
      %vm4037 = vcmp.gt.s32.totalorder 0, %v4036
      %v4038 = vsel %vm4037, 0, %v4036
      %v4039 = vsub.s32 32, %v4038
      %v4040 = vshll.u32 %v4031, %v4038
      %v4041 = vshrl.u32 %v4023, %v4039
      %v4042 = vor.u32 %v4040, %v4041
      %v4043 = vsub.s32 4294967266, %v4038
      %v4044 = vadd.s32 %v4043, 127
      %v4045 = vshll.u32 %v4044, 23
      %v4046 = vor.u32 4788187, %v4045
      %v4047 = vand.u32 2147483647, %v4046
      %v4049 = vcvt.s32.f32 %v4042
      %v4050 = vmul.f32 %v4049, %v4047
      %v4051 = vxor.u32 %v4050, 2147483648
      %v4052 = vsel %vm3969, %v4051, %v4050
      %v4053 = vsub.s32 4, %v4029
      %v4054 = vsel %vm3969, %v4053, %v4029
      %v4055 = vsel %vm3968, %v2604, %v4052
      %v4056 = vsel %vm3968, 0, %v4054
      %v4057 = vcosq.f32.pop %v4055
      %v4058 = vsinq.f32.pop %v4055
      %vm4059 = vweird.f32 %v2604
      %v4060 = vadd.s32 %v4056, 3
      %v4061 = vand.u32 %v4060, 3
      %vm4062 = vcmp.lt.s32.totalorder %v4061, 2
      %vm4063 = vcmp.eq.s32.totalorder %v4061, 0
      %v4064 = vxor.u32 %v4058, 2147483648
      %v4065 = vsel %vm4063, %v4057, %v4064
      %vm4066 = vcmp.eq.s32.totalorder %v4061, 2
      %v4067 = vxor.u32 %v4057, 2147483648
      %v4068 = vsel %vm4066, %v4067, %v4058
      %v4069 = vsel %vm4062, %v4065, %v4068
      %v4070 = vsel %vm4059, nan, %v4069
      %v4071 = vand.u32 2147483647, %v2609
      %vm4072 = vcmp.le.f32.partialorder %v4071, 0.7853982
      %vm4073 = vcmp.lt.s32.totalorder %v2609, 0
      %v4074 = vand.u32 %v2609, 2139095040
      %v4075 = vshrl.u32 %v4074, 23
      %v4076 = vsub.s32 %v4075, 127
      %v4077 = vand.u32 2147483647, %v2609
      %v4078 = vand.u32 %v4077, 8388607
      %v4079 = vor.u32 %v4078, 8388608
      %v4080 = vsub.s32 0, %v4079
      %v4081 = vadd.s32 %v4076, 1
      %vm4082 = vcmp.gt.s32.totalorder %v4081, 0
      %v4083 = vsel %vm4082, %v4081, 0
      %v4084 = vshrl.u32 %v4083, 5
      %v4085 = vand.u32 %v4083, 31
      %v4086 = vsub.s32 32, %v4085
      %v4087 = vshrl.u32 683565275, %v4086
      %v4088 = vshll.u32 683565275, %v4085
      %v4089 = vshrl.u32 2475754826, %v4086
      %v4090 = vor.u32 %v4088, %v4089
      %v4091 = vshll.u32 2475754826, %v4085
      %v4092 = vshrl.u32 2131351028, %v4086
      %v4093 = vor.u32 %v4091, %v4092
      %v4094 = vshll.u32 2131351028, %v4085
      %v4095 = vshrl.u32 2102212464, %v4086
      %v4096 = vor.u32 %v4094, %v4095
      %v4097 = vshll.u32 2102212464, %v4085
      %v4098 = vshrl.u32 920167782, %v4086
      %v4099 = vor.u32 %v4097, %v4098
      %v4100 = vshll.u32 920167782, %v4085
      %v4101 = vshrl.u32 1326507024, %v4086
      %v4102 = vor.u32 %v4100, %v4101
      %vm4103 = vcmp.lt.s32.totalorder %v4084, 1
      %vm4104 = vcmp.lt.s32.totalorder %v4084, 2
      %vm4105 = vcmp.lt.s32.totalorder %v4084, 3
      %vm4106 = vcmp.lt.s32.totalorder %v4084, 4
      %v4107 = vsel %vm4103, %v4087, %v4090
      %v4108 = vsel %vm4106, %v4096, 2102212464
      %v4109 = vsel %vm4105, %v4093, %v4108
      %v4110 = vsel %vm4104, %v4107, %v4109
      %v4111 = vsel %vm4103, %v4090, %v4093
      %v4112 = vsel %vm4106, %v4099, 920167782
      %v4113 = vsel %vm4105, %v4096, %v4112
      %v4114 = vsel %vm4104, %v4111, %v4113
      %v4115 = vsel %vm4103, %v4093, %v4096
      %v4116 = vsel %vm4106, %v4102, 1326507024
      %v4117 = vsel %vm4105, %v4099, %v4116
      %v4118 = vsel %vm4104, %v4115, %v4117
      %v4119 = vshll.u32 %v4079, 8
      %v4120 = vmul.u32.u64.compose %v4119, %v4118
      %v4121 = vextract.low.u32 %v4120
      %v4122 = vextract.high.u32 %v4120
      %v4123 = vmul.u32.u64.compose %v4119, %v4114
      %v4124 = vextract.low.u32 %v4123
      %v4125 = vextract.high.u32 %v4123
      %v4126 = vmul.u32 %v4119, %v4110
      %v4127 = vadd.s32 %v4122, %v4124
      %vm4128 = vc.u32 %v4122, %v4124
      %v4129 = vadd.s32 %v4125, 1
      %v4130 = vsel %vm4128, %v4129, %v4125
      %v4131 = vadd.s32 %v4126, %v4130
      %v4132 = vadd.s32 %v4131, 536870912
      %v4133 = vshrl.u32 %v4132, 30
      %v4134 = vshll.u32 %v4133, 30
      %v4135 = vsub.s32 %v4131, %v4134
      %vm4136 = vcmp.lt.s32.totalorder %v4135, 0
      %v4137 = vsub.s32 0, %v4135
      %v4138 = vsel %vm4136, %v4137, %v4135
      %v4139 = vclz %v4138
      %v4140 = vsub.s32 %v4139, 2
      %vm4141 = vcmp.gt.s32.totalorder 0, %v4140
      %v4142 = vsel %vm4141, 0, %v4140
      %v4143 = vsub.s32 32, %v4142
      %v4144 = vshll.u32 %v4135, %v4142
      %v4145 = vshrl.u32 %v4127, %v4143
      %v4146 = vor.u32 %v4144, %v4145
      %v4147 = vsub.s32 4294967266, %v4142
      %v4148 = vadd.s32 %v4147, 127
      %v4149 = vshll.u32 %v4148, 23
      %v4150 = vor.u32 4788187, %v4149
      %v4151 = vand.u32 2147483647, %v4150
      %v4153 = vcvt.s32.f32 %v4146
      %v4154 = vmul.f32 %v4153, %v4151
      %v4155 = vxor.u32 %v4154, 2147483648
      %v4156 = vsel %vm4073, %v4155, %v4154
      %v4157 = vsub.s32 4, %v4133
      %v4158 = vsel %vm4073, %v4157, %v4133
      %v4159 = vsel %vm4072, %v2609, %v4156
      %v4160 = vsel %vm4072, 0, %v4158
      %v4161 = vcosq.f32.pop %v4159
      %v4162 = vsinq.f32.pop %v4159
      %vm4163 = vweird.f32 %v2609
      %v4164 = vadd.s32 %v4160, 3
      %v4165 = vand.u32 %v4164, 3
      %vm4166 = vcmp.lt.s32.totalorder %v4165, 2
      %vm4167 = vcmp.eq.s32.totalorder %v4165, 0
      %v4168 = vxor.u32 %v4162, 2147483648
      %v4169 = vsel %vm4167, %v4161, %v4168
      %vm4170 = vcmp.eq.s32.totalorder %v4165, 2
      %v4171 = vxor.u32 %v4161, 2147483648
      %v4172 = vsel %vm4170, %v4171, %v4162
      %v4173 = vsel %vm4166, %v4169, %v4172
      %v4174 = vsel %vm4163, nan, %v4173
      %v4175 = vand.u32 2147483647, %v2612
      %vm4176 = vcmp.le.f32.partialorder %v4175, 0.7853982
      %vm4177 = vcmp.lt.s32.totalorder %v2612, 0
      %v4178 = vand.u32 %v2612, 2139095040
      %v4179 = vshrl.u32 %v4178, 23
      %v4180 = vsub.s32 %v4179, 127
      %v4181 = vand.u32 2147483647, %v2612
      %v4182 = vand.u32 %v4181, 8388607
      %v4183 = vor.u32 %v4182, 8388608
      %v4184 = vsub.s32 0, %v4183
      %v4185 = vadd.s32 %v4180, 1
      %vm4186 = vcmp.gt.s32.totalorder %v4185, 0
      %v4187 = vsel %vm4186, %v4185, 0
      %v4188 = vshrl.u32 %v4187, 5
      %v4189 = vand.u32 %v4187, 31
      %v4190 = vsub.s32 32, %v4189
      %v4191 = vshrl.u32 683565275, %v4190
      %v4192 = vshll.u32 683565275, %v4189
      %v4193 = vshrl.u32 2475754826, %v4190
      %v4194 = vor.u32 %v4192, %v4193
      %v4195 = vshll.u32 2475754826, %v4189
      %v4196 = vshrl.u32 2131351028, %v4190
      %v4197 = vor.u32 %v4195, %v4196
      %v4198 = vshll.u32 2131351028, %v4189
      %v4199 = vshrl.u32 2102212464, %v4190
      %v4200 = vor.u32 %v4198, %v4199
      %v4201 = vshll.u32 2102212464, %v4189
      %v4202 = vshrl.u32 920167782, %v4190
      %v4203 = vor.u32 %v4201, %v4202
      %v4204 = vshll.u32 920167782, %v4189
      %v4205 = vshrl.u32 1326507024, %v4190
      %v4206 = vor.u32 %v4204, %v4205
      %vm4207 = vcmp.lt.s32.totalorder %v4188, 1
      %vm4208 = vcmp.lt.s32.totalorder %v4188, 2
      %vm4209 = vcmp.lt.s32.totalorder %v4188, 3
      %vm4210 = vcmp.lt.s32.totalorder %v4188, 4
      %v4211 = vsel %vm4207, %v4191, %v4194
      %v4212 = vsel %vm4210, %v4200, 2102212464
      %v4213 = vsel %vm4209, %v4197, %v4212
      %v4214 = vsel %vm4208, %v4211, %v4213
      %v4215 = vsel %vm4207, %v4194, %v4197
      %v4216 = vsel %vm4210, %v4203, 920167782
      %v4217 = vsel %vm4209, %v4200, %v4216
      %v4218 = vsel %vm4208, %v4215, %v4217
      %v4219 = vsel %vm4207, %v4197, %v4200
      %v4220 = vsel %vm4210, %v4206, 1326507024
      %v4221 = vsel %vm4209, %v4203, %v4220
      %v4222 = vsel %vm4208, %v4219, %v4221
      %v4223 = vshll.u32 %v4183, 8
      %v4224 = vmul.u32.u64.compose %v4223, %v4222
      %v4225 = vextract.low.u32 %v4224
      %v4226 = vextract.high.u32 %v4224
      %v4227 = vmul.u32.u64.compose %v4223, %v4218
      %v4228 = vextract.low.u32 %v4227
      %v4229 = vextract.high.u32 %v4227
      %v4230 = vmul.u32 %v4223, %v4214
      %v4231 = vadd.s32 %v4226, %v4228
      %vm4232 = vc.u32 %v4226, %v4228
      %v4233 = vadd.s32 %v4229, 1
      %v4234 = vsel %vm4232, %v4233, %v4229
      %v4235 = vadd.s32 %v4230, %v4234
      %v4236 = vadd.s32 %v4235, 536870912
      %v4237 = vshrl.u32 %v4236, 30
      %v4238 = vshll.u32 %v4237, 30
      %v4239 = vsub.s32 %v4235, %v4238
      %vm4240 = vcmp.lt.s32.totalorder %v4239, 0
      %v4241 = vsub.s32 0, %v4239
      %v4242 = vsel %vm4240, %v4241, %v4239
      %v4243 = vclz %v4242
      %v4244 = vsub.s32 %v4243, 2
      %vm4245 = vcmp.gt.s32.totalorder 0, %v4244
      %v4246 = vsel %vm4245, 0, %v4244
      %v4247 = vsub.s32 32, %v4246
      %v4248 = vshll.u32 %v4239, %v4246
      %v4249 = vshrl.u32 %v4231, %v4247
      %v4250 = vor.u32 %v4248, %v4249
      %v4251 = vsub.s32 4294967266, %v4246
      %v4252 = vadd.s32 %v4251, 127
      %v4253 = vshll.u32 %v4252, 23
      %v4254 = vor.u32 4788187, %v4253
      %v4255 = vand.u32 2147483647, %v4254
      %v4257 = vcvt.s32.f32 %v4250
      %v4258 = vmul.f32 %v4257, %v4255
      %v4259 = vxor.u32 %v4258, 2147483648
      %v4260 = vsel %vm4177, %v4259, %v4258
      %v4261 = vsub.s32 4, %v4237
      %v4262 = vsel %vm4177, %v4261, %v4237
      %v4263 = vsel %vm4176, %v2612, %v4260
      %v4264 = vsel %vm4176, 0, %v4262
      %v4265 = vcosq.f32.pop %v4263
      %v4266 = vsinq.f32.pop %v4263
      %vm4267 = vweird.f32 %v2612
      %v4268 = vadd.s32 %v4264, 3
      %v4269 = vand.u32 %v4268, 3
      %vm4270 = vcmp.lt.s32.totalorder %v4269, 2
      %vm4271 = vcmp.eq.s32.totalorder %v4269, 0
      %v4272 = vxor.u32 %v4266, 2147483648
      %v4273 = vsel %vm4271, %v4265, %v4272
      %vm4274 = vcmp.eq.s32.totalorder %v4269, 2
      %v4275 = vxor.u32 %v4265, 2147483648
      %v4276 = vsel %vm4274, %v4275, %v4266
      %v4277 = vsel %vm4270, %v4273, %v4276
      %v4278 = vsel %vm4267, nan, %v4277
      %v4279 = vpack.c.bf16 %v2822, %v2718
      %v4280 = vpack.c.bf16 %v3030, %v2926
      %v4281 = vpack.c.bf16 %v3238, %v3134
      %v4282 = vpack.c.bf16 %v3446, %v3342
      %v4283 = vpack.c.bf16 %v3654, %v3550
      %v4284 = vpack.c.bf16 %v3862, %v3758
      %v4285 = vpack.c.bf16 %v4070, %v3966
      %v4286 = vpack.c.bf16 %v4278, %v4174
      %s4287 = scalar_lea.vmem %s5, 16
      %v4288 = vld [vmem:[%s4287] sm:$0xf]
      %v4289 = vld [vmem:[%s4287 + $0x4] sm:$0xf]
      %v4290 = vld [vmem:[%s4287 + $0x8] sm:$0xf]
      %v4291 = vld [vmem:[%s4287 + $0xc] sm:$0xf]
      %s4292 = scalar_lea.vmem %s6, 1
      %v4293 = vld [vmem:[%s4292] sm:$0x1]
      %v4295 = vlaneseq
      %v4296 = vshrl.u32 %v4295, 7
      %v4297 = vsub.s32 0, %v4296
      %v4298 = vrot.slane %v4293, %v4297
      %v4304 = vunpack.c.l.b16 %v4288
      %v4305 = vunpack.c.l.b16 %v4289
      %v4306 = vunpack.c.l.b16 %v4290
      %v4307 = vunpack.c.l.b16 %v4291
      %v4308 = vpack.c.b16 %v4305, %v4304
      %v4309 = vpack.c.b16 %v4307, %v4306
      %v4313 = vsel %vm2493, %v4279, 0
      %v4316 = vsel %vm2493, %v4280, 0
      %v4319 = vsel %vm2493, %v4281, 0
      %v4322 = vsel %vm2493, %v4282, 0
      %v4325 = vsel %vm2493, %v4283, 0
      %v4328 = vsel %vm2493, %v4284, 0
      %v4331 = vsel %vm2493, %v4285, 0
      %v4334 = vsel %vm2493, %v4286, 0
      %4336 = vmatprep.subr.bf16.mxu0 0
      %4337 = vmatpush1.bf16.msra.mxu0 %v4308
      %4338 = vmatprep.subr.bf16.mxu0 0
      %4339 = vmatpush1.bf16.msra.mxu0 %v4309
      %4340 = vmatprep.subr.bf16.mxu0 0
      %4341 = vmatpush1.bf16.msra.mxu0 0
      %4342 = vmatprep.subr.bf16.mxu0 0
      %4343 = vmatpush1.bf16.msra.mxu0 0
      %4344 = vmatprep.subr.bf16.mxu0 0
      %4345 = vmatpush1.bf16.msra.mxu0 0
      %4346 = vmatprep.subr.bf16.mxu0 0
      %4347 = vmatpush1.bf16.msra.mxu0 0
      %4348 = vmatprep.subr.bf16.mxu0 0
      %4349 = vmatpush1.bf16.msra.mxu0 0
      %4350 = vmatprep.subr.bf16.mxu0 0
      %4351 = vmatpush1.bf16.msra.mxu0 0
      %4352 = vmatprep.subr.bf16.mxu0 0
      %4353 = vmatpush1.bf16.msra.mxu0 0
      %4354 = vmatprep.subr.bf16.mxu0 0
      %4355 = vmatpush1.bf16.msra.mxu0 0
      %4356 = vmatprep.subr.bf16.mxu0 0
      %4357 = vmatpush1.bf16.msra.mxu0 0
      %4358 = vmatprep.subr.bf16.mxu0 0
      %4359 = vmatpush1.bf16.msra.mxu0 0
      %4360 = vmatprep.subr.bf16.mxu0 0
      %4361 = vmatpush1.bf16.msra.mxu0 0
      %4362 = vmatprep.subr.bf16.mxu0 0
      %4363 = vmatpush1.bf16.msra.mxu0 0
      %4364 = vmatprep.subr.bf16.mxu0 0
      %4365 = vmatpush1.bf16.msra.mxu0 0
      %4366 = vmatprep.subr.bf16.mxu0 0
      %4367 = vmatpush1.bf16.msra.mxu0 0
      %4368 = vmatprep.mubr.bf16.mxu0 0
      %4369 = vmatmul.mubr.bf16.gmra.mrb[0].mxu0 %v4313
      %v4370 = vpop.f32.mrb[0].mxu0
      %v4371 = vadd.f32 %v4298, %v4370
      %v4372 = vpop.f32.mrb[0].mxu0
      %v4373 = vpop.f32.mrb[0].mxu0
      %v4374 = vadd.f32 %v4298, %v4373
      %v4375 = vpop.f32.mrb[0].mxu0
      %4376 = vmatprep.mubr.bf16.mxu0 0
      %4377 = vmatmul.mubr.bf16.gmra.mrb[0].mxu0 %v4316
      %v4378 = vpop.f32.mrb[0].mxu0
      %v4379 = vadd.f32 %v4298, %v4378
      %v4380 = vpop.f32.mrb[0].mxu0
      %v4381 = vpop.f32.mrb[0].mxu0
      %v4382 = vadd.f32 %v4298, %v4381
      %v4383 = vpop.f32.mrb[0].mxu0
      %4384 = vmatprep.mubr.bf16.mxu0 0
      %4385 = vmatmul.mubr.bf16.gmra.mrb[0].mxu0 %v4319
      %v4386 = vpop.f32.mrb[0].mxu0
      %v4387 = vadd.f32 %v4298, %v4386
      %v4388 = vpop.f32.mrb[0].mxu0
      %v4389 = vpop.f32.mrb[0].mxu0
      %v4390 = vadd.f32 %v4298, %v4389
      %v4391 = vpop.f32.mrb[0].mxu0
      %4392 = vmatprep.mubr.bf16.mxu0 0
      %4393 = vmatmul.mubr.bf16.gmra.mrb[0].mxu0 %v4322
      %v4394 = vpop.f32.mrb[0].mxu0
      %v4395 = vadd.f32 %v4298, %v4394
      %v4396 = vpop.f32.mrb[0].mxu0
      %v4397 = vpop.f32.mrb[0].mxu0
      %v4398 = vadd.f32 %v4298, %v4397
      %v4399 = vpop.f32.mrb[0].mxu0
      %4400 = vmatprep.mubr.bf16.mxu0 0
      %4401 = vmatmul.mubr.bf16.gmra.mrb[0].mxu0 %v4325
      %v4402 = vpop.f32.mrb[0].mxu0
      %v4403 = vadd.f32 %v4298, %v4402
      %v4404 = vpop.f32.mrb[0].mxu0
      %v4405 = vpop.f32.mrb[0].mxu0
      %v4406 = vadd.f32 %v4298, %v4405
      %v4407 = vpop.f32.mrb[0].mxu0
      %4408 = vmatprep.mubr.bf16.mxu0 0
      %4409 = vmatmul.mubr.bf16.gmra.mrb[0].mxu0 %v4328
      %v4410 = vpop.f32.mrb[0].mxu0
      %v4411 = vadd.f32 %v4298, %v4410
      %v4412 = vpop.f32.mrb[0].mxu0
      %v4413 = vpop.f32.mrb[0].mxu0
      %v4414 = vadd.f32 %v4298, %v4413
      %v4415 = vpop.f32.mrb[0].mxu0
      %4416 = vmatprep.mubr.bf16.mxu0 0
      %4417 = vmatmul.mubr.bf16.gmra.mrb[0].mxu0 %v4331
      %v4418 = vpop.f32.mrb[0].mxu0
      %v4419 = vadd.f32 %v4298, %v4418
      %v4420 = vpop.f32.mrb[0].mxu0
      %v4421 = vpop.f32.mrb[0].mxu0
      %v4422 = vadd.f32 %v4298, %v4421
      %v4423 = vpop.f32.mrb[0].mxu0
      %4424 = vmatprep.mubr.bf16.mxu0 0
      %4425 = vmatmul.mubr.bf16.gmra.mrb[0].mxu0 %v4334
      %v4426 = vpop.f32.mrb[0].mxu0
      %v4427 = vadd.f32 %v4298, %v4426
      %v4428 = vpop.f32.mrb[0].mxu0
      %v4429 = vpop.f32.mrb[0].mxu0
      %v4430 = vadd.f32 %v4298, %v4429
      %v4431 = vpop.f32.mrb[0].mxu0
      %4432 = vdwg.mxu0
      %v4433 = vand.u32 2147483647, %v4371
      %vm4434 = vcmp.le.f32.partialorder %v4433, 0.7853982
      %vm4435 = vcmp.lt.s32.totalorder %v4371, 0
      %v4436 = vand.u32 %v4371, 2139095040
      %v4437 = vshrl.u32 %v4436, 23
      %v4438 = vsub.s32 %v4437, 127
      %v4439 = vand.u32 2147483647, %v4371
      %v4440 = vand.u32 %v4439, 8388607
      %v4441 = vor.u32 %v4440, 8388608
      %v4442 = vsub.s32 0, %v4441
      %v4443 = vadd.s32 %v4438, 1
      %vm4444 = vcmp.gt.s32.totalorder %v4443, 0
      %v4445 = vsel %vm4444, %v4443, 0
      %v4446 = vshrl.u32 %v4445, 5
      %v4447 = vand.u32 %v4445, 31
      %v4448 = vsub.s32 32, %v4447
      %v4449 = vshrl.u32 683565275, %v4448
      %v4450 = vshll.u32 683565275, %v4447
      %v4451 = vshrl.u32 2475754826, %v4448
      %v4452 = vor.u32 %v4450, %v4451
      %v4453 = vshll.u32 2475754826, %v4447
      %v4454 = vshrl.u32 2131351028, %v4448
      %v4455 = vor.u32 %v4453, %v4454
      %v4456 = vshll.u32 2131351028, %v4447
      %v4457 = vshrl.u32 2102212464, %v4448
      %v4458 = vor.u32 %v4456, %v4457
      %v4459 = vshll.u32 2102212464, %v4447
      %v4460 = vshrl.u32 920167782, %v4448
      %v4461 = vor.u32 %v4459, %v4460
      %v4462 = vshll.u32 920167782, %v4447
      %v4463 = vshrl.u32 1326507024, %v4448
      %v4464 = vor.u32 %v4462, %v4463
      %vm4465 = vcmp.lt.s32.totalorder %v4446, 1
      %vm4466 = vcmp.lt.s32.totalorder %v4446, 2
      %vm4467 = vcmp.lt.s32.totalorder %v4446, 3
      %vm4468 = vcmp.lt.s32.totalorder %v4446, 4
      %v4469 = vsel %vm4465, %v4449, %v4452
      %v4470 = vsel %vm4468, %v4458, 2102212464
      %v4471 = vsel %vm4467, %v4455, %v4470
      %v4472 = vsel %vm4466, %v4469, %v4471
      %v4473 = vsel %vm4465, %v4452, %v4455
      %v4474 = vsel %vm4468, %v4461, 920167782
      %v4475 = vsel %vm4467, %v4458, %v4474
      %v4476 = vsel %vm4466, %v4473, %v4475
      %v4477 = vsel %vm4465, %v4455, %v4458
      %v4478 = vsel %vm4468, %v4464, 1326507024
      %v4479 = vsel %vm4467, %v4461, %v4478
      %v4480 = vsel %vm4466, %v4477, %v4479
      %v4481 = vshll.u32 %v4441, 8
      %v4482 = vmul.u32.u64.compose %v4481, %v4480
      %v4483 = vextract.low.u32 %v4482
      %v4484 = vextract.high.u32 %v4482
      %v4485 = vmul.u32.u64.compose %v4481, %v4476
      %v4486 = vextract.low.u32 %v4485
      %v4487 = vextract.high.u32 %v4485
      %v4488 = vmul.u32 %v4481, %v4472
      %v4489 = vadd.s32 %v4484, %v4486
      %vm4490 = vc.u32 %v4484, %v4486
      %v4491 = vadd.s32 %v4487, 1
      %v4492 = vsel %vm4490, %v4491, %v4487
      %v4493 = vadd.s32 %v4488, %v4492
      %v4494 = vadd.s32 %v4493, 536870912
      %v4495 = vshrl.u32 %v4494, 30
      %v4496 = vshll.u32 %v4495, 30
      %v4497 = vsub.s32 %v4493, %v4496
      %vm4498 = vcmp.lt.s32.totalorder %v4497, 0
      %v4499 = vsub.s32 0, %v4497
      %v4500 = vsel %vm4498, %v4499, %v4497
      %v4501 = vclz %v4500
      %v4502 = vsub.s32 %v4501, 2
      %vm4503 = vcmp.gt.s32.totalorder 0, %v4502
      %v4504 = vsel %vm4503, 0, %v4502
      %v4505 = vsub.s32 32, %v4504
      %v4506 = vshll.u32 %v4497, %v4504
      %v4507 = vshrl.u32 %v4489, %v4505
      %v4508 = vor.u32 %v4506, %v4507
      %v4509 = vsub.s32 4294967266, %v4504
      %v4510 = vadd.s32 %v4509, 127
      %v4511 = vshll.u32 %v4510, 23
      %v4512 = vor.u32 4788187, %v4511
      %v4513 = vand.u32 2147483647, %v4512
      %v4515 = vcvt.s32.f32 %v4508
      %v4516 = vmul.f32 %v4515, %v4513
      %v4517 = vxor.u32 %v4516, 2147483648
      %v4518 = vsel %vm4435, %v4517, %v4516
      %v4519 = vsub.s32 4, %v4495
      %v4520 = vsel %vm4435, %v4519, %v4495
      %v4521 = vsel %vm4434, %v4371, %v4518
      %v4522 = vsel %vm4434, 0, %v4520
      %v4523 = vcosq.f32.pop %v4521
      %v4524 = vsinq.f32.pop %v4521
      %vm4525 = vweird.f32 %v4371
      %v4526 = vadd.s32 %v4522, 3
      %v4527 = vand.u32 %v4526, 3
      %vm4528 = vcmp.lt.s32.totalorder %v4527, 2
      %vm4529 = vcmp.eq.s32.totalorder %v4527, 0
      %v4530 = vxor.u32 %v4524, 2147483648
      %v4531 = vsel %vm4529, %v4523, %v4530
      %vm4532 = vcmp.eq.s32.totalorder %v4527, 2
      %v4533 = vxor.u32 %v4523, 2147483648
      %v4534 = vsel %vm4532, %v4533, %v4524
      %v4535 = vsel %vm4528, %v4531, %v4534
      %v4536 = vsel %vm4525, nan, %v4535
      %v4537 = vand.u32 2147483647, %v4374
      %vm4538 = vcmp.le.f32.partialorder %v4537, 0.7853982
      %vm4539 = vcmp.lt.s32.totalorder %v4374, 0
      %v4540 = vand.u32 %v4374, 2139095040
      %v4541 = vshrl.u32 %v4540, 23
      %v4542 = vsub.s32 %v4541, 127
      %v4543 = vand.u32 2147483647, %v4374
      %v4544 = vand.u32 %v4543, 8388607
      %v4545 = vor.u32 %v4544, 8388608
      %v4546 = vsub.s32 0, %v4545
      %v4547 = vadd.s32 %v4542, 1
      %vm4548 = vcmp.gt.s32.totalorder %v4547, 0
      %v4549 = vsel %vm4548, %v4547, 0
      %v4550 = vshrl.u32 %v4549, 5
      %v4551 = vand.u32 %v4549, 31
      %v4552 = vsub.s32 32, %v4551
      %v4553 = vshrl.u32 683565275, %v4552
      %v4554 = vshll.u32 683565275, %v4551
      %v4555 = vshrl.u32 2475754826, %v4552
      %v4556 = vor.u32 %v4554, %v4555
      %v4557 = vshll.u32 2475754826, %v4551
      %v4558 = vshrl.u32 2131351028, %v4552
      %v4559 = vor.u32 %v4557, %v4558
      %v4560 = vshll.u32 2131351028, %v4551
      %v4561 = vshrl.u32 2102212464, %v4552
      %v4562 = vor.u32 %v4560, %v4561
      %v4563 = vshll.u32 2102212464, %v4551
      %v4564 = vshrl.u32 920167782, %v4552
      %v4565 = vor.u32 %v4563, %v4564
      %v4566 = vshll.u32 920167782, %v4551
      %v4567 = vshrl.u32 1326507024, %v4552
      %v4568 = vor.u32 %v4566, %v4567
      %vm4569 = vcmp.lt.s32.totalorder %v4550, 1
      %vm4570 = vcmp.lt.s32.totalorder %v4550, 2
      %vm4571 = vcmp.lt.s32.totalorder %v4550, 3
      %vm4572 = vcmp.lt.s32.totalorder %v4550, 4
      %v4573 = vsel %vm4569, %v4553, %v4556
      %v4574 = vsel %vm4572, %v4562, 2102212464
      %v4575 = vsel %vm4571, %v4559, %v4574
      %v4576 = vsel %vm4570, %v4573, %v4575
      %v4577 = vsel %vm4569, %v4556, %v4559
      %v4578 = vsel %vm4572, %v4565, 920167782
      %v4579 = vsel %vm4571, %v4562, %v4578
      %v4580 = vsel %vm4570, %v4577, %v4579
      %v4581 = vsel %vm4569, %v4559, %v4562
      %v4582 = vsel %vm4572, %v4568, 1326507024
      %v4583 = vsel %vm4571, %v4565, %v4582
      %v4584 = vsel %vm4570, %v4581, %v4583
      %v4585 = vshll.u32 %v4545, 8
      %v4586 = vmul.u32.u64.compose %v4585, %v4584
      %v4587 = vextract.low.u32 %v4586
      %v4588 = vextract.high.u32 %v4586
      %v4589 = vmul.u32.u64.compose %v4585, %v4580
      %v4590 = vextract.low.u32 %v4589
      %v4591 = vextract.high.u32 %v4589
      %v4592 = vmul.u32 %v4585, %v4576
      %v4593 = vadd.s32 %v4588, %v4590
      %vm4594 = vc.u32 %v4588, %v4590
      %v4595 = vadd.s32 %v4591, 1
      %v4596 = vsel %vm4594, %v4595, %v4591
      %v4597 = vadd.s32 %v4592, %v4596
      %v4598 = vadd.s32 %v4597, 536870912
      %v4599 = vshrl.u32 %v4598, 30
      %v4600 = vshll.u32 %v4599, 30
      %v4601 = vsub.s32 %v4597, %v4600
      %vm4602 = vcmp.lt.s32.totalorder %v4601, 0
      %v4603 = vsub.s32 0, %v4601
      %v4604 = vsel %vm4602, %v4603, %v4601
      %v4605 = vclz %v4604
      %v4606 = vsub.s32 %v4605, 2
      %vm4607 = vcmp.gt.s32.totalorder 0, %v4606
      %v4608 = vsel %vm4607, 0, %v4606
      %v4609 = vsub.s32 32, %v4608
      %v4610 = vshll.u32 %v4601, %v4608
      %v4611 = vshrl.u32 %v4593, %v4609
      %v4612 = vor.u32 %v4610, %v4611
      %v4613 = vsub.s32 4294967266, %v4608
      %v4614 = vadd.s32 %v4613, 127
      %v4615 = vshll.u32 %v4614, 23
      %v4616 = vor.u32 4788187, %v4615
      %v4617 = vand.u32 2147483647, %v4616
      %v4619 = vcvt.s32.f32 %v4612
      %v4620 = vmul.f32 %v4619, %v4617
      %v4621 = vxor.u32 %v4620, 2147483648
      %v4622 = vsel %vm4539, %v4621, %v4620
      %v4623 = vsub.s32 4, %v4599
      %v4624 = vsel %vm4539, %v4623, %v4599
      %v4625 = vsel %vm4538, %v4374, %v4622
      %v4626 = vsel %vm4538, 0, %v4624
      %v4627 = vcosq.f32.pop %v4625
      %v4628 = vsinq.f32.pop %v4625
      %vm4629 = vweird.f32 %v4374
      %v4630 = vadd.s32 %v4626, 3
      %v4631 = vand.u32 %v4630, 3
      %vm4632 = vcmp.lt.s32.totalorder %v4631, 2
      %vm4633 = vcmp.eq.s32.totalorder %v4631, 0
      %v4634 = vxor.u32 %v4628, 2147483648
      %v4635 = vsel %vm4633, %v4627, %v4634
      %vm4636 = vcmp.eq.s32.totalorder %v4631, 2
      %v4637 = vxor.u32 %v4627, 2147483648
      %v4638 = vsel %vm4636, %v4637, %v4628
      %v4639 = vsel %vm4632, %v4635, %v4638
      %v4640 = vsel %vm4629, nan, %v4639
      %v4641 = vand.u32 2147483647, %v4379
      %vm4642 = vcmp.le.f32.partialorder %v4641, 0.7853982
      %vm4643 = vcmp.lt.s32.totalorder %v4379, 0
      %v4644 = vand.u32 %v4379, 2139095040
      %v4645 = vshrl.u32 %v4644, 23
      %v4646 = vsub.s32 %v4645, 127
      %v4647 = vand.u32 2147483647, %v4379
      %v4648 = vand.u32 %v4647, 8388607
      %v4649 = vor.u32 %v4648, 8388608
      %v4650 = vsub.s32 0, %v4649
      %v4651 = vadd.s32 %v4646, 1
      %vm4652 = vcmp.gt.s32.totalorder %v4651, 0
      %v4653 = vsel %vm4652, %v4651, 0
      %v4654 = vshrl.u32 %v4653, 5
      %v4655 = vand.u32 %v4653, 31
      %v4656 = vsub.s32 32, %v4655
      %v4657 = vshrl.u32 683565275, %v4656
      %v4658 = vshll.u32 683565275, %v4655
      %v4659 = vshrl.u32 2475754826, %v4656
      %v4660 = vor.u32 %v4658, %v4659
      %v4661 = vshll.u32 2475754826, %v4655
      %v4662 = vshrl.u32 2131351028, %v4656
      %v4663 = vor.u32 %v4661, %v4662
      %v4664 = vshll.u32 2131351028, %v4655
      %v4665 = vshrl.u32 2102212464, %v4656
      %v4666 = vor.u32 %v4664, %v4665
      %v4667 = vshll.u32 2102212464, %v4655
      %v4668 = vshrl.u32 920167782, %v4656
      %v4669 = vor.u32 %v4667, %v4668
      %v4670 = vshll.u32 920167782, %v4655
      %v4671 = vshrl.u32 1326507024, %v4656
      %v4672 = vor.u32 %v4670, %v4671
      %vm4673 = vcmp.lt.s32.totalorder %v4654, 1
      %vm4674 = vcmp.lt.s32.totalorder %v4654, 2
      %vm4675 = vcmp.lt.s32.totalorder %v4654, 3
      %vm4676 = vcmp.lt.s32.totalorder %v4654, 4
      %v4677 = vsel %vm4673, %v4657, %v4660
      %v4678 = vsel %vm4676, %v4666, 2102212464
      %v4679 = vsel %vm4675, %v4663, %v4678
      %v4680 = vsel %vm4674, %v4677, %v4679
      %v4681 = vsel %vm4673, %v4660, %v4663
      %v4682 = vsel %vm4676, %v4669, 920167782
      %v4683 = vsel %vm4675, %v4666, %v4682
      %v4684 = vsel %vm4674, %v4681, %v4683
      %v4685 = vsel %vm4673, %v4663, %v4666
      %v4686 = vsel %vm4676, %v4672, 1326507024
      %v4687 = vsel %vm4675, %v4669, %v4686
      %v4688 = vsel %vm4674, %v4685, %v4687
      %v4689 = vshll.u32 %v4649, 8
      %v4690 = vmul.u32.u64.compose %v4689, %v4688
      %v4691 = vextract.low.u32 %v4690
      %v4692 = vextract.high.u32 %v4690
      %v4693 = vmul.u32.u64.compose %v4689, %v4684
      %v4694 = vextract.low.u32 %v4693
      %v4695 = vextract.high.u32 %v4693
      %v4696 = vmul.u32 %v4689, %v4680
      %v4697 = vadd.s32 %v4692, %v4694
      %vm4698 = vc.u32 %v4692, %v4694
      %v4699 = vadd.s32 %v4695, 1
      %v4700 = vsel %vm4698, %v4699, %v4695
      %v4701 = vadd.s32 %v4696, %v4700
      %v4702 = vadd.s32 %v4701, 536870912
      %v4703 = vshrl.u32 %v4702, 30
      %v4704 = vshll.u32 %v4703, 30
      %v4705 = vsub.s32 %v4701, %v4704
      %vm4706 = vcmp.lt.s32.totalorder %v4705, 0
      %v4707 = vsub.s32 0, %v4705
      %v4708 = vsel %vm4706, %v4707, %v4705
      %v4709 = vclz %v4708
      %v4710 = vsub.s32 %v4709, 2
      %vm4711 = vcmp.gt.s32.totalorder 0, %v4710
      %v4712 = vsel %vm4711, 0, %v4710
      %v4713 = vsub.s32 32, %v4712
      %v4714 = vshll.u32 %v4705, %v4712
      %v4715 = vshrl.u32 %v4697, %v4713
      %v4716 = vor.u32 %v4714, %v4715
      %v4717 = vsub.s32 4294967266, %v4712
      %v4718 = vadd.s32 %v4717, 127
      %v4719 = vshll.u32 %v4718, 23
      %v4720 = vor.u32 4788187, %v4719
      %v4721 = vand.u32 2147483647, %v4720
      %v4723 = vcvt.s32.f32 %v4716
      %v4724 = vmul.f32 %v4723, %v4721
      %v4725 = vxor.u32 %v4724, 2147483648
      %v4726 = vsel %vm4643, %v4725, %v4724
      %v4727 = vsub.s32 4, %v4703
      %v4728 = vsel %vm4643, %v4727, %v4703
      %v4729 = vsel %vm4642, %v4379, %v4726
      %v4730 = vsel %vm4642, 0, %v4728
      %v4731 = vcosq.f32.pop %v4729
      %v4732 = vsinq.f32.pop %v4729
      %vm4733 = vweird.f32 %v4379
      %v4734 = vadd.s32 %v4730, 3
      %v4735 = vand.u32 %v4734, 3
      %vm4736 = vcmp.lt.s32.totalorder %v4735, 2
      %vm4737 = vcmp.eq.s32.totalorder %v4735, 0
      %v4738 = vxor.u32 %v4732, 2147483648
      %v4739 = vsel %vm4737, %v4731, %v4738
      %vm4740 = vcmp.eq.s32.totalorder %v4735, 2
      %v4741 = vxor.u32 %v4731, 2147483648
      %v4742 = vsel %vm4740, %v4741, %v4732
      %v4743 = vsel %vm4736, %v4739, %v4742
      %v4744 = vsel %vm4733, nan, %v4743
      %v4745 = vand.u32 2147483647, %v4382
      %vm4746 = vcmp.le.f32.partialorder %v4745, 0.7853982
      %vm4747 = vcmp.lt.s32.totalorder %v4382, 0
      %v4748 = vand.u32 %v4382, 2139095040
      %v4749 = vshrl.u32 %v4748, 23
      %v4750 = vsub.s32 %v4749, 127
      %v4751 = vand.u32 2147483647, %v4382
      %v4752 = vand.u32 %v4751, 8388607
      %v4753 = vor.u32 %v4752, 8388608
      %v4754 = vsub.s32 0, %v4753
      %v4755 = vadd.s32 %v4750, 1
      %vm4756 = vcmp.gt.s32.totalorder %v4755, 0
      %v4757 = vsel %vm4756, %v4755, 0
      %v4758 = vshrl.u32 %v4757, 5
      %v4759 = vand.u32 %v4757, 31
      %v4760 = vsub.s32 32, %v4759
      %v4761 = vshrl.u32 683565275, %v4760
      %v4762 = vshll.u32 683565275, %v4759
      %v4763 = vshrl.u32 2475754826, %v4760
      %v4764 = vor.u32 %v4762, %v4763
      %v4765 = vshll.u32 2475754826, %v4759
      %v4766 = vshrl.u32 2131351028, %v4760
      %v4767 = vor.u32 %v4765, %v4766
      %v4768 = vshll.u32 2131351028, %v4759
      %v4769 = vshrl.u32 2102212464, %v4760
      %v4770 = vor.u32 %v4768, %v4769
      %v4771 = vshll.u32 2102212464, %v4759
      %v4772 = vshrl.u32 920167782, %v4760
      %v4773 = vor.u32 %v4771, %v4772
      %v4774 = vshll.u32 920167782, %v4759
      %v4775 = vshrl.u32 1326507024, %v4760
      %v4776 = vor.u32 %v4774, %v4775
      %vm4777 = vcmp.lt.s32.totalorder %v4758, 1
      %vm4778 = vcmp.lt.s32.totalorder %v4758, 2
      %vm4779 = vcmp.lt.s32.totalorder %v4758, 3
      %vm4780 = vcmp.lt.s32.totalorder %v4758, 4
      %v4781 = vsel %vm4777, %v4761, %v4764
      %v4782 = vsel %vm4780, %v4770, 2102212464
      %v4783 = vsel %vm4779, %v4767, %v4782
      %v4784 = vsel %vm4778, %v4781, %v4783
      %v4785 = vsel %vm4777, %v4764, %v4767
      %v4786 = vsel %vm4780, %v4773, 920167782
      %v4787 = vsel %vm4779, %v4770, %v4786
      %v4788 = vsel %vm4778, %v4785, %v4787
      %v4789 = vsel %vm4777, %v4767, %v4770
      %v4790 = vsel %vm4780, %v4776, 1326507024
      %v4791 = vsel %vm4779, %v4773, %v4790
      %v4792 = vsel %vm4778, %v4789, %v4791
      %v4793 = vshll.u32 %v4753, 8
      %v4794 = vmul.u32.u64.compose %v4793, %v4792
      %v4795 = vextract.low.u32 %v4794
      %v4796 = vextract.high.u32 %v4794
      %v4797 = vmul.u32.u64.compose %v4793, %v4788
      %v4798 = vextract.low.u32 %v4797
      %v4799 = vextract.high.u32 %v4797
      %v4800 = vmul.u32 %v4793, %v4784
      %v4801 = vadd.s32 %v4796, %v4798
      %vm4802 = vc.u32 %v4796, %v4798
      %v4803 = vadd.s32 %v4799, 1
      %v4804 = vsel %vm4802, %v4803, %v4799
      %v4805 = vadd.s32 %v4800, %v4804
      %v4806 = vadd.s32 %v4805, 536870912
      %v4807 = vshrl.u32 %v4806, 30
      %v4808 = vshll.u32 %v4807, 30
      %v4809 = vsub.s32 %v4805, %v4808
      %vm4810 = vcmp.lt.s32.totalorder %v4809, 0
      %v4811 = vsub.s32 0, %v4809
      %v4812 = vsel %vm4810, %v4811, %v4809
      %v4813 = vclz %v4812
      %v4814 = vsub.s32 %v4813, 2
      %vm4815 = vcmp.gt.s32.totalorder 0, %v4814
      %v4816 = vsel %vm4815, 0, %v4814
      %v4817 = vsub.s32 32, %v4816
      %v4818 = vshll.u32 %v4809, %v4816
      %v4819 = vshrl.u32 %v4801, %v4817
      %v4820 = vor.u32 %v4818, %v4819
      %v4821 = vsub.s32 4294967266, %v4816
      %v4822 = vadd.s32 %v4821, 127
      %v4823 = vshll.u32 %v4822, 23
      %v4824 = vor.u32 4788187, %v4823
      %v4825 = vand.u32 2147483647, %v4824
      %v4827 = vcvt.s32.f32 %v4820
      %v4828 = vmul.f32 %v4827, %v4825
      %v4829 = vxor.u32 %v4828, 2147483648
      %v4830 = vsel %vm4747, %v4829, %v4828
      %v4831 = vsub.s32 4, %v4807
      %v4832 = vsel %vm4747, %v4831, %v4807
      %v4833 = vsel %vm4746, %v4382, %v4830
      %v4834 = vsel %vm4746, 0, %v4832
      %v4835 = vcosq.f32.pop %v4833
      %v4836 = vsinq.f32.pop %v4833
      %vm4837 = vweird.f32 %v4382
      %v4838 = vadd.s32 %v4834, 3
      %v4839 = vand.u32 %v4838, 3
      %vm4840 = vcmp.lt.s32.totalorder %v4839, 2
      %vm4841 = vcmp.eq.s32.totalorder %v4839, 0
      %v4842 = vxor.u32 %v4836, 2147483648
      %v4843 = vsel %vm4841, %v4835, %v4842
      %vm4844 = vcmp.eq.s32.totalorder %v4839, 2
      %v4845 = vxor.u32 %v4835, 2147483648
      %v4846 = vsel %vm4844, %v4845, %v4836
      %v4847 = vsel %vm4840, %v4843, %v4846
      %v4848 = vsel %vm4837, nan, %v4847
      %v4849 = vand.u32 2147483647, %v4387
      %vm4850 = vcmp.le.f32.partialorder %v4849, 0.7853982
      %vm4851 = vcmp.lt.s32.totalorder %v4387, 0
      %v4852 = vand.u32 %v4387, 2139095040
      %v4853 = vshrl.u32 %v4852, 23
      %v4854 = vsub.s32 %v4853, 127
      %v4855 = vand.u32 2147483647, %v4387
      %v4856 = vand.u32 %v4855, 8388607
      %v4857 = vor.u32 %v4856, 8388608
      %v4858 = vsub.s32 0, %v4857
      %v4859 = vadd.s32 %v4854, 1
      %vm4860 = vcmp.gt.s32.totalorder %v4859, 0
      %v4861 = vsel %vm4860, %v4859, 0
      %v4862 = vshrl.u32 %v4861, 5
      %v4863 = vand.u32 %v4861, 31
      %v4864 = vsub.s32 32, %v4863
      %v4865 = vshrl.u32 683565275, %v4864
      %v4866 = vshll.u32 683565275, %v4863
      %v4867 = vshrl.u32 2475754826, %v4864
      %v4868 = vor.u32 %v4866, %v4867
      %v4869 = vshll.u32 2475754826, %v4863
      %v4870 = vshrl.u32 2131351028, %v4864
      %v4871 = vor.u32 %v4869, %v4870
      %v4872 = vshll.u32 2131351028, %v4863
      %v4873 = vshrl.u32 2102212464, %v4864
      %v4874 = vor.u32 %v4872, %v4873
      %v4875 = vshll.u32 2102212464, %v4863
      %v4876 = vshrl.u32 920167782, %v4864
      %v4877 = vor.u32 %v4875, %v4876
      %v4878 = vshll.u32 920167782, %v4863
      %v4879 = vshrl.u32 1326507024, %v4864
      %v4880 = vor.u32 %v4878, %v4879
      %vm4881 = vcmp.lt.s32.totalorder %v4862, 1
      %vm4882 = vcmp.lt.s32.totalorder %v4862, 2
      %vm4883 = vcmp.lt.s32.totalorder %v4862, 3
      %vm4884 = vcmp.lt.s32.totalorder %v4862, 4
      %v4885 = vsel %vm4881, %v4865, %v4868
      %v4886 = vsel %vm4884, %v4874, 2102212464
      %v4887 = vsel %vm4883, %v4871, %v4886
      %v4888 = vsel %vm4882, %v4885, %v4887
      %v4889 = vsel %vm4881, %v4868, %v4871
      %v4890 = vsel %vm4884, %v4877, 920167782
      %v4891 = vsel %vm4883, %v4874, %v4890
      %v4892 = vsel %vm4882, %v4889, %v4891
      %v4893 = vsel %vm4881, %v4871, %v4874
      %v4894 = vsel %vm4884, %v4880, 1326507024
      %v4895 = vsel %vm4883, %v4877, %v4894
      %v4896 = vsel %vm4882, %v4893, %v4895
      %v4897 = vshll.u32 %v4857, 8
      %v4898 = vmul.u32.u64.compose %v4897, %v4896
      %v4899 = vextract.low.u32 %v4898
      %v4900 = vextract.high.u32 %v4898
      %v4901 = vmul.u32.u64.compose %v4897, %v4892
      %v4902 = vextract.low.u32 %v4901
      %v4903 = vextract.high.u32 %v4901
      %v4904 = vmul.u32 %v4897, %v4888
      %v4905 = vadd.s32 %v4900, %v4902
      %vm4906 = vc.u32 %v4900, %v4902
      %v4907 = vadd.s32 %v4903, 1
      %v4908 = vsel %vm4906, %v4907, %v4903
      %v4909 = vadd.s32 %v4904, %v4908
      %v4910 = vadd.s32 %v4909, 536870912
      %v4911 = vshrl.u32 %v4910, 30
      %v4912 = vshll.u32 %v4911, 30
      %v4913 = vsub.s32 %v4909, %v4912
      %vm4914 = vcmp.lt.s32.totalorder %v4913, 0
      %v4915 = vsub.s32 0, %v4913
      %v4916 = vsel %vm4914, %v4915, %v4913
      %v4917 = vclz %v4916
      %v4918 = vsub.s32 %v4917, 2
      %vm4919 = vcmp.gt.s32.totalorder 0, %v4918
      %v4920 = vsel %vm4919, 0, %v4918
      %v4921 = vsub.s32 32, %v4920
      %v4922 = vshll.u32 %v4913, %v4920
      %v4923 = vshrl.u32 %v4905, %v4921
      %v4924 = vor.u32 %v4922, %v4923
      %v4925 = vsub.s32 4294967266, %v4920
      %v4926 = vadd.s32 %v4925, 127
      %v4927 = vshll.u32 %v4926, 23
      %v4928 = vor.u32 4788187, %v4927
      %v4929 = vand.u32 2147483647, %v4928
      %v4931 = vcvt.s32.f32 %v4924
      %v4932 = vmul.f32 %v4931, %v4929
      %v4933 = vxor.u32 %v4932, 2147483648
      %v4934 = vsel %vm4851, %v4933, %v4932
      %v4935 = vsub.s32 4, %v4911
      %v4936 = vsel %vm4851, %v4935, %v4911
      %v4937 = vsel %vm4850, %v4387, %v4934
      %v4938 = vsel %vm4850, 0, %v4936
      %v4939 = vcosq.f32.pop %v4937
      %v4940 = vsinq.f32.pop %v4937
      %vm4941 = vweird.f32 %v4387
      %v4942 = vadd.s32 %v4938, 3
      %v4943 = vand.u32 %v4942, 3
      %vm4944 = vcmp.lt.s32.totalorder %v4943, 2
      %vm4945 = vcmp.eq.s32.totalorder %v4943, 0
      %v4946 = vxor.u32 %v4940, 2147483648
      %v4947 = vsel %vm4945, %v4939, %v4946
      %vm4948 = vcmp.eq.s32.totalorder %v4943, 2
      %v4949 = vxor.u32 %v4939, 2147483648
      %v4950 = vsel %vm4948, %v4949, %v4940
      %v4951 = vsel %vm4944, %v4947, %v4950
      %v4952 = vsel %vm4941, nan, %v4951
      %v4953 = vand.u32 2147483647, %v4390
      %vm4954 = vcmp.le.f32.partialorder %v4953, 0.7853982
      %vm4955 = vcmp.lt.s32.totalorder %v4390, 0
      %v4956 = vand.u32 %v4390, 2139095040
      %v4957 = vshrl.u32 %v4956, 23
      %v4958 = vsub.s32 %v4957, 127
      %v4959 = vand.u32 2147483647, %v4390
      %v4960 = vand.u32 %v4959, 8388607
      %v4961 = vor.u32 %v4960, 8388608
      %v4962 = vsub.s32 0, %v4961
      %v4963 = vadd.s32 %v4958, 1
      %vm4964 = vcmp.gt.s32.totalorder %v4963, 0
      %v4965 = vsel %vm4964, %v4963, 0
      %v4966 = vshrl.u32 %v4965, 5
      %v4967 = vand.u32 %v4965, 31
      %v4968 = vsub.s32 32, %v4967
      %v4969 = vshrl.u32 683565275, %v4968
      %v4970 = vshll.u32 683565275, %v4967
      %v4971 = vshrl.u32 2475754826, %v4968
      %v4972 = vor.u32 %v4970, %v4971
      %v4973 = vshll.u32 2475754826, %v4967
      %v4974 = vshrl.u32 2131351028, %v4968
      %v4975 = vor.u32 %v4973, %v4974
      %v4976 = vshll.u32 2131351028, %v4967
      %v4977 = vshrl.u32 2102212464, %v4968
      %v4978 = vor.u32 %v4976, %v4977
      %v4979 = vshll.u32 2102212464, %v4967
      %v4980 = vshrl.u32 920167782, %v4968
      %v4981 = vor.u32 %v4979, %v4980
      %v4982 = vshll.u32 920167782, %v4967
      %v4983 = vshrl.u32 1326507024, %v4968
      %v4984 = vor.u32 %v4982, %v4983
      %vm4985 = vcmp.lt.s32.totalorder %v4966, 1
      %vm4986 = vcmp.lt.s32.totalorder %v4966, 2
      %vm4987 = vcmp.lt.s32.totalorder %v4966, 3
      %vm4988 = vcmp.lt.s32.totalorder %v4966, 4
      %v4989 = vsel %vm4985, %v4969, %v4972
      %v4990 = vsel %vm4988, %v4978, 2102212464
      %v4991 = vsel %vm4987, %v4975, %v4990
      %v4992 = vsel %vm4986, %v4989, %v4991
      %v4993 = vsel %vm4985, %v4972, %v4975
      %v4994 = vsel %vm4988, %v4981, 920167782
      %v4995 = vsel %vm4987, %v4978, %v4994
      %v4996 = vsel %vm4986, %v4993, %v4995
      %v4997 = vsel %vm4985, %v4975, %v4978
      %v4998 = vsel %vm4988, %v4984, 1326507024
      %v4999 = vsel %vm4987, %v4981, %v4998
      %v5000 = vsel %vm4986, %v4997, %v4999
      %v5001 = vshll.u32 %v4961, 8
      %v5002 = vmul.u32.u64.compose %v5001, %v5000
      %v5003 = vextract.low.u32 %v5002
      %v5004 = vextract.high.u32 %v5002
      %v5005 = vmul.u32.u64.compose %v5001, %v4996
      %v5006 = vextract.low.u32 %v5005
      %v5007 = vextract.high.u32 %v5005
      %v5008 = vmul.u32 %v5001, %v4992
      %v5009 = vadd.s32 %v5004, %v5006
      %vm5010 = vc.u32 %v5004, %v5006
      %v5011 = vadd.s32 %v5007, 1
      %v5012 = vsel %vm5010, %v5011, %v5007
      %v5013 = vadd.s32 %v5008, %v5012
      %v5014 = vadd.s32 %v5013, 536870912
      %v5015 = vshrl.u32 %v5014, 30
      %v5016 = vshll.u32 %v5015, 30
      %v5017 = vsub.s32 %v5013, %v5016
      %vm5018 = vcmp.lt.s32.totalorder %v5017, 0
      %v5019 = vsub.s32 0, %v5017
      %v5020 = vsel %vm5018, %v5019, %v5017
      %v5021 = vclz %v5020
      %v5022 = vsub.s32 %v5021, 2
      %vm5023 = vcmp.gt.s32.totalorder 0, %v5022
      %v5024 = vsel %vm5023, 0, %v5022
      %v5025 = vsub.s32 32, %v5024
      %v5026 = vshll.u32 %v5017, %v5024
      %v5027 = vshrl.u32 %v5009, %v5025
      %v5028 = vor.u32 %v5026, %v5027
      %v5029 = vsub.s32 4294967266, %v5024
      %v5030 = vadd.s32 %v5029, 127
      %v5031 = vshll.u32 %v5030, 23
      %v5032 = vor.u32 4788187, %v5031
      %v5033 = vand.u32 2147483647, %v5032
      %v5035 = vcvt.s32.f32 %v5028
      %v5036 = vmul.f32 %v5035, %v5033
      %v5037 = vxor.u32 %v5036, 2147483648
      %v5038 = vsel %vm4955, %v5037, %v5036
      %v5039 = vsub.s32 4, %v5015
      %v5040 = vsel %vm4955, %v5039, %v5015
      %v5041 = vsel %vm4954, %v4390, %v5038
      %v5042 = vsel %vm4954, 0, %v5040
      %v5043 = vcosq.f32.pop %v5041
      %v5044 = vsinq.f32.pop %v5041
      %vm5045 = vweird.f32 %v4390
      %v5046 = vadd.s32 %v5042, 3
      %v5047 = vand.u32 %v5046, 3
      %vm5048 = vcmp.lt.s32.totalorder %v5047, 2
      %vm5049 = vcmp.eq.s32.totalorder %v5047, 0
      %v5050 = vxor.u32 %v5044, 2147483648
      %v5051 = vsel %vm5049, %v5043, %v5050
      %vm5052 = vcmp.eq.s32.totalorder %v5047, 2
      %v5053 = vxor.u32 %v5043, 2147483648
      %v5054 = vsel %vm5052, %v5053, %v5044
      %v5055 = vsel %vm5048, %v5051, %v5054
      %v5056 = vsel %vm5045, nan, %v5055
      %v5057 = vand.u32 2147483647, %v4395
      %vm5058 = vcmp.le.f32.partialorder %v5057, 0.7853982
      %vm5059 = vcmp.lt.s32.totalorder %v4395, 0
      %v5060 = vand.u32 %v4395, 2139095040
      %v5061 = vshrl.u32 %v5060, 23
      %v5062 = vsub.s32 %v5061, 127
      %v5063 = vand.u32 2147483647, %v4395
      %v5064 = vand.u32 %v5063, 8388607
      %v5065 = vor.u32 %v5064, 8388608
      %v5066 = vsub.s32 0, %v5065
      %v5067 = vadd.s32 %v5062, 1
      %vm5068 = vcmp.gt.s32.totalorder %v5067, 0
      %v5069 = vsel %vm5068, %v5067, 0
      %v5070 = vshrl.u32 %v5069, 5
      %v5071 = vand.u32 %v5069, 31
      %v5072 = vsub.s32 32, %v5071
      %v5073 = vshrl.u32 683565275, %v5072
      %v5074 = vshll.u32 683565275, %v5071
      %v5075 = vshrl.u32 2475754826, %v5072
      %v5076 = vor.u32 %v5074, %v5075
      %v5077 = vshll.u32 2475754826, %v5071
      %v5078 = vshrl.u32 2131351028, %v5072
      %v5079 = vor.u32 %v5077, %v5078
      %v5080 = vshll.u32 2131351028, %v5071
      %v5081 = vshrl.u32 2102212464, %v5072
      %v5082 = vor.u32 %v5080, %v5081
      %v5083 = vshll.u32 2102212464, %v5071
      %v5084 = vshrl.u32 920167782, %v5072
      %v5085 = vor.u32 %v5083, %v5084
      %v5086 = vshll.u32 920167782, %v5071
      %v5087 = vshrl.u32 1326507024, %v5072
      %v5088 = vor.u32 %v5086, %v5087
      %vm5089 = vcmp.lt.s32.totalorder %v5070, 1
      %vm5090 = vcmp.lt.s32.totalorder %v5070, 2
      %vm5091 = vcmp.lt.s32.totalorder %v5070, 3
      %vm5092 = vcmp.lt.s32.totalorder %v5070, 4
      %v5093 = vsel %vm5089, %v5073, %v5076
      %v5094 = vsel %vm5092, %v5082, 2102212464
      %v5095 = vsel %vm5091, %v5079, %v5094
      %v5096 = vsel %vm5090, %v5093, %v5095
      %v5097 = vsel %vm5089, %v5076, %v5079
      %v5098 = vsel %vm5092, %v5085, 920167782
      %v5099 = vsel %vm5091, %v5082, %v5098
      %v5100 = vsel %vm5090, %v5097, %v5099
      %v5101 = vsel %vm5089, %v5079, %v5082
      %v5102 = vsel %vm5092, %v5088, 1326507024
      %v5103 = vsel %vm5091, %v5085, %v5102
      %v5104 = vsel %vm5090, %v5101, %v5103
      %v5105 = vshll.u32 %v5065, 8
      %v5106 = vmul.u32.u64.compose %v5105, %v5104
      %v5107 = vextract.low.u32 %v5106
      %v5108 = vextract.high.u32 %v5106
      %v5109 = vmul.u32.u64.compose %v5105, %v5100
      %v5110 = vextract.low.u32 %v5109
      %v5111 = vextract.high.u32 %v5109
      %v5112 = vmul.u32 %v5105, %v5096
      %v5113 = vadd.s32 %v5108, %v5110
      %vm5114 = vc.u32 %v5108, %v5110
      %v5115 = vadd.s32 %v5111, 1
      %v5116 = vsel %vm5114, %v5115, %v5111
      %v5117 = vadd.s32 %v5112, %v5116
      %v5118 = vadd.s32 %v5117, 536870912
      %v5119 = vshrl.u32 %v5118, 30
      %v5120 = vshll.u32 %v5119, 30
      %v5121 = vsub.s32 %v5117, %v5120
      %vm5122 = vcmp.lt.s32.totalorder %v5121, 0
      %v5123 = vsub.s32 0, %v5121
      %v5124 = vsel %vm5122, %v5123, %v5121
      %v5125 = vclz %v5124
      %v5126 = vsub.s32 %v5125, 2
      %vm5127 = vcmp.gt.s32.totalorder 0, %v5126
      %v5128 = vsel %vm5127, 0, %v5126
      %v5129 = vsub.s32 32, %v5128
      %v5130 = vshll.u32 %v5121, %v5128
      %v5131 = vshrl.u32 %v5113, %v5129
      %v5132 = vor.u32 %v5130, %v5131
      %v5133 = vsub.s32 4294967266, %v5128
      %v5134 = vadd.s32 %v5133, 127
      %v5135 = vshll.u32 %v5134, 23
      %v5136 = vor.u32 4788187, %v5135
      %v5137 = vand.u32 2147483647, %v5136
      %v5139 = vcvt.s32.f32 %v5132
      %v5140 = vmul.f32 %v5139, %v5137
      %v5141 = vxor.u32 %v5140, 2147483648
      %v5142 = vsel %vm5059, %v5141, %v5140
      %v5143 = vsub.s32 4, %v5119
      %v5144 = vsel %vm5059, %v5143, %v5119
      %v5145 = vsel %vm5058, %v4395, %v5142
      %v5146 = vsel %vm5058, 0, %v5144
      %v5147 = vcosq.f32.pop %v5145
      %v5148 = vsinq.f32.pop %v5145
      %vm5149 = vweird.f32 %v4395
      %v5150 = vadd.s32 %v5146, 3
      %v5151 = vand.u32 %v5150, 3
      %vm5152 = vcmp.lt.s32.totalorder %v5151, 2
      %vm5153 = vcmp.eq.s32.totalorder %v5151, 0
      %v5154 = vxor.u32 %v5148, 2147483648
      %v5155 = vsel %vm5153, %v5147, %v5154
      %vm5156 = vcmp.eq.s32.totalorder %v5151, 2
      %v5157 = vxor.u32 %v5147, 2147483648
      %v5158 = vsel %vm5156, %v5157, %v5148
      %v5159 = vsel %vm5152, %v5155, %v5158
      %v5160 = vsel %vm5149, nan, %v5159
      %v5161 = vand.u32 2147483647, %v4398
      %vm5162 = vcmp.le.f32.partialorder %v5161, 0.7853982
      %vm5163 = vcmp.lt.s32.totalorder %v4398, 0
      %v5164 = vand.u32 %v4398, 2139095040
      %v5165 = vshrl.u32 %v5164, 23
      %v5166 = vsub.s32 %v5165, 127
      %v5167 = vand.u32 2147483647, %v4398
      %v5168 = vand.u32 %v5167, 8388607
      %v5169 = vor.u32 %v5168, 8388608
      %v5170 = vsub.s32 0, %v5169
      %v5171 = vadd.s32 %v5166, 1
      %vm5172 = vcmp.gt.s32.totalorder %v5171, 0
      %v5173 = vsel %vm5172, %v5171, 0
      %v5174 = vshrl.u32 %v5173, 5
      %v5175 = vand.u32 %v5173, 31
      %v5176 = vsub.s32 32, %v5175
      %v5177 = vshrl.u32 683565275, %v5176
      %v5178 = vshll.u32 683565275, %v5175
      %v5179 = vshrl.u32 2475754826, %v5176
      %v5180 = vor.u32 %v5178, %v5179
      %v5181 = vshll.u32 2475754826, %v5175
      %v5182 = vshrl.u32 2131351028, %v5176
      %v5183 = vor.u32 %v5181, %v5182
      %v5184 = vshll.u32 2131351028, %v5175
      %v5185 = vshrl.u32 2102212464, %v5176
      %v5186 = vor.u32 %v5184, %v5185
      %v5187 = vshll.u32 2102212464, %v5175
      %v5188 = vshrl.u32 920167782, %v5176
      %v5189 = vor.u32 %v5187, %v5188
      %v5190 = vshll.u32 920167782, %v5175
      %v5191 = vshrl.u32 1326507024, %v5176
      %v5192 = vor.u32 %v5190, %v5191
      %vm5193 = vcmp.lt.s32.totalorder %v5174, 1
      %vm5194 = vcmp.lt.s32.totalorder %v5174, 2
      %vm5195 = vcmp.lt.s32.totalorder %v5174, 3
      %vm5196 = vcmp.lt.s32.totalorder %v5174, 4
      %v5197 = vsel %vm5193, %v5177, %v5180
      %v5198 = vsel %vm5196, %v5186, 2102212464
      %v5199 = vsel %vm5195, %v5183, %v5198
      %v5200 = vsel %vm5194, %v5197, %v5199
      %v5201 = vsel %vm5193, %v5180, %v5183
      %v5202 = vsel %vm5196, %v5189, 920167782
      %v5203 = vsel %vm5195, %v5186, %v5202
      %v5204 = vsel %vm5194, %v5201, %v5203
      %v5205 = vsel %vm5193, %v5183, %v5186
      %v5206 = vsel %vm5196, %v5192, 1326507024
      %v5207 = vsel %vm5195, %v5189, %v5206
      %v5208 = vsel %vm5194, %v5205, %v5207
      %v5209 = vshll.u32 %v5169, 8
      %v5210 = vmul.u32.u64.compose %v5209, %v5208
      %v5211 = vextract.low.u32 %v5210
      %v5212 = vextract.high.u32 %v5210
      %v5213 = vmul.u32.u64.compose %v5209, %v5204
      %v5214 = vextract.low.u32 %v5213
      %v5215 = vextract.high.u32 %v5213
      %v5216 = vmul.u32 %v5209, %v5200
      %v5217 = vadd.s32 %v5212, %v5214
      %vm5218 = vc.u32 %v5212, %v5214
      %v5219 = vadd.s32 %v5215, 1
      %v5220 = vsel %vm5218, %v5219, %v5215
      %v5221 = vadd.s32 %v5216, %v5220
      %v5222 = vadd.s32 %v5221, 536870912
      %v5223 = vshrl.u32 %v5222, 30
      %v5224 = vshll.u32 %v5223, 30
      %v5225 = vsub.s32 %v5221, %v5224
      %vm5226 = vcmp.lt.s32.totalorder %v5225, 0
      %v5227 = vsub.s32 0, %v5225
      %v5228 = vsel %vm5226, %v5227, %v5225
      %v5229 = vclz %v5228
      %v5230 = vsub.s32 %v5229, 2
      %vm5231 = vcmp.gt.s32.totalorder 0, %v5230
      %v5232 = vsel %vm5231, 0, %v5230
      %v5233 = vsub.s32 32, %v5232
      %v5234 = vshll.u32 %v5225, %v5232
      %v5235 = vshrl.u32 %v5217, %v5233
      %v5236 = vor.u32 %v5234, %v5235
      %v5237 = vsub.s32 4294967266, %v5232
      %v5238 = vadd.s32 %v5237, 127
      %v5239 = vshll.u32 %v5238, 23
      %v5240 = vor.u32 4788187, %v5239
      %v5241 = vand.u32 2147483647, %v5240
      %v5243 = vcvt.s32.f32 %v5236
      %v5244 = vmul.f32 %v5243, %v5241
      %v5245 = vxor.u32 %v5244, 2147483648
      %v5246 = vsel %vm5163, %v5245, %v5244
      %v5247 = vsub.s32 4, %v5223
      %v5248 = vsel %vm5163, %v5247, %v5223
      %v5249 = vsel %vm5162, %v4398, %v5246
      %v5250 = vsel %vm5162, 0, %v5248
      %v5251 = vcosq.f32.pop %v5249
      %v5252 = vsinq.f32.pop %v5249
      %vm5253 = vweird.f32 %v4398
      %v5254 = vadd.s32 %v5250, 3
      %v5255 = vand.u32 %v5254, 3
      %vm5256 = vcmp.lt.s32.totalorder %v5255, 2
      %vm5257 = vcmp.eq.s32.totalorder %v5255, 0
      %v5258 = vxor.u32 %v5252, 2147483648
      %v5259 = vsel %vm5257, %v5251, %v5258
      %vm5260 = vcmp.eq.s32.totalorder %v5255, 2
      %v5261 = vxor.u32 %v5251, 2147483648
      %v5262 = vsel %vm5260, %v5261, %v5252
      %v5263 = vsel %vm5256, %v5259, %v5262
      %v5264 = vsel %vm5253, nan, %v5263
      %v5265 = vand.u32 2147483647, %v4403
      %vm5266 = vcmp.le.f32.partialorder %v5265, 0.7853982
      %vm5267 = vcmp.lt.s32.totalorder %v4403, 0
      %v5268 = vand.u32 %v4403, 2139095040
      %v5269 = vshrl.u32 %v5268, 23
      %v5270 = vsub.s32 %v5269, 127
      %v5271 = vand.u32 2147483647, %v4403
      %v5272 = vand.u32 %v5271, 8388607
      %v5273 = vor.u32 %v5272, 8388608
      %v5274 = vsub.s32 0, %v5273
      %v5275 = vadd.s32 %v5270, 1
      %vm5276 = vcmp.gt.s32.totalorder %v5275, 0
      %v5277 = vsel %vm5276, %v5275, 0
      %v5278 = vshrl.u32 %v5277, 5
      %v5279 = vand.u32 %v5277, 31
      %v5280 = vsub.s32 32, %v5279
      %v5281 = vshrl.u32 683565275, %v5280
      %v5282 = vshll.u32 683565275, %v5279
      %v5283 = vshrl.u32 2475754826, %v5280
      %v5284 = vor.u32 %v5282, %v5283
      %v5285 = vshll.u32 2475754826, %v5279
      %v5286 = vshrl.u32 2131351028, %v5280
      %v5287 = vor.u32 %v5285, %v5286
      %v5288 = vshll.u32 2131351028, %v5279
      %v5289 = vshrl.u32 2102212464, %v5280
      %v5290 = vor.u32 %v5288, %v5289
      %v5291 = vshll.u32 2102212464, %v5279
      %v5292 = vshrl.u32 920167782, %v5280
      %v5293 = vor.u32 %v5291, %v5292
      %v5294 = vshll.u32 920167782, %v5279
      %v5295 = vshrl.u32 1326507024, %v5280
      %v5296 = vor.u32 %v5294, %v5295
      %vm5297 = vcmp.lt.s32.totalorder %v5278, 1
      %vm5298 = vcmp.lt.s32.totalorder %v5278, 2
      %vm5299 = vcmp.lt.s32.totalorder %v5278, 3
      %vm5300 = vcmp.lt.s32.totalorder %v5278, 4
      %v5301 = vsel %vm5297, %v5281, %v5284
      %v5302 = vsel %vm5300, %v5290, 2102212464
      %v5303 = vsel %vm5299, %v5287, %v5302
      %v5304 = vsel %vm5298, %v5301, %v5303
      %v5305 = vsel %vm5297, %v5284, %v5287
      %v5306 = vsel %vm5300, %v5293, 920167782
      %v5307 = vsel %vm5299, %v5290, %v5306
      %v5308 = vsel %vm5298, %v5305, %v5307
      %v5309 = vsel %vm5297, %v5287, %v5290
      %v5310 = vsel %vm5300, %v5296, 1326507024
      %v5311 = vsel %vm5299, %v5293, %v5310
      %v5312 = vsel %vm5298, %v5309, %v5311
      %v5313 = vshll.u32 %v5273, 8
      %v5314 = vmul.u32.u64.compose %v5313, %v5312
      %v5315 = vextract.low.u32 %v5314
      %v5316 = vextract.high.u32 %v5314
      %v5317 = vmul.u32.u64.compose %v5313, %v5308
      %v5318 = vextract.low.u32 %v5317
      %v5319 = vextract.high.u32 %v5317
      %v5320 = vmul.u32 %v5313, %v5304
      %v5321 = vadd.s32 %v5316, %v5318
      %vm5322 = vc.u32 %v5316, %v5318
      %v5323 = vadd.s32 %v5319, 1
      %v5324 = vsel %vm5322, %v5323, %v5319
      %v5325 = vadd.s32 %v5320, %v5324
      %v5326 = vadd.s32 %v5325, 536870912
      %v5327 = vshrl.u32 %v5326, 30
      %v5328 = vshll.u32 %v5327, 30
      %v5329 = vsub.s32 %v5325, %v5328
      %vm5330 = vcmp.lt.s32.totalorder %v5329, 0
      %v5331 = vsub.s32 0, %v5329
      %v5332 = vsel %vm5330, %v5331, %v5329
      %v5333 = vclz %v5332
      %v5334 = vsub.s32 %v5333, 2
      %vm5335 = vcmp.gt.s32.totalorder 0, %v5334
      %v5336 = vsel %vm5335, 0, %v5334
      %v5337 = vsub.s32 32, %v5336
      %v5338 = vshll.u32 %v5329, %v5336
      %v5339 = vshrl.u32 %v5321, %v5337
      %v5340 = vor.u32 %v5338, %v5339
      %v5341 = vsub.s32 4294967266, %v5336
      %v5342 = vadd.s32 %v5341, 127
      %v5343 = vshll.u32 %v5342, 23
      %v5344 = vor.u32 4788187, %v5343
      %v5345 = vand.u32 2147483647, %v5344
      %v5347 = vcvt.s32.f32 %v5340
      %v5348 = vmul.f32 %v5347, %v5345
      %v5349 = vxor.u32 %v5348, 2147483648
      %v5350 = vsel %vm5267, %v5349, %v5348
      %v5351 = vsub.s32 4, %v5327
      %v5352 = vsel %vm5267, %v5351, %v5327
      %v5353 = vsel %vm5266, %v4403, %v5350
      %v5354 = vsel %vm5266, 0, %v5352
      %v5355 = vcosq.f32.pop %v5353
      %v5356 = vsinq.f32.pop %v5353
      %vm5357 = vweird.f32 %v4403
      %v5358 = vadd.s32 %v5354, 3
      %v5359 = vand.u32 %v5358, 3
      %vm5360 = vcmp.lt.s32.totalorder %v5359, 2
      %vm5361 = vcmp.eq.s32.totalorder %v5359, 0
      %v5362 = vxor.u32 %v5356, 2147483648
      %v5363 = vsel %vm5361, %v5355, %v5362
      %vm5364 = vcmp.eq.s32.totalorder %v5359, 2
      %v5365 = vxor.u32 %v5355, 2147483648
      %v5366 = vsel %vm5364, %v5365, %v5356
      %v5367 = vsel %vm5360, %v5363, %v5366
      %v5368 = vsel %vm5357, nan, %v5367
      %v5369 = vand.u32 2147483647, %v4406
      %vm5370 = vcmp.le.f32.partialorder %v5369, 0.7853982
      %vm5371 = vcmp.lt.s32.totalorder %v4406, 0
      %v5372 = vand.u32 %v4406, 2139095040
      %v5373 = vshrl.u32 %v5372, 23
      %v5374 = vsub.s32 %v5373, 127
      %v5375 = vand.u32 2147483647, %v4406
      %v5376 = vand.u32 %v5375, 8388607
      %v5377 = vor.u32 %v5376, 8388608
      %v5378 = vsub.s32 0, %v5377
      %v5379 = vadd.s32 %v5374, 1
      %vm5380 = vcmp.gt.s32.totalorder %v5379, 0
      %v5381 = vsel %vm5380, %v5379, 0
      %v5382 = vshrl.u32 %v5381, 5
      %v5383 = vand.u32 %v5381, 31
      %v5384 = vsub.s32 32, %v5383
      %v5385 = vshrl.u32 683565275, %v5384
      %v5386 = vshll.u32 683565275, %v5383
      %v5387 = vshrl.u32 2475754826, %v5384
      %v5388 = vor.u32 %v5386, %v5387
      %v5389 = vshll.u32 2475754826, %v5383
      %v5390 = vshrl.u32 2131351028, %v5384
      %v5391 = vor.u32 %v5389, %v5390
      %v5392 = vshll.u32 2131351028, %v5383
      %v5393 = vshrl.u32 2102212464, %v5384
      %v5394 = vor.u32 %v5392, %v5393
      %v5395 = vshll.u32 2102212464, %v5383
      %v5396 = vshrl.u32 920167782, %v5384
      %v5397 = vor.u32 %v5395, %v5396
      %v5398 = vshll.u32 920167782, %v5383
      %v5399 = vshrl.u32 1326507024, %v5384
      %v5400 = vor.u32 %v5398, %v5399
      %vm5401 = vcmp.lt.s32.totalorder %v5382, 1
      %vm5402 = vcmp.lt.s32.totalorder %v5382, 2
      %vm5403 = vcmp.lt.s32.totalorder %v5382, 3
      %vm5404 = vcmp.lt.s32.totalorder %v5382, 4
      %v5405 = vsel %vm5401, %v5385, %v5388
      %v5406 = vsel %vm5404, %v5394, 2102212464
      %v5407 = vsel %vm5403, %v5391, %v5406
      %v5408 = vsel %vm5402, %v5405, %v5407
      %v5409 = vsel %vm5401, %v5388, %v5391
      %v5410 = vsel %vm5404, %v5397, 920167782
      %v5411 = vsel %vm5403, %v5394, %v5410
      %v5412 = vsel %vm5402, %v5409, %v5411
      %v5413 = vsel %vm5401, %v5391, %v5394
      %v5414 = vsel %vm5404, %v5400, 1326507024
      %v5415 = vsel %vm5403, %v5397, %v5414
      %v5416 = vsel %vm5402, %v5413, %v5415
      %v5417 = vshll.u32 %v5377, 8
      %v5418 = vmul.u32.u64.compose %v5417, %v5416
      %v5419 = vextract.low.u32 %v5418
      %v5420 = vextract.high.u32 %v5418
      %v5421 = vmul.u32.u64.compose %v5417, %v5412
      %v5422 = vextract.low.u32 %v5421
      %v5423 = vextract.high.u32 %v5421
      %v5424 = vmul.u32 %v5417, %v5408
      %v5425 = vadd.s32 %v5420, %v5422
      %vm5426 = vc.u32 %v5420, %v5422
      %v5427 = vadd.s32 %v5423, 1
      %v5428 = vsel %vm5426, %v5427, %v5423
      %v5429 = vadd.s32 %v5424, %v5428
      %v5430 = vadd.s32 %v5429, 536870912
      %v5431 = vshrl.u32 %v5430, 30
      %v5432 = vshll.u32 %v5431, 30
      %v5433 = vsub.s32 %v5429, %v5432
      %vm5434 = vcmp.lt.s32.totalorder %v5433, 0
      %v5435 = vsub.s32 0, %v5433
      %v5436 = vsel %vm5434, %v5435, %v5433
      %v5437 = vclz %v5436
      %v5438 = vsub.s32 %v5437, 2
      %vm5439 = vcmp.gt.s32.totalorder 0, %v5438
      %v5440 = vsel %vm5439, 0, %v5438
      %v5441 = vsub.s32 32, %v5440
      %v5442 = vshll.u32 %v5433, %v5440
      %v5443 = vshrl.u32 %v5425, %v5441
      %v5444 = vor.u32 %v5442, %v5443
      %v5445 = vsub.s32 4294967266, %v5440
      %v5446 = vadd.s32 %v5445, 127
      %v5447 = vshll.u32 %v5446, 23
      %v5448 = vor.u32 4788187, %v5447
      %v5449 = vand.u32 2147483647, %v5448
      %v5451 = vcvt.s32.f32 %v5444
      %v5452 = vmul.f32 %v5451, %v5449
      %v5453 = vxor.u32 %v5452, 2147483648
      %v5454 = vsel %vm5371, %v5453, %v5452
      %v5455 = vsub.s32 4, %v5431
      %v5456 = vsel %vm5371, %v5455, %v5431
      %v5457 = vsel %vm5370, %v4406, %v5454
      %v5458 = vsel %vm5370, 0, %v5456
      %v5459 = vcosq.f32.pop %v5457
      %v5460 = vsinq.f32.pop %v5457
      %vm5461 = vweird.f32 %v4406
      %v5462 = vadd.s32 %v5458, 3
      %v5463 = vand.u32 %v5462, 3
      %vm5464 = vcmp.lt.s32.totalorder %v5463, 2
      %vm5465 = vcmp.eq.s32.totalorder %v5463, 0
      %v5466 = vxor.u32 %v5460, 2147483648
      %v5467 = vsel %vm5465, %v5459, %v5466
      %vm5468 = vcmp.eq.s32.totalorder %v5463, 2
      %v5469 = vxor.u32 %v5459, 2147483648
      %v5470 = vsel %vm5468, %v5469, %v5460
      %v5471 = vsel %vm5464, %v5467, %v5470
      %v5472 = vsel %vm5461, nan, %v5471
      %v5473 = vand.u32 2147483647, %v4411
      %vm5474 = vcmp.le.f32.partialorder %v5473, 0.7853982
      %vm5475 = vcmp.lt.s32.totalorder %v4411, 0
      %v5476 = vand.u32 %v4411, 2139095040
      %v5477 = vshrl.u32 %v5476, 23
      %v5478 = vsub.s32 %v5477, 127
      %v5479 = vand.u32 2147483647, %v4411
      %v5480 = vand.u32 %v5479, 8388607
      %v5481 = vor.u32 %v5480, 8388608
      %v5482 = vsub.s32 0, %v5481
      %v5483 = vadd.s32 %v5478, 1
      %vm5484 = vcmp.gt.s32.totalorder %v5483, 0
      %v5485 = vsel %vm5484, %v5483, 0
      %v5486 = vshrl.u32 %v5485, 5
      %v5487 = vand.u32 %v5485, 31
      %v5488 = vsub.s32 32, %v5487
      %v5489 = vshrl.u32 683565275, %v5488
      %v5490 = vshll.u32 683565275, %v5487
      %v5491 = vshrl.u32 2475754826, %v5488
      %v5492 = vor.u32 %v5490, %v5491
      %v5493 = vshll.u32 2475754826, %v5487
      %v5494 = vshrl.u32 2131351028, %v5488
      %v5495 = vor.u32 %v5493, %v5494
      %v5496 = vshll.u32 2131351028, %v5487
      %v5497 = vshrl.u32 2102212464, %v5488
      %v5498 = vor.u32 %v5496, %v5497
      %v5499 = vshll.u32 2102212464, %v5487
      %v5500 = vshrl.u32 920167782, %v5488
      %v5501 = vor.u32 %v5499, %v5500
      %v5502 = vshll.u32 920167782, %v5487
      %v5503 = vshrl.u32 1326507024, %v5488
      %v5504 = vor.u32 %v5502, %v5503
      %vm5505 = vcmp.lt.s32.totalorder %v5486, 1
      %vm5506 = vcmp.lt.s32.totalorder %v5486, 2
      %vm5507 = vcmp.lt.s32.totalorder %v5486, 3
      %vm5508 = vcmp.lt.s32.totalorder %v5486, 4
      %v5509 = vsel %vm5505, %v5489, %v5492
      %v5510 = vsel %vm5508, %v5498, 2102212464
      %v5511 = vsel %vm5507, %v5495, %v5510
      %v5512 = vsel %vm5506, %v5509, %v5511
      %v5513 = vsel %vm5505, %v5492, %v5495
      %v5514 = vsel %vm5508, %v5501, 920167782
      %v5515 = vsel %vm5507, %v5498, %v5514
      %v5516 = vsel %vm5506, %v5513, %v5515
      %v5517 = vsel %vm5505, %v5495, %v5498
      %v5518 = vsel %vm5508, %v5504, 1326507024
      %v5519 = vsel %vm5507, %v5501, %v5518
      %v5520 = vsel %vm5506, %v5517, %v5519
      %v5521 = vshll.u32 %v5481, 8
      %v5522 = vmul.u32.u64.compose %v5521, %v5520
      %v5523 = vextract.low.u32 %v5522
      %v5524 = vextract.high.u32 %v5522
      %v5525 = vmul.u32.u64.compose %v5521, %v5516
      %v5526 = vextract.low.u32 %v5525
      %v5527 = vextract.high.u32 %v5525
      %v5528 = vmul.u32 %v5521, %v5512
      %v5529 = vadd.s32 %v5524, %v5526
      %vm5530 = vc.u32 %v5524, %v5526
      %v5531 = vadd.s32 %v5527, 1
      %v5532 = vsel %vm5530, %v5531, %v5527
      %v5533 = vadd.s32 %v5528, %v5532
      %v5534 = vadd.s32 %v5533, 536870912
      %v5535 = vshrl.u32 %v5534, 30
      %v5536 = vshll.u32 %v5535, 30
      %v5537 = vsub.s32 %v5533, %v5536
      %vm5538 = vcmp.lt.s32.totalorder %v5537, 0
      %v5539 = vsub.s32 0, %v5537
      %v5540 = vsel %vm5538, %v5539, %v5537
      %v5541 = vclz %v5540
      %v5542 = vsub.s32 %v5541, 2
      %vm5543 = vcmp.gt.s32.totalorder 0, %v5542
      %v5544 = vsel %vm5543, 0, %v5542
      %v5545 = vsub.s32 32, %v5544
      %v5546 = vshll.u32 %v5537, %v5544
      %v5547 = vshrl.u32 %v5529, %v5545
      %v5548 = vor.u32 %v5546, %v5547
      %v5549 = vsub.s32 4294967266, %v5544
      %v5550 = vadd.s32 %v5549, 127
      %v5551 = vshll.u32 %v5550, 23
      %v5552 = vor.u32 4788187, %v5551
      %v5553 = vand.u32 2147483647, %v5552
      %v5555 = vcvt.s32.f32 %v5548
      %v5556 = vmul.f32 %v5555, %v5553
      %v5557 = vxor.u32 %v5556, 2147483648
      %v5558 = vsel %vm5475, %v5557, %v5556
      %v5559 = vsub.s32 4, %v5535
      %v5560 = vsel %vm5475, %v5559, %v5535
      %v5561 = vsel %vm5474, %v4411, %v5558
      %v5562 = vsel %vm5474, 0, %v5560
      %v5563 = vcosq.f32.pop %v5561
      %v5564 = vsinq.f32.pop %v5561
      %vm5565 = vweird.f32 %v4411
      %v5566 = vadd.s32 %v5562, 3
      %v5567 = vand.u32 %v5566, 3
      %vm5568 = vcmp.lt.s32.totalorder %v5567, 2
      %vm5569 = vcmp.eq.s32.totalorder %v5567, 0
      %v5570 = vxor.u32 %v5564, 2147483648
      %v5571 = vsel %vm5569, %v5563, %v5570
      %vm5572 = vcmp.eq.s32.totalorder %v5567, 2
      %v5573 = vxor.u32 %v5563, 2147483648
      %v5574 = vsel %vm5572, %v5573, %v5564
      %v5575 = vsel %vm5568, %v5571, %v5574
      %v5576 = vsel %vm5565, nan, %v5575
      %v5577 = vand.u32 2147483647, %v4414
      %vm5578 = vcmp.le.f32.partialorder %v5577, 0.7853982
      %vm5579 = vcmp.lt.s32.totalorder %v4414, 0
      %v5580 = vand.u32 %v4414, 2139095040
      %v5581 = vshrl.u32 %v5580, 23
      %v5582 = vsub.s32 %v5581, 127
      %v5583 = vand.u32 2147483647, %v4414
      %v5584 = vand.u32 %v5583, 8388607
      %v5585 = vor.u32 %v5584, 8388608
      %v5586 = vsub.s32 0, %v5585
      %v5587 = vadd.s32 %v5582, 1
      %vm5588 = vcmp.gt.s32.totalorder %v5587, 0
      %v5589 = vsel %vm5588, %v5587, 0
      %v5590 = vshrl.u32 %v5589, 5
      %v5591 = vand.u32 %v5589, 31
      %v5592 = vsub.s32 32, %v5591
      %v5593 = vshrl.u32 683565275, %v5592
      %v5594 = vshll.u32 683565275, %v5591
      %v5595 = vshrl.u32 2475754826, %v5592
      %v5596 = vor.u32 %v5594, %v5595
      %v5597 = vshll.u32 2475754826, %v5591
      %v5598 = vshrl.u32 2131351028, %v5592
      %v5599 = vor.u32 %v5597, %v5598
      %v5600 = vshll.u32 2131351028, %v5591
      %v5601 = vshrl.u32 2102212464, %v5592
      %v5602 = vor.u32 %v5600, %v5601
      %v5603 = vshll.u32 2102212464, %v5591
      %v5604 = vshrl.u32 920167782, %v5592
      %v5605 = vor.u32 %v5603, %v5604
      %v5606 = vshll.u32 920167782, %v5591
      %v5607 = vshrl.u32 1326507024, %v5592
      %v5608 = vor.u32 %v5606, %v5607
      %vm5609 = vcmp.lt.s32.totalorder %v5590, 1
      %vm5610 = vcmp.lt.s32.totalorder %v5590, 2
      %vm5611 = vcmp.lt.s32.totalorder %v5590, 3
      %vm5612 = vcmp.lt.s32.totalorder %v5590, 4
      %v5613 = vsel %vm5609, %v5593, %v5596
      %v5614 = vsel %vm5612, %v5602, 2102212464
      %v5615 = vsel %vm5611, %v5599, %v5614
      %v5616 = vsel %vm5610, %v5613, %v5615
      %v5617 = vsel %vm5609, %v5596, %v5599
      %v5618 = vsel %vm5612, %v5605, 920167782
      %v5619 = vsel %vm5611, %v5602, %v5618
      %v5620 = vsel %vm5610, %v5617, %v5619
      %v5621 = vsel %vm5609, %v5599, %v5602
      %v5622 = vsel %vm5612, %v5608, 1326507024
      %v5623 = vsel %vm5611, %v5605, %v5622
      %v5624 = vsel %vm5610, %v5621, %v5623
      %v5625 = vshll.u32 %v5585, 8
      %v5626 = vmul.u32.u64.compose %v5625, %v5624
      %v5627 = vextract.low.u32 %v5626
      %v5628 = vextract.high.u32 %v5626
      %v5629 = vmul.u32.u64.compose %v5625, %v5620
      %v5630 = vextract.low.u32 %v5629
      %v5631 = vextract.high.u32 %v5629
      %v5632 = vmul.u32 %v5625, %v5616
      %v5633 = vadd.s32 %v5628, %v5630
      %vm5634 = vc.u32 %v5628, %v5630
      %v5635 = vadd.s32 %v5631, 1
      %v5636 = vsel %vm5634, %v5635, %v5631
      %v5637 = vadd.s32 %v5632, %v5636
      %v5638 = vadd.s32 %v5637, 536870912
      %v5639 = vshrl.u32 %v5638, 30
      %v5640 = vshll.u32 %v5639, 30
      %v5641 = vsub.s32 %v5637, %v5640
      %vm5642 = vcmp.lt.s32.totalorder %v5641, 0
      %v5643 = vsub.s32 0, %v5641
      %v5644 = vsel %vm5642, %v5643, %v5641
      %v5645 = vclz %v5644
      %v5646 = vsub.s32 %v5645, 2
      %vm5647 = vcmp.gt.s32.totalorder 0, %v5646
      %v5648 = vsel %vm5647, 0, %v5646
      %v5649 = vsub.s32 32, %v5648
      %v5650 = vshll.u32 %v5641, %v5648
      %v5651 = vshrl.u32 %v5633, %v5649
      %v5652 = vor.u32 %v5650, %v5651
      %v5653 = vsub.s32 4294967266, %v5648
      %v5654 = vadd.s32 %v5653, 127
      %v5655 = vshll.u32 %v5654, 23
      %v5656 = vor.u32 4788187, %v5655
      %v5657 = vand.u32 2147483647, %v5656
      %v5659 = vcvt.s32.f32 %v5652
      %v5660 = vmul.f32 %v5659, %v5657
      %v5661 = vxor.u32 %v5660, 2147483648
      %v5662 = vsel %vm5579, %v5661, %v5660
      %v5663 = vsub.s32 4, %v5639
      %v5664 = vsel %vm5579, %v5663, %v5639
      %v5665 = vsel %vm5578, %v4414, %v5662
      %v5666 = vsel %vm5578, 0, %v5664
      %v5667 = vcosq.f32.pop %v5665
      %v5668 = vsinq.f32.pop %v5665
      %vm5669 = vweird.f32 %v4414
      %v5670 = vadd.s32 %v5666, 3
      %v5671 = vand.u32 %v5670, 3
      %vm5672 = vcmp.lt.s32.totalorder %v5671, 2
      %vm5673 = vcmp.eq.s32.totalorder %v5671, 0
      %v5674 = vxor.u32 %v5668, 2147483648
      %v5675 = vsel %vm5673, %v5667, %v5674
      %vm5676 = vcmp.eq.s32.totalorder %v5671, 2
      %v5677 = vxor.u32 %v5667, 2147483648
      %v5678 = vsel %vm5676, %v5677, %v5668
      %v5679 = vsel %vm5672, %v5675, %v5678
      %v5680 = vsel %vm5669, nan, %v5679
      %v5681 = vand.u32 2147483647, %v4419
      %vm5682 = vcmp.le.f32.partialorder %v5681, 0.7853982
      %vm5683 = vcmp.lt.s32.totalorder %v4419, 0
      %v5684 = vand.u32 %v4419, 2139095040
      %v5685 = vshrl.u32 %v5684, 23
      %v5686 = vsub.s32 %v5685, 127
      %v5687 = vand.u32 2147483647, %v4419
      %v5688 = vand.u32 %v5687, 8388607
      %v5689 = vor.u32 %v5688, 8388608
      %v5690 = vsub.s32 0, %v5689
      %v5691 = vadd.s32 %v5686, 1
      %vm5692 = vcmp.gt.s32.totalorder %v5691, 0
      %v5693 = vsel %vm5692, %v5691, 0
      %v5694 = vshrl.u32 %v5693, 5
      %v5695 = vand.u32 %v5693, 31
      %v5696 = vsub.s32 32, %v5695
      %v5697 = vshrl.u32 683565275, %v5696
      %v5698 = vshll.u32 683565275, %v5695
      %v5699 = vshrl.u32 2475754826, %v5696
      %v5700 = vor.u32 %v5698, %v5699
      %v5701 = vshll.u32 2475754826, %v5695
      %v5702 = vshrl.u32 2131351028, %v5696
      %v5703 = vor.u32 %v5701, %v5702
      %v5704 = vshll.u32 2131351028, %v5695
      %v5705 = vshrl.u32 2102212464, %v5696
      %v5706 = vor.u32 %v5704, %v5705
      %v5707 = vshll.u32 2102212464, %v5695
      %v5708 = vshrl.u32 920167782, %v5696
      %v5709 = vor.u32 %v5707, %v5708
      %v5710 = vshll.u32 920167782, %v5695
      %v5711 = vshrl.u32 1326507024, %v5696
      %v5712 = vor.u32 %v5710, %v5711
      %vm5713 = vcmp.lt.s32.totalorder %v5694, 1
      %vm5714 = vcmp.lt.s32.totalorder %v5694, 2
      %vm5715 = vcmp.lt.s32.totalorder %v5694, 3
      %vm5716 = vcmp.lt.s32.totalorder %v5694, 4
      %v5717 = vsel %vm5713, %v5697, %v5700
      %v5718 = vsel %vm5716, %v5706, 2102212464
      %v5719 = vsel %vm5715, %v5703, %v5718
      %v5720 = vsel %vm5714, %v5717, %v5719
      %v5721 = vsel %vm5713, %v5700, %v5703
      %v5722 = vsel %vm5716, %v5709, 920167782
      %v5723 = vsel %vm5715, %v5706, %v5722
      %v5724 = vsel %vm5714, %v5721, %v5723
      %v5725 = vsel %vm5713, %v5703, %v5706
      %v5726 = vsel %vm5716, %v5712, 1326507024
      %v5727 = vsel %vm5715, %v5709, %v5726
      %v5728 = vsel %vm5714, %v5725, %v5727
      %v5729 = vshll.u32 %v5689, 8
      %v5730 = vmul.u32.u64.compose %v5729, %v5728
      %v5731 = vextract.low.u32 %v5730
      %v5732 = vextract.high.u32 %v5730
      %v5733 = vmul.u32.u64.compose %v5729, %v5724
      %v5734 = vextract.low.u32 %v5733
      %v5735 = vextract.high.u32 %v5733
      %v5736 = vmul.u32 %v5729, %v5720
      %v5737 = vadd.s32 %v5732, %v5734
      %vm5738 = vc.u32 %v5732, %v5734
      %v5739 = vadd.s32 %v5735, 1
      %v5740 = vsel %vm5738, %v5739, %v5735
      %v5741 = vadd.s32 %v5736, %v5740
      %v5742 = vadd.s32 %v5741, 536870912
      %v5743 = vshrl.u32 %v5742, 30
      %v5744 = vshll.u32 %v5743, 30
      %v5745 = vsub.s32 %v5741, %v5744
      %vm5746 = vcmp.lt.s32.totalorder %v5745, 0
      %v5747 = vsub.s32 0, %v5745
      %v5748 = vsel %vm5746, %v5747, %v5745
      %v5749 = vclz %v5748
      %v5750 = vsub.s32 %v5749, 2
      %vm5751 = vcmp.gt.s32.totalorder 0, %v5750
      %v5752 = vsel %vm5751, 0, %v5750
      %v5753 = vsub.s32 32, %v5752
      %v5754 = vshll.u32 %v5745, %v5752
      %v5755 = vshrl.u32 %v5737, %v5753
      %v5756 = vor.u32 %v5754, %v5755
      %v5757 = vsub.s32 4294967266, %v5752
      %v5758 = vadd.s32 %v5757, 127
      %v5759 = vshll.u32 %v5758, 23
      %v5760 = vor.u32 4788187, %v5759
      %v5761 = vand.u32 2147483647, %v5760
      %v5763 = vcvt.s32.f32 %v5756
      %v5764 = vmul.f32 %v5763, %v5761
      %v5765 = vxor.u32 %v5764, 2147483648
      %v5766 = vsel %vm5683, %v5765, %v5764
      %v5767 = vsub.s32 4, %v5743
      %v5768 = vsel %vm5683, %v5767, %v5743
      %v5769 = vsel %vm5682, %v4419, %v5766
      %v5770 = vsel %vm5682, 0, %v5768
      %v5771 = vcosq.f32.pop %v5769
      %v5772 = vsinq.f32.pop %v5769
      %vm5773 = vweird.f32 %v4419
      %v5774 = vadd.s32 %v5770, 3
      %v5775 = vand.u32 %v5774, 3
      %vm5776 = vcmp.lt.s32.totalorder %v5775, 2
      %vm5777 = vcmp.eq.s32.totalorder %v5775, 0
      %v5778 = vxor.u32 %v5772, 2147483648
      %v5779 = vsel %vm5777, %v5771, %v5778
      %vm5780 = vcmp.eq.s32.totalorder %v5775, 2
      %v5781 = vxor.u32 %v5771, 2147483648
      %v5782 = vsel %vm5780, %v5781, %v5772
      %v5783 = vsel %vm5776, %v5779, %v5782
      %v5784 = vsel %vm5773, nan, %v5783
      %v5785 = vand.u32 2147483647, %v4422
      %vm5786 = vcmp.le.f32.partialorder %v5785, 0.7853982
      %vm5787 = vcmp.lt.s32.totalorder %v4422, 0
      %v5788 = vand.u32 %v4422, 2139095040
      %v5789 = vshrl.u32 %v5788, 23
      %v5790 = vsub.s32 %v5789, 127
      %v5791 = vand.u32 2147483647, %v4422
      %v5792 = vand.u32 %v5791, 8388607
      %v5793 = vor.u32 %v5792, 8388608
      %v5794 = vsub.s32 0, %v5793
      %v5795 = vadd.s32 %v5790, 1
      %vm5796 = vcmp.gt.s32.totalorder %v5795, 0
      %v5797 = vsel %vm5796, %v5795, 0
      %v5798 = vshrl.u32 %v5797, 5
      %v5799 = vand.u32 %v5797, 31
      %v5800 = vsub.s32 32, %v5799
      %v5801 = vshrl.u32 683565275, %v5800
      %v5802 = vshll.u32 683565275, %v5799
      %v5803 = vshrl.u32 2475754826, %v5800
      %v5804 = vor.u32 %v5802, %v5803
      %v5805 = vshll.u32 2475754826, %v5799
      %v5806 = vshrl.u32 2131351028, %v5800
      %v5807 = vor.u32 %v5805, %v5806
      %v5808 = vshll.u32 2131351028, %v5799
      %v5809 = vshrl.u32 2102212464, %v5800
      %v5810 = vor.u32 %v5808, %v5809
      %v5811 = vshll.u32 2102212464, %v5799
      %v5812 = vshrl.u32 920167782, %v5800
      %v5813 = vor.u32 %v5811, %v5812
      %v5814 = vshll.u32 920167782, %v5799
      %v5815 = vshrl.u32 1326507024, %v5800
      %v5816 = vor.u32 %v5814, %v5815
      %vm5817 = vcmp.lt.s32.totalorder %v5798, 1
      %vm5818 = vcmp.lt.s32.totalorder %v5798, 2
      %vm5819 = vcmp.lt.s32.totalorder %v5798, 3
      %vm5820 = vcmp.lt.s32.totalorder %v5798, 4
      %v5821 = vsel %vm5817, %v5801, %v5804
      %v5822 = vsel %vm5820, %v5810, 2102212464
      %v5823 = vsel %vm5819, %v5807, %v5822
      %v5824 = vsel %vm5818, %v5821, %v5823
      %v5825 = vsel %vm5817, %v5804, %v5807
      %v5826 = vsel %vm5820, %v5813, 920167782
      %v5827 = vsel %vm5819, %v5810, %v5826
      %v5828 = vsel %vm5818, %v5825, %v5827
      %v5829 = vsel %vm5817, %v5807, %v5810
      %v5830 = vsel %vm5820, %v5816, 1326507024
      %v5831 = vsel %vm5819, %v5813, %v5830
      %v5832 = vsel %vm5818, %v5829, %v5831
      %v5833 = vshll.u32 %v5793, 8
      %v5834 = vmul.u32.u64.compose %v5833, %v5832
      %v5835 = vextract.low.u32 %v5834
      %v5836 = vextract.high.u32 %v5834
      %v5837 = vmul.u32.u64.compose %v5833, %v5828
      %v5838 = vextract.low.u32 %v5837
      %v5839 = vextract.high.u32 %v5837
      %v5840 = vmul.u32 %v5833, %v5824
      %v5841 = vadd.s32 %v5836, %v5838
      %vm5842 = vc.u32 %v5836, %v5838
      %v5843 = vadd.s32 %v5839, 1
      %v5844 = vsel %vm5842, %v5843, %v5839
      %v5845 = vadd.s32 %v5840, %v5844
      %v5846 = vadd.s32 %v5845, 536870912
      %v5847 = vshrl.u32 %v5846, 30
      %v5848 = vshll.u32 %v5847, 30
      %v5849 = vsub.s32 %v5845, %v5848
      %vm5850 = vcmp.lt.s32.totalorder %v5849, 0
      %v5851 = vsub.s32 0, %v5849
      %v5852 = vsel %vm5850, %v5851, %v5849
      %v5853 = vclz %v5852
      %v5854 = vsub.s32 %v5853, 2
      %vm5855 = vcmp.gt.s32.totalorder 0, %v5854
      %v5856 = vsel %vm5855, 0, %v5854
      %v5857 = vsub.s32 32, %v5856
      %v5858 = vshll.u32 %v5849, %v5856
      %v5859 = vshrl.u32 %v5841, %v5857
      %v5860 = vor.u32 %v5858, %v5859
      %v5861 = vsub.s32 4294967266, %v5856
      %v5862 = vadd.s32 %v5861, 127
      %v5863 = vshll.u32 %v5862, 23
      %v5864 = vor.u32 4788187, %v5863
      %v5865 = vand.u32 2147483647, %v5864
      %v5867 = vcvt.s32.f32 %v5860
      %v5868 = vmul.f32 %v5867, %v5865
      %v5869 = vxor.u32 %v5868, 2147483648
      %v5870 = vsel %vm5787, %v5869, %v5868
      %v5871 = vsub.s32 4, %v5847
      %v5872 = vsel %vm5787, %v5871, %v5847
      %v5873 = vsel %vm5786, %v4422, %v5870
      %v5874 = vsel %vm5786, 0, %v5872
      %v5875 = vcosq.f32.pop %v5873
      %v5876 = vsinq.f32.pop %v5873
      %vm5877 = vweird.f32 %v4422
      %v5878 = vadd.s32 %v5874, 3
      %v5879 = vand.u32 %v5878, 3
      %vm5880 = vcmp.lt.s32.totalorder %v5879, 2
      %vm5881 = vcmp.eq.s32.totalorder %v5879, 0
      %v5882 = vxor.u32 %v5876, 2147483648
      %v5883 = vsel %vm5881, %v5875, %v5882
      %vm5884 = vcmp.eq.s32.totalorder %v5879, 2
      %v5885 = vxor.u32 %v5875, 2147483648
      %v5886 = vsel %vm5884, %v5885, %v5876
      %v5887 = vsel %vm5880, %v5883, %v5886
      %v5888 = vsel %vm5877, nan, %v5887
      %v5889 = vand.u32 2147483647, %v4427
      %vm5890 = vcmp.le.f32.partialorder %v5889, 0.7853982
      %vm5891 = vcmp.lt.s32.totalorder %v4427, 0
      %v5892 = vand.u32 %v4427, 2139095040
      %v5893 = vshrl.u32 %v5892, 23
      %v5894 = vsub.s32 %v5893, 127
      %v5895 = vand.u32 2147483647, %v4427
      %v5896 = vand.u32 %v5895, 8388607
      %v5897 = vor.u32 %v5896, 8388608
      %v5898 = vsub.s32 0, %v5897
      %v5899 = vadd.s32 %v5894, 1
      %vm5900 = vcmp.gt.s32.totalorder %v5899, 0
      %v5901 = vsel %vm5900, %v5899, 0
      %v5902 = vshrl.u32 %v5901, 5
      %v5903 = vand.u32 %v5901, 31
      %v5904 = vsub.s32 32, %v5903
      %v5905 = vshrl.u32 683565275, %v5904
      %v5906 = vshll.u32 683565275, %v5903
      %v5907 = vshrl.u32 2475754826, %v5904
      %v5908 = vor.u32 %v5906, %v5907
      %v5909 = vshll.u32 2475754826, %v5903
      %v5910 = vshrl.u32 2131351028, %v5904
      %v5911 = vor.u32 %v5909, %v5910
      %v5912 = vshll.u32 2131351028, %v5903
      %v5913 = vshrl.u32 2102212464, %v5904
      %v5914 = vor.u32 %v5912, %v5913
      %v5915 = vshll.u32 2102212464, %v5903
      %v5916 = vshrl.u32 920167782, %v5904
      %v5917 = vor.u32 %v5915, %v5916
      %v5918 = vshll.u32 920167782, %v5903
      %v5919 = vshrl.u32 1326507024, %v5904
      %v5920 = vor.u32 %v5918, %v5919
      %vm5921 = vcmp.lt.s32.totalorder %v5902, 1
      %vm5922 = vcmp.lt.s32.totalorder %v5902, 2
      %vm5923 = vcmp.lt.s32.totalorder %v5902, 3
      %vm5924 = vcmp.lt.s32.totalorder %v5902, 4
      %v5925 = vsel %vm5921, %v5905, %v5908
      %v5926 = vsel %vm5924, %v5914, 2102212464
      %v5927 = vsel %vm5923, %v5911, %v5926
      %v5928 = vsel %vm5922, %v5925, %v5927
      %v5929 = vsel %vm5921, %v5908, %v5911
      %v5930 = vsel %vm5924, %v5917, 920167782
      %v5931 = vsel %vm5923, %v5914, %v5930
      %v5932 = vsel %vm5922, %v5929, %v5931
      %v5933 = vsel %vm5921, %v5911, %v5914
      %v5934 = vsel %vm5924, %v5920, 1326507024
      %v5935 = vsel %vm5923, %v5917, %v5934
      %v5936 = vsel %vm5922, %v5933, %v5935
      %v5937 = vshll.u32 %v5897, 8
      %v5938 = vmul.u32.u64.compose %v5937, %v5936
      %v5939 = vextract.low.u32 %v5938
      %v5940 = vextract.high.u32 %v5938
      %v5941 = vmul.u32.u64.compose %v5937, %v5932
      %v5942 = vextract.low.u32 %v5941
      %v5943 = vextract.high.u32 %v5941
      %v5944 = vmul.u32 %v5937, %v5928
      %v5945 = vadd.s32 %v5940, %v5942
      %vm5946 = vc.u32 %v5940, %v5942
      %v5947 = vadd.s32 %v5943, 1
      %v5948 = vsel %vm5946, %v5947, %v5943
      %v5949 = vadd.s32 %v5944, %v5948
      %v5950 = vadd.s32 %v5949, 536870912
      %v5951 = vshrl.u32 %v5950, 30
      %v5952 = vshll.u32 %v5951, 30
      %v5953 = vsub.s32 %v5949, %v5952
      %vm5954 = vcmp.lt.s32.totalorder %v5953, 0
      %v5955 = vsub.s32 0, %v5953
      %v5956 = vsel %vm5954, %v5955, %v5953
      %v5957 = vclz %v5956
      %v5958 = vsub.s32 %v5957, 2
      %vm5959 = vcmp.gt.s32.totalorder 0, %v5958
      %v5960 = vsel %vm5959, 0, %v5958
      %v5961 = vsub.s32 32, %v5960
      %v5962 = vshll.u32 %v5953, %v5960
      %v5963 = vshrl.u32 %v5945, %v5961
      %v5964 = vor.u32 %v5962, %v5963
      %v5965 = vsub.s32 4294967266, %v5960
      %v5966 = vadd.s32 %v5965, 127
      %v5967 = vshll.u32 %v5966, 23
      %v5968 = vor.u32 4788187, %v5967
      %v5969 = vand.u32 2147483647, %v5968
      %v5971 = vcvt.s32.f32 %v5964
      %v5972 = vmul.f32 %v5971, %v5969
      %v5973 = vxor.u32 %v5972, 2147483648
      %v5974 = vsel %vm5891, %v5973, %v5972
      %v5975 = vsub.s32 4, %v5951
      %v5976 = vsel %vm5891, %v5975, %v5951
      %v5977 = vsel %vm5890, %v4427, %v5974
      %v5978 = vsel %vm5890, 0, %v5976
      %v5979 = vcosq.f32.pop %v5977
      %v5980 = vsinq.f32.pop %v5977
      %vm5981 = vweird.f32 %v4427
      %v5982 = vadd.s32 %v5978, 3
      %v5983 = vand.u32 %v5982, 3
      %vm5984 = vcmp.lt.s32.totalorder %v5983, 2
      %vm5985 = vcmp.eq.s32.totalorder %v5983, 0
      %v5986 = vxor.u32 %v5980, 2147483648
      %v5987 = vsel %vm5985, %v5979, %v5986
      %vm5988 = vcmp.eq.s32.totalorder %v5983, 2
      %v5989 = vxor.u32 %v5979, 2147483648
      %v5990 = vsel %vm5988, %v5989, %v5980
      %v5991 = vsel %vm5984, %v5987, %v5990
      %v5992 = vsel %vm5981, nan, %v5991
      %v5993 = vand.u32 2147483647, %v4430
      %vm5994 = vcmp.le.f32.partialorder %v5993, 0.7853982
      %vm5995 = vcmp.lt.s32.totalorder %v4430, 0
      %v5996 = vand.u32 %v4430, 2139095040
      %v5997 = vshrl.u32 %v5996, 23
      %v5998 = vsub.s32 %v5997, 127
      %v5999 = vand.u32 2147483647, %v4430
      %v6000 = vand.u32 %v5999, 8388607
      %v6001 = vor.u32 %v6000, 8388608
      %v6002 = vsub.s32 0, %v6001
      %v6003 = vadd.s32 %v5998, 1
      %vm6004 = vcmp.gt.s32.totalorder %v6003, 0
      %v6005 = vsel %vm6004, %v6003, 0
      %v6006 = vshrl.u32 %v6005, 5
      %v6007 = vand.u32 %v6005, 31
      %v6008 = vsub.s32 32, %v6007
      %v6009 = vshrl.u32 683565275, %v6008
      %v6010 = vshll.u32 683565275, %v6007
      %v6011 = vshrl.u32 2475754826, %v6008
      %v6012 = vor.u32 %v6010, %v6011
      %v6013 = vshll.u32 2475754826, %v6007
      %v6014 = vshrl.u32 2131351028, %v6008
      %v6015 = vor.u32 %v6013, %v6014
      %v6016 = vshll.u32 2131351028, %v6007
      %v6017 = vshrl.u32 2102212464, %v6008
      %v6018 = vor.u32 %v6016, %v6017
      %v6019 = vshll.u32 2102212464, %v6007
      %v6020 = vshrl.u32 920167782, %v6008
      %v6021 = vor.u32 %v6019, %v6020
      %v6022 = vshll.u32 920167782, %v6007
      %v6023 = vshrl.u32 1326507024, %v6008
      %v6024 = vor.u32 %v6022, %v6023
      %vm6025 = vcmp.lt.s32.totalorder %v6006, 1
      %vm6026 = vcmp.lt.s32.totalorder %v6006, 2
      %vm6027 = vcmp.lt.s32.totalorder %v6006, 3
      %vm6028 = vcmp.lt.s32.totalorder %v6006, 4
      %v6029 = vsel %vm6025, %v6009, %v6012
      %v6030 = vsel %vm6028, %v6018, 2102212464
      %v6031 = vsel %vm6027, %v6015, %v6030
      %v6032 = vsel %vm6026, %v6029, %v6031
      %v6033 = vsel %vm6025, %v6012, %v6015
      %v6034 = vsel %vm6028, %v6021, 920167782
      %v6035 = vsel %vm6027, %v6018, %v6034
      %v6036 = vsel %vm6026, %v6033, %v6035
      %v6037 = vsel %vm6025, %v6015, %v6018
      %v6038 = vsel %vm6028, %v6024, 1326507024
      %v6039 = vsel %vm6027, %v6021, %v6038
      %v6040 = vsel %vm6026, %v6037, %v6039
      %v6041 = vshll.u32 %v6001, 8
      %v6042 = vmul.u32.u64.compose %v6041, %v6040
      %v6043 = vextract.low.u32 %v6042
      %v6044 = vextract.high.u32 %v6042
      %v6045 = vmul.u32.u64.compose %v6041, %v6036
      %v6046 = vextract.low.u32 %v6045
      %v6047 = vextract.high.u32 %v6045
      %v6048 = vmul.u32 %v6041, %v6032
      %v6049 = vadd.s32 %v6044, %v6046
      %vm6050 = vc.u32 %v6044, %v6046
      %v6051 = vadd.s32 %v6047, 1
      %v6052 = vsel %vm6050, %v6051, %v6047
      %v6053 = vadd.s32 %v6048, %v6052
      %v6054 = vadd.s32 %v6053, 536870912
      %v6055 = vshrl.u32 %v6054, 30
      %v6056 = vshll.u32 %v6055, 30
      %v6057 = vsub.s32 %v6053, %v6056
      %vm6058 = vcmp.lt.s32.totalorder %v6057, 0
      %v6059 = vsub.s32 0, %v6057
      %v6060 = vsel %vm6058, %v6059, %v6057
      %v6061 = vclz %v6060
      %v6062 = vsub.s32 %v6061, 2
      %vm6063 = vcmp.gt.s32.totalorder 0, %v6062
      %v6064 = vsel %vm6063, 0, %v6062
      %v6065 = vsub.s32 32, %v6064
      %v6066 = vshll.u32 %v6057, %v6064
      %v6067 = vshrl.u32 %v6049, %v6065
      %v6068 = vor.u32 %v6066, %v6067
      %v6069 = vsub.s32 4294967266, %v6064
      %v6070 = vadd.s32 %v6069, 127
      %v6071 = vshll.u32 %v6070, 23
      %v6072 = vor.u32 4788187, %v6071
      %v6073 = vand.u32 2147483647, %v6072
      %v6075 = vcvt.s32.f32 %v6068
      %v6076 = vmul.f32 %v6075, %v6073
      %v6077 = vxor.u32 %v6076, 2147483648
      %v6078 = vsel %vm5995, %v6077, %v6076
      %v6079 = vsub.s32 4, %v6055
      %v6080 = vsel %vm5995, %v6079, %v6055
      %v6081 = vsel %vm5994, %v4430, %v6078
      %v6082 = vsel %vm5994, 0, %v6080
      %v6083 = vcosq.f32.pop %v6081
      %v6084 = vsinq.f32.pop %v6081
      %vm6085 = vweird.f32 %v4430
      %v6086 = vadd.s32 %v6082, 3
      %v6087 = vand.u32 %v6086, 3
      %vm6088 = vcmp.lt.s32.totalorder %v6087, 2
      %vm6089 = vcmp.eq.s32.totalorder %v6087, 0
      %v6090 = vxor.u32 %v6084, 2147483648
      %v6091 = vsel %vm6089, %v6083, %v6090
      %vm6092 = vcmp.eq.s32.totalorder %v6087, 2
      %v6093 = vxor.u32 %v6083, 2147483648
      %v6094 = vsel %vm6092, %v6093, %v6084
      %v6095 = vsel %vm6088, %v6091, %v6094
      %v6096 = vsel %vm6085, nan, %v6095
      %v6097 = vpack.c.bf16 %v4640, %v4536
      %v6098 = vpack.c.bf16 %v4848, %v4744
      %v6099 = vpack.c.bf16 %v5056, %v4952
      %v6100 = vpack.c.bf16 %v5264, %v5160
      %v6101 = vpack.c.bf16 %v5472, %v5368
      %v6102 = vpack.c.bf16 %v5680, %v5576
      %v6103 = vpack.c.bf16 %v5888, %v5784
      %v6104 = vpack.c.bf16 %v6096, %v5992
      %v6105 = vld [vmem:[%s7] sm:$0xf]
      %v6106 = vld [vmem:[%s7 + $0x4] sm:$0xf]
      %v6107 = vld [vmem:[%s7 + $0x8] sm:$0xf]
      %v6108 = vld [vmem:[%s7 + $0xc] sm:$0xf]
      %v6113 = vunpack.c.l.b16 %v6105
      %v6114 = vunpack.c.l.b16 %v6106
      %v6115 = vunpack.c.l.b16 %v6107
      %v6116 = vunpack.c.l.b16 %v6108
      %v6117 = vpack.c.b16 %v6114, %v6113
      %v6118 = vpack.c.b16 %v6116, %v6115
      %v6122 = vsel %vm2493, %v6097, 0
      %v6125 = vsel %vm2493, %v6098, 0
      %v6128 = vsel %vm2493, %v6099, 0
      %v6131 = vsel %vm2493, %v6100, 0
      %v6134 = vsel %vm2493, %v6101, 0
      %v6137 = vsel %vm2493, %v6102, 0
      %v6140 = vsel %vm2493, %v6103, 0
      %v6143 = vsel %vm2493, %v6104, 0
      %6145 = vmatprep.subr.bf16.mxu0 0
      %6146 = vmatpush1.bf16.msra.mxu0 %v6117
      %6147 = vmatprep.subr.bf16.mxu0 0
      %6148 = vmatpush1.bf16.msra.mxu0 %v6118
      %6149 = vmatprep.subr.bf16.mxu0 0
      %6150 = vmatpush1.bf16.msra.mxu0 0
      %6151 = vmatprep.subr.bf16.mxu0 0
      %6152 = vmatpush1.bf16.msra.mxu0 0
      %6153 = vmatprep.subr.bf16.mxu0 0
      %6154 = vmatpush1.bf16.msra.mxu0 0
      %6155 = vmatprep.subr.bf16.mxu0 0
      %6156 = vmatpush1.bf16.msra.mxu0 0
      %6157 = vmatprep.subr.bf16.mxu0 0
      %6158 = vmatpush1.bf16.msra.mxu0 0
      %6159 = vmatprep.subr.bf16.mxu0 0
      %6160 = vmatpush1.bf16.msra.mxu0 0
      %6161 = vmatprep.subr.bf16.mxu0 0
      %6162 = vmatpush1.bf16.msra.mxu0 0
      %6163 = vmatprep.subr.bf16.mxu0 0
      %6164 = vmatpush1.bf16.msra.mxu0 0
      %6165 = vmatprep.subr.bf16.mxu0 0
      %6166 = vmatpush1.bf16.msra.mxu0 0
      %6167 = vmatprep.subr.bf16.mxu0 0
      %6168 = vmatpush1.bf16.msra.mxu0 0
      %6169 = vmatprep.subr.bf16.mxu0 0
      %6170 = vmatpush1.bf16.msra.mxu0 0
      %6171 = vmatprep.subr.bf16.mxu0 0
      %6172 = vmatpush1.bf16.msra.mxu0 0
      %6173 = vmatprep.subr.bf16.mxu0 0
      %6174 = vmatpush1.bf16.msra.mxu0 0
      %6175 = vmatprep.subr.bf16.mxu0 0
      %6176 = vmatpush1.bf16.msra.mxu0 0
      %6177 = vmatprep.mubr.bf16.mxu0 0
      %6178 = vmatmul.mubr.bf16.gmra.mrb[0].mxu0 %v6122
      %v6179 = vpop.f32.mrb[0].mxu0
      %v6180 = vadd.f32 0.0, %v6179
      %v6181 = vpop.f32.mrb[0].mxu0
      %v6182 = vpop.f32.mrb[0].mxu0
      %v6183 = vadd.f32 0.0, %v6182
      %v6184 = vpop.f32.mrb[0].mxu0
      %6185 = vmatprep.mubr.bf16.mxu0 0
      %6186 = vmatmul.mubr.bf16.gmra.mrb[0].mxu0 %v6125
      %v6187 = vpop.f32.mrb[0].mxu0
      %v6188 = vadd.f32 0.0, %v6187
      %v6189 = vpop.f32.mrb[0].mxu0
      %v6190 = vpop.f32.mrb[0].mxu0
      %v6191 = vadd.f32 0.0, %v6190
      %v6192 = vpop.f32.mrb[0].mxu0
      %6193 = vmatprep.mubr.bf16.mxu0 0
      %6194 = vmatmul.mubr.bf16.gmra.mrb[0].mxu0 %v6128
      %v6195 = vpop.f32.mrb[0].mxu0
      %v6196 = vadd.f32 0.0, %v6195
      %v6197 = vpop.f32.mrb[0].mxu0
      %v6198 = vpop.f32.mrb[0].mxu0
      %v6199 = vadd.f32 0.0, %v6198
      %v6200 = vpop.f32.mrb[0].mxu0
      %6201 = vmatprep.mubr.bf16.mxu0 0
      %6202 = vmatmul.mubr.bf16.gmra.mrb[0].mxu0 %v6131
      %v6203 = vpop.f32.mrb[0].mxu0
      %v6204 = vadd.f32 0.0, %v6203
      %v6205 = vpop.f32.mrb[0].mxu0
      %v6206 = vpop.f32.mrb[0].mxu0
      %v6207 = vadd.f32 0.0, %v6206
      %v6208 = vpop.f32.mrb[0].mxu0
      %6209 = vmatprep.mubr.bf16.mxu0 0
      %6210 = vmatmul.mubr.bf16.gmra.mrb[0].mxu0 %v6134
      %v6211 = vpop.f32.mrb[0].mxu0
      %v6212 = vadd.f32 0.0, %v6211
      %v6213 = vpop.f32.mrb[0].mxu0
      %v6214 = vpop.f32.mrb[0].mxu0
      %v6215 = vadd.f32 0.0, %v6214
      %v6216 = vpop.f32.mrb[0].mxu0
      %6217 = vmatprep.mubr.bf16.mxu0 0
      %6218 = vmatmul.mubr.bf16.gmra.mrb[0].mxu0 %v6137
      %v6219 = vpop.f32.mrb[0].mxu0
      %v6220 = vadd.f32 0.0, %v6219
      %v6221 = vpop.f32.mrb[0].mxu0
      %v6222 = vpop.f32.mrb[0].mxu0
      %v6223 = vadd.f32 0.0, %v6222
      %v6224 = vpop.f32.mrb[0].mxu0
      %6225 = vmatprep.mubr.bf16.mxu0 0
      %6226 = vmatmul.mubr.bf16.gmra.mrb[0].mxu0 %v6140
      %v6227 = vpop.f32.mrb[0].mxu0
      %v6228 = vadd.f32 0.0, %v6227
      %v6229 = vpop.f32.mrb[0].mxu0
      %v6230 = vpop.f32.mrb[0].mxu0
      %v6231 = vadd.f32 0.0, %v6230
      %v6232 = vpop.f32.mrb[0].mxu0
      %6233 = vmatprep.mubr.bf16.mxu0 0
      %6234 = vmatmul.mubr.bf16.gmra.mrb[0].mxu0 %v6143
      %v6235 = vpop.f32.mrb[0].mxu0
      %v6236 = vadd.f32 0.0, %v6235
      %v6237 = vpop.f32.mrb[0].mxu0
      %v6238 = vpop.f32.mrb[0].mxu0
      %v6239 = vadd.f32 0.0, %v6238
      %v6240 = vpop.f32.mrb[0].mxu0
      %6241 = vdwg.mxu0
      %vm6242 = vcmask 7168
      %6243 = vst.msk [vmem:[%s370] sm:$0xff] %vm6242, %v6180
      %6244 = vst.msk [vmem:[%s370 + $0x8] sm:$0xff] %vm6242, %v6183
      %6245 = vst.msk [vmem:[%s370 + $0x10] sm:$0xff] %vm6242, %v6188
      %6246 = vst.msk [vmem:[%s370 + $0x18] sm:$0xff] %vm6242, %v6191
      %6247 = vst.msk [vmem:[%s370 + $0x20] sm:$0xff] %vm6242, %v6196
      %6248 = vst.msk [vmem:[%s370 + $0x28] sm:$0xff] %vm6242, %v6199
      %6249 = vst.msk [vmem:[%s370 + $0x30] sm:$0xff] %vm6242, %v6204
      %6250 = vst.msk [vmem:[%s370 + $0x38] sm:$0xff] %vm6242, %v6207
      %6251 = vst.msk [vmem:[%s370 + $0x40] sm:$0xff] %vm6242, %v6212
      %6252 = vst.msk [vmem:[%s370 + $0x48] sm:$0xff] %vm6242, %v6215
      %6253 = vst.msk [vmem:[%s370 + $0x50] sm:$0xff] %vm6242, %v6220
      %6254 = vst.msk [vmem:[%s370 + $0x58] sm:$0xff] %vm6242, %v6223
      %6255 = vst.msk [vmem:[%s370 + $0x60] sm:$0xff] %vm6242, %v6228
      %6256 = vst.msk [vmem:[%s370 + $0x68] sm:$0xff] %vm6242, %v6231
      %6257 = vst.msk [vmem:[%s370 + $0x70] sm:$0xff] %vm6242, %v6236
      %6258 = vst.msk [vmem:[%s370 + $0x78] sm:$0xff] %vm6242, %v6239
      %s6259 = smul.u32 16, %s21
      %p6260 = scmp.lt.s32.totalorder %s6259, 31
      %s6261 = scalar_select %p6260, %s6259, 31
      %s6262 = smul.addr %s6261, 8
      %s6263 = scalar_lea.vmem %s8, %s6262
      %s6264 = smul.u32 16, %s21
      %p6265 = scmp.lt.s32.totalorder %s6264, 31
      %s6266 = scalar_select %p6265, %s6264, 31
      %s6267 = smul.addr %s6266, 8
      %s6268 = scalar_lea.vmem %s9, %s6267
      // Predicated region
      $region53: #{tpu_custom_call.1} parent=51 // pred_check
        %p6269 = pneg %p217
      $region54: #{tpu_custom_call.1} parent=51 // pred_check_branch
        %6271 = sbr.rel (%p6269) target = $region56
      $region55: #{tpu_custom_call.1} parent=51 // pred_region
        %s6272 = smul.u32 16, %s21
      $region56: #{tpu_custom_call.1} parent=51 // pred_fallthru
        _
      // Predicated region
      $region57: #{tpu_custom_call.1} parent=51 // pred_check
        %p6273 = pneg %p243
      $region58: #{tpu_custom_call.1} parent=51 // pred_check_branch
        %6275 = sbr.rel (%p6273) target = $region60
      $region59: #{tpu_custom_call.1} parent=51 // pred_region
        %s6276 = smul.u32 16, %s21
      $region60: #{tpu_custom_call.1} parent=51 // pred_fallthru
        _
    $region52: #{tpu_custom_call.1} parent=5 // pred_fallthru
      _
    %p6277 = scmp.le.s32.totalorder 2, %s16
    // Predicated region
    $region61: #{tpu_custom_call.1} parent=5 // pred_check
      %p6278 = pneg %p6277
    $region62: #{tpu_custom_call.1} parent=5 // pred_check_branch
      %6280 = sbr.rel (%p6278) target = $region64
    $region63: #{tpu_custom_call.1} parent=5 // pred_region
      %s6281 = ssub.s32 %s16, 2
      // Predicated region
      $region65: #{tpu_custom_call.1} parent=63 // pred_check
        %p6282 = pneg %p223
      $region66: #{tpu_custom_call.1} parent=63 // pred_check_branch
        %6284 = sbr.rel (%p6282) target = $region68
      $region67: #{tpu_custom_call.1} parent=63 // pred_region
        %s6285 = smul.u32 16, %s22
        %p6286 = scmp.lt.s32.totalorder %s6285, 31
        %s6287 = scalar_select %p6286, %s6285, 31
        %s6288 = smul.addr %s6287, 8
        %s6289 = scalar_lea.vmem %s8, %s6288
      $region68: #{tpu_custom_call.1} parent=63 // pred_fallthru
        _
      // Predicated region
      $region69: #{tpu_custom_call.1} parent=63 // pred_check
        %p6290 = pneg %p249
      $region70: #{tpu_custom_call.1} parent=63 // pred_check_branch
        %6292 = sbr.rel (%p6290) target = $region72
      $region71: #{tpu_custom_call.1} parent=63 // pred_region
        %s6293 = smul.u32 16, %s22
        %p6294 = scmp.lt.s32.totalorder %s6293, 31
        %s6295 = scalar_select %p6294, %s6293, 31
        %s6296 = smul.addr %s6295, 8
        %s6297 = scalar_lea.vmem %s9, %s6296
      $region72: #{tpu_custom_call.1} parent=63 // pred_fallthru
        _
    $region64: #{tpu_custom_call.1} parent=5 // pred_fallthru
      _
  $region6: #{tpu_custom_call.1} parent=0 // loop_footer
    %s20 = sadd.s32 1, %s16
  $region7: #{tpu_custom_call.1} parent=0 // loop_footer_branch
    %15 = sbr.rel target = $region3
  $region8: #{tpu_custom_call.1} parent=0 // loop_exit
    _

</llo_original>
